<compile_context>
chip_gen: v5e
topology: v5e:2x2
jax: 0.10.0
libtpu: 0.0.40
codegen_flags: <defaults>
</compile_context>

<pallas_src>
import jax
import jax.numpy as jnp
from jax import lax
from jax.experimental import pallas as pl
from jax.experimental.pallas import tpu as pltpu

# Module hyper-parameters (UpsampleLoss.__init__ defaults). No learned weights.
ALPHA = 1.0
NN_SIZE = 5
RADIUS = 0.07
H = 0.03
EPS = 1e-12
MAX_AUCTION_ITERS = 500


# --------------------------------------------------------------------------
# Fused per-batch kernel:
#   cost matrix (MXU) -> repulsion 4-NN partial sum
#                     -> in-VMEM fixed-eps Jacobi auction -> EMD squared sum
# --------------------------------------------------------------------------
def _fused_loss_kernel(lhs_ref, gt_rhs_ref, pr_rhs_ref, emd_ref, rep_ref):
    lhs = lhs_ref[0]          # (N, 5)  rows: [p_x, p_y, p_z, |p|^2, 1]
    gt_rhs = gt_rhs_ref[0]    # (5, N)  cols: [-2*g, 1, |g|^2]
    pr_rhs = pr_rhs_ref[0]    # (5, N)  cols: [-2*p, 1, |p|^2]
    n = lhs.shape[0]

    dn = (((1,), (0,)), ((), ()))
    # cost[i, j] = |p_i|^2 + |g_j|^2 - 2 p_i.g_j   (pred -> gt), clamped at 0
    cost = jnp.maximum(
        lax.dot_general(lhs, gt_rhs, dn, preferred_element_type=jnp.float32), 0.0)
    # d2[i, j]   = |p_i - p_j|^2                   (pred self-distances)
    d2 = jnp.maximum(
        lax.dot_general(lhs, pr_rhs, dn, preferred_element_type=jnp.float32), 0.0)

    row = lax.broadcasted_iota(jnp.int32, (n, n), 0)
    col = lax.broadcasted_iota(jnp.int32, (n, n), 1)

    # ---------------- repulsion: 4 nearest non-self neighbors ----------------
    d2m = jnp.where(row == col, jnp.inf, d2)        # drop self (idx[:, :, 1:])
    rep_total = jnp.zeros((1, 1), jnp.float32)
    for _ in range(NN_SIZE - 1):
        m = jnp.min(d2m, axis=-1, keepdims=True)    # (N, 1) current nearest
        md = jnp.maximum(m, EPS)                    # torch.max(dist2, eps)
        dist = jnp.sqrt(md)
        w = jnp.exp(-md / (H * H))
        rep_total = rep_total + jnp.sum((RADIUS - dist) * w, keepdims=True)
        # Remove the selected minima (all exact ties at once; only differs from
        # torch.topk ordering for exactly duplicated points).
        d2m = jnp.where(d2m == m, jnp.inf, d2m)
    rep_ref[...] = rep_total.reshape(1, 1, 1)

    # ---------------- fixed-eps Jacobi auction, entirely in VMEM -------------
    benefit = -cost
    cmax = jnp.max(jnp.max(cost, axis=-1, keepdims=True), axis=0, keepdims=True)
    cmin = jnp.min(jnp.min(cost, axis=-1, keepdims=True), axis=0, keepdims=True)
    bid_eps = jnp.maximum(cmax - cmin, 1e-6) / (4.0 * n)        # (1, 1)

    def auction_body(_, carry):
        prices, o2p, p2o = carry                                 # (1,N)f32 (1,N)i32 (N,1)i32
        values = benefit - prices                                # (N, N)
        best_v = jnp.max(values, axis=-1, keepdims=True)         # (N, 1)
        best_j = jnp.min(jnp.where(values >= best_v, col, n),
                         axis=-1, keepdims=True)                 # (N, 1) argmax (min idx)
        second_v = jnp.max(jnp.where(col == best_j, -jnp.inf, values),
                           axis=-1, keepdims=True)               # (N, 1)
        unassigned = p2o < 0                                     # (N, 1)
        bid_incr = best_v - second_v + bid_eps                   # (N, 1)
        # bids[i, j] = price increment person i offers object j (only unassigned bid).
        bids = jnp.where((col == best_j) & unassigned, bid_incr, -jnp.inf)   # (N, N)
        win_incr = jnp.max(bids, axis=0, keepdims=True)          # (1, N) per object
        has_bid = win_incr > -jnp.inf
        win_person = jnp.min(jnp.where(bids >= win_incr, row, n),
                             axis=0, keepdims=True)              # (1, N)
        new_o2p = jnp.where(has_bid, win_person, o2p)
        new_prices = jnp.where(has_bid, prices + win_incr, prices)
        match = new_o2p == row                                   # (N, N) person owns object?
        new_p2o = jnp.max(jnp.where(match, col, -1), axis=-1, keepdims=True)
        return new_prices, new_o2p, new_p2o

    init = (jnp.zeros((1, n), jnp.float32),
            jnp.full((1, n), -1, jnp.int32),
            jnp.full((n, 1), -1, jnp.int32))
    _, _, p2o = lax.fori_loop(0, MAX_AUCTION_ITERS, auction_body, init)

    # ---------------- EMD squared-error sum from the resident cost matrix ----
    # ||p_i - g_{match(i)}||^2 == cost[i, p2o_i] (up to the max(.,0) clamp rounding);
    # unassigned points fall back to their nearest gt point (as before).
    matched_cost = jnp.sum(jnp.where(col == p2o, cost, 0.0), axis=-1, keepdims=True)
    fallback = jnp.min(cost, axis=-1, keepdims=True)
    per_point = jnp.where(p2o >= 0, matched_cost, fallback)      # (N, 1)
    emd_ref[...] = jnp.sum(per_point, keepdims=True).reshape(1, 1, 1)


def _pallas_partial_sums(lhs, gt_rhs, pr_rhs):
    B, N, _ = lhs.shape
    return pl.pallas_call(
        _fused_loss_kernel,
        out_shape=(jax.ShapeDtypeStruct((B, 1, 1), jnp.float32),   # EMD sq-sum per batch
                   jax.ShapeDtypeStruct((B, 1, 1), jnp.float32)),  # repulsion sum per batch
        grid=(B,),
        in_specs=[pl.BlockSpec((1, N, 5), lambda b: (b, 0, 0)),
                  pl.BlockSpec((1, 5, N), lambda b: (b, 0, 0)),
                  pl.BlockSpec((1, 5, N), lambda b: (b, 0, 0))],
        out_specs=[pl.BlockSpec((1, 1, 1), lambda b: (b, 0, 0)),
                   pl.BlockSpec((1, 1, 1), lambda b: (b, 0, 0))],
        compiler_params=pltpu.CompilerParams(dimension_semantics=("parallel",)),
    )(lhs, gt_rhs, pr_rhs)


# --------------------------------------------------------------------------
# Forward pass (returns (emd_loss * 250, repulsion_loss), like the module)
# --------------------------------------------------------------------------
@jax.jit
def upsample_loss_forward(pred_fullpoint, gt_fullpoint, radius_data):
    B, N, _ = pred_fullpoint.shape
    pred = pred_fullpoint.astype(jnp.float32)
    gt = gt_fullpoint.astype(jnp.float32)

    # Layout plumbing (channels-first / augmented operands) done once in the wrapper
    # so both (N, N) distance matrices are a single standard MXU matmul in-kernel.
    ones = jnp.ones((B, N, 1), jnp.float32)
    pxx = jnp.sum(pred * pred, axis=-1, keepdims=True)           # (B, N, 1)
    gxx = jnp.sum(gt * gt, axis=-1, keepdims=True)               # (B, N, 1)
    lhs = jnp.concatenate([pred, pxx, ones], axis=-1)                               # (B, N, 5)
    gt_rhs = jnp.transpose(jnp.concatenate([-2.0 * gt, ones, gxx], axis=-1), (0, 2, 1))    # (B, 5, N)
    pr_rhs = jnp.transpose(jnp.concatenate([-2.0 * pred, ones, pxx], axis=-1), (0, 2, 1))  # (B, 5, N)

    emd_sq, rep_sum = _pallas_partial_sums(lhs, gt_rhs, pr_rhs)

    # --- EMD branch: mean over (N*3) squared diffs, / radius, mean, *250 ---
    sq = emd_sq[:, 0, 0]                                         # (B,)
    dist2 = (sq / (N * 3.0))[:, None] / radius_data              # (B, 1)
    emd_loss = jnp.mean(dist2) * 250.0

    # --- repulsion branch: mean over B*N*(nn_size-1) ---
    rep_loss = jnp.sum(rep_sum[:, 0, 0]) / (B * N * (NN_SIZE - 1))

    return emd_loss, rep_loss


if __name__ == "__main__":
    key = jax.random.PRNGKey(0)
    B, N = 2, 128
    k1, k2, k3 = jax.random.split(key, 3)
    pred = jax.random.normal(k1, (B, N, 3), jnp.float32)
    gt = jax.random.normal(k2, (B, N, 3), jnp.float32)
    radius_data = jax.random.uniform(k3, (B, 1), jnp.float32, minval=0.5, maxval=1.5)

    emd_loss, rep_loss = upsample_loss_forward(pred, gt, radius_data)
    jax.block_until_ready((emd_loss, rep_loss))
    print("KERNEL_OK")
</pallas_src>

<mosaic_0001>
module attributes {stable_mosaic.version = 11 : i64} {
  func.func @_fused_loss_kernel(%arg0: i32, %arg1: memref<1x128x5xf32, #tpu.memory_space<vmem>>, %arg2: memref<1x5x128xf32, #tpu.memory_space<vmem>>, %arg3: memref<1x5x128xf32, #tpu.memory_space<vmem>>, %arg4: memref<1x1x1xf32, #tpu.memory_space<vmem>>, %arg5: memref<1x1x1xf32, #tpu.memory_space<vmem>>) attributes {dimension_semantics = [#tpu.dimension_semantics<parallel>], iteration_bounds = array<i64: 2>, scalar_prefetch = 0 : i64, scratch_operands = 0 : i64, tpu.core_type = #tpu.core_type<tc>, window_params = [{transform_indices = @transform_0, window_bounds = array<i64: 1, 128, 5>}, {transform_indices = @transform_1, window_bounds = array<i64: 1, 5, 128>}, {transform_indices = @transform_2, window_bounds = array<i64: 1, 5, 128>}, {transform_indices = @transform_3, window_bounds = array<i64: 1, 1, 1>}, {transform_indices = @transform_4, window_bounds = array<i64: 1, 1, 1>}]} {
    %c0 = arith.constant 0 : index
    %c0_0 = arith.constant 0 : index
    %c0_1 = arith.constant 0 : index
    %0 = vector.load %arg1[%c0, %c0_0, %c0_1] : memref<1x128x5xf32, #tpu.memory_space<vmem>>, vector<1x128x5xf32>
    %1 = vector.shape_cast %0 : vector<1x128x5xf32> to vector<128x5xf32>
    %c0_2 = arith.constant 0 : index
    %c0_3 = arith.constant 0 : index
    %c0_4 = arith.constant 0 : index
    %2 = vector.load %arg2[%c0_2, %c0_3, %c0_4] : memref<1x5x128xf32, #tpu.memory_space<vmem>>, vector<1x5x128xf32>
    %3 = vector.shape_cast %2 : vector<1x5x128xf32> to vector<5x128xf32>
    %c0_5 = arith.constant 0 : index
    %c0_6 = arith.constant 0 : index
    %c0_7 = arith.constant 0 : index
    %4 = vector.load %arg3[%c0_5, %c0_6, %c0_7] : memref<1x5x128xf32, #tpu.memory_space<vmem>>, vector<1x5x128xf32>
    %5 = vector.shape_cast %4 : vector<1x5x128xf32> to vector<5x128xf32>
    %cst = arith.constant dense<0.000000e+00> : vector<128x128xf32>
    %6 = tpu.matmul %1, %3, %cst {dimension_numbers = #tpu.dot_dimension_numbers<[1], [0], [0], [1], [0, 0, 1, 1], [], []>} : vector<128x5xf32>, vector<5x128xf32>, vector<128x128xf32> -> vector<128x128xf32>
    %cst_8 = arith.constant 0.000000e+00 : f32
    %7 = vector.broadcast %cst_8 : f32 to vector<128x128xf32>
    %8 = arith.maximumf %6, %7 : vector<128x128xf32>
    %cst_9 = arith.constant dense<0.000000e+00> : vector<128x128xf32>
    %9 = tpu.matmul %1, %5, %cst_9 {dimension_numbers = #tpu.dot_dimension_numbers<[1], [0], [0], [1], [0, 0, 1, 1], [], []>} : vector<128x5xf32>, vector<5x128xf32>, vector<128x128xf32> -> vector<128x128xf32>
    %cst_10 = arith.constant 0.000000e+00 : f32
    %10 = vector.broadcast %cst_10 : f32 to vector<128x128xf32>
    %11 = arith.maximumf %9, %10 : vector<128x128xf32>
    %12 = tpu.iota {dimensions = array<i32: 0>} : vector<128x128xi32>
    %13 = tpu.iota {dimensions = array<i32: 1>} : vector<128x128xi32>
    %14 = arith.cmpi eq, %12, %13 : vector<128x128xi32>
    %cst_11 = arith.constant 0x7F800000 : f32
    %15 = vector.broadcast %cst_11 : f32 to vector<128x128xf32>
    %16 = arith.select %14, %15, %11 : vector<128x128xi1>, vector<128x128xf32>
    %cst_12 = arith.constant 0.000000e+00 : f32
    %17 = vector.broadcast %cst_12 : f32 to vector<1x1xf32>
    %cst_13 = arith.constant dense<0x7F800000> : vector<128xf32>
    %18 = vector.multi_reduction <minimumf>, %16, %cst_13 [1] : vector<128x128xf32> to vector<128xf32>
    %19 = vector.shape_cast %18 : vector<128xf32> to vector<128x1xf32>
    %cst_14 = arith.constant 9.99999996E-13 : f32
    %20 = vector.broadcast %cst_14 : f32 to vector<128x1xf32>
    %21 = arith.maximumf %19, %20 : vector<128x1xf32>
    %22 = math.sqrt %21 : vector<128x1xf32>
    %cst_15 = arith.constant 0.000000e+00 : f32
    %23 = vector.broadcast %cst_15 : f32 to vector<128x1xf32>
    %24 = arith.subf %23, %21 : vector<128x1xf32>
    %cst_16 = arith.constant 8.99999984E-4 : f32
    %25 = vector.broadcast %cst_16 : f32 to vector<128x1xf32>
    %26 = arith.divf %24, %25 : vector<128x1xf32>
    %27 = math.exp %26 : vector<128x1xf32>
    %cst_17 = arith.constant 7.000000e-02 : f32
    %28 = vector.broadcast %cst_17 : f32 to vector<128x1xf32>
    %29 = arith.subf %28, %22 : vector<128x1xf32>
    %30 = arith.mulf %29, %27 : vector<128x1xf32>
    %31 = vector.shape_cast %30 : vector<128x1xf32> to vector<1x128x1xf32>
    %cst_18 = arith.constant dense<0.000000e+00> : vector<1xf32>
    %32 = vector.multi_reduction <add>, %31, %cst_18 [1, 2] : vector<1x128x1xf32> to vector<1xf32>
    %33 = vector.shape_cast %32 : vector<1xf32> to vector<1x1x1xf32>
    %34 = vector.extract %33[0, 0, 0] : f32 from vector<1x1x1xf32>
    %35 = vector.broadcast %34 : f32 to vector<1x1xf32>
    %36 = arith.addf %17, %35 : vector<1x1xf32>
    %37 = vector.broadcast %19 : vector<128x1xf32> to vector<128x128xf32>
    %38 = arith.cmpf oeq, %16, %37 : vector<128x128xf32>
    %cst_19 = arith.constant 0x7F800000 : f32
    %39 = vector.broadcast %cst_19 : f32 to vector<128x128xf32>
    %40 = arith.select %38, %39, %16 : vector<128x128xi1>, vector<128x128xf32>
    %cst_20 = arith.constant dense<0x7F800000> : vector<128xf32>
    %41 = vector.multi_reduction <minimumf>, %40, %cst_20 [1] : vector<128x128xf32> to vector<128xf32>
    %42 = vector.shape_cast %41 : vector<128xf32> to vector<128x1xf32>
    %cst_21 = arith.constant 9.99999996E-13 : f32
    %43 = vector.broadcast %cst_21 : f32 to vector<128x1xf32>
    %44 = arith.maximumf %42, %43 : vector<128x1xf32>
    %45 = math.sqrt %44 : vector<128x1xf32>
    %cst_22 = arith.constant 0.000000e+00 : f32
    %46 = vector.broadcast %cst_22 : f32 to vector<128x1xf32>
    %47 = arith.subf %46, %44 : vector<128x1xf32>
    %cst_23 = arith.constant 8.99999984E-4 : f32
    %48 = vector.broadcast %cst_23 : f32 to vector<128x1xf32>
    %49 = arith.divf %47, %48 : vector<128x1xf32>
    %50 = math.exp %49 : vector<128x1xf32>
    %cst_24 = arith.constant 7.000000e-02 : f32
    %51 = vector.broadcast %cst_24 : f32 to vector<128x1xf32>
    %52 = arith.subf %51, %45 : vector<128x1xf32>
    %53 = arith.mulf %52, %50 : vector<128x1xf32>
    %54 = vector.shape_cast %53 : vector<128x1xf32> to vector<1x128x1xf32>
    %cst_25 = arith.constant dense<0.000000e+00> : vector<1xf32>
    %55 = vector.multi_reduction <add>, %54, %cst_25 [1, 2] : vector<1x128x1xf32> to vector<1xf32>
    %56 = vector.shape_cast %55 : vector<1xf32> to vector<1x1x1xf32>
    %57 = vector.extract %56[0, 0, 0] : f32 from vector<1x1x1xf32>
    %58 = vector.broadcast %57 : f32 to vector<1x1xf32>
    %59 = arith.addf %36, %58 : vector<1x1xf32>
    %60 = vector.broadcast %42 : vector<128x1xf32> to vector<128x128xf32>
    %61 = arith.cmpf oeq, %40, %60 : vector<128x128xf32>
    %cst_26 = arith.constant 0x7F800000 : f32
    %62 = vector.broadcast %cst_26 : f32 to vector<128x128xf32>
    %63 = arith.select %61, %62, %40 : vector<128x128xi1>, vector<128x128xf32>
    %cst_27 = arith.constant dense<0x7F800000> : vector<128xf32>
    %64 = vector.multi_reduction <minimumf>, %63, %cst_27 [1] : vector<128x128xf32> to vector<128xf32>
    %65 = vector.shape_cast %64 : vector<128xf32> to vector<128x1xf32>
    %cst_28 = arith.constant 9.99999996E-13 : f32
    %66 = vector.broadcast %cst_28 : f32 to vector<128x1xf32>
    %67 = arith.maximumf %65, %66 : vector<128x1xf32>
    %68 = math.sqrt %67 : vector<128x1xf32>
    %cst_29 = arith.constant 0.000000e+00 : f32
    %69 = vector.broadcast %cst_29 : f32 to vector<128x1xf32>
    %70 = arith.subf %69, %67 : vector<128x1xf32>
    %cst_30 = arith.constant 8.99999984E-4 : f32
    %71 = vector.broadcast %cst_30 : f32 to vector<128x1xf32>
    %72 = arith.divf %70, %71 : vector<128x1xf32>
    %73 = math.exp %72 : vector<128x1xf32>
    %cst_31 = arith.constant 7.000000e-02 : f32
    %74 = vector.broadcast %cst_31 : f32 to vector<128x1xf32>
    %75 = arith.subf %74, %68 : vector<128x1xf32>
    %76 = arith.mulf %75, %73 : vector<128x1xf32>
    %77 = vector.shape_cast %76 : vector<128x1xf32> to vector<1x128x1xf32>
    %cst_32 = arith.constant dense<0.000000e+00> : vector<1xf32>
    %78 = vector.multi_reduction <add>, %77, %cst_32 [1, 2] : vector<1x128x1xf32> to vector<1xf32>
    %79 = vector.shape_cast %78 : vector<1xf32> to vector<1x1x1xf32>
    %80 = vector.extract %79[0, 0, 0] : f32 from vector<1x1x1xf32>
    %81 = vector.broadcast %80 : f32 to vector<1x1xf32>
    %82 = arith.addf %59, %81 : vector<1x1xf32>
    %83 = vector.broadcast %65 : vector<128x1xf32> to vector<128x128xf32>
    %84 = arith.cmpf oeq, %63, %83 : vector<128x128xf32>
    %cst_33 = arith.constant 0x7F800000 : f32
    %85 = vector.broadcast %cst_33 : f32 to vector<128x128xf32>
    %86 = arith.select %84, %85, %63 : vector<128x128xi1>, vector<128x128xf32>
    %cst_34 = arith.constant dense<0x7F800000> : vector<128xf32>
    %87 = vector.multi_reduction <minimumf>, %86, %cst_34 [1] : vector<128x128xf32> to vector<128xf32>
    %88 = vector.shape_cast %87 : vector<128xf32> to vector<128x1xf32>
    %cst_35 = arith.constant 9.99999996E-13 : f32
    %89 = vector.broadcast %cst_35 : f32 to vector<128x1xf32>
    %90 = arith.maximumf %88, %89 : vector<128x1xf32>
    %91 = math.sqrt %90 : vector<128x1xf32>
    %cst_36 = arith.constant 0.000000e+00 : f32
    %92 = vector.broadcast %cst_36 : f32 to vector<128x1xf32>
    %93 = arith.subf %92, %90 : vector<128x1xf32>
    %cst_37 = arith.constant 8.99999984E-4 : f32
    %94 = vector.broadcast %cst_37 : f32 to vector<128x1xf32>
    %95 = arith.divf %93, %94 : vector<128x1xf32>
    %96 = math.exp %95 : vector<128x1xf32>
    %cst_38 = arith.constant 7.000000e-02 : f32
    %97 = vector.broadcast %cst_38 : f32 to vector<128x1xf32>
    %98 = arith.subf %97, %91 : vector<128x1xf32>
    %99 = arith.mulf %98, %96 : vector<128x1xf32>
    %100 = vector.shape_cast %99 : vector<128x1xf32> to vector<1x128x1xf32>
    %cst_39 = arith.constant dense<0.000000e+00> : vector<1xf32>
    %101 = vector.multi_reduction <add>, %100, %cst_39 [1, 2] : vector<1x128x1xf32> to vector<1xf32>
    %102 = vector.shape_cast %101 : vector<1xf32> to vector<1x1x1xf32>
    %103 = vector.extract %102[0, 0, 0] : f32 from vector<1x1x1xf32>
    %104 = vector.broadcast %103 : f32 to vector<1x1xf32>
    %105 = arith.addf %82, %104 : vector<1x1xf32>
    %106 = vector.shape_cast %105 : vector<1x1xf32> to vector<1x1x1xf32>
    %c0_40 = arith.constant 0 : index
    %c0_41 = arith.constant 0 : index
    %c0_42 = arith.constant 0 : index
    %107 = vector.load %arg5[%c0_40, %c0_41, %c0_42] : memref<1x1x1xf32, #tpu.memory_space<vmem>>, vector<1x1x1xf32>
    tpu.vector_store %arg5[%c0_40, %c0_41, %c0_42], %106 {strides = array<i32>} : memref<1x1x1xf32, #tpu.memory_space<vmem>>, vector<1x1x1xf32>,
    %cst_43 = arith.constant 0.000000e+00 : f32
    %108 = vector.broadcast %cst_43 : f32 to vector<128x128xf32>
    %109 = arith.subf %108, %8 : vector<128x128xf32>
    %cst_44 = arith.constant dense<0xFF800000> : vector<128xf32>
    %110 = vector.multi_reduction <maximumf>, %8, %cst_44 [1] : vector<128x128xf32> to vector<128xf32>
    %111 = vector.shape_cast %110 : vector<128xf32> to vector<128x1xf32>
    %cst_45 = arith.constant dense<0xFF800000> : vector<1xf32>
    %112 = vector.multi_reduction <maximumf>, %111, %cst_45 [0] : vector<128x1xf32> to vector<1xf32>
    %113 = vector.shape_cast %112 : vector<1xf32> to vector<1x1xf32>
    %cst_46 = arith.constant dense<0x7F800000> : vector<128xf32>
    %114 = vector.multi_reduction <minimumf>, %8, %cst_46 [1] : vector<128x128xf32> to vector<128xf32>
    %115 = vector.shape_cast %114 : vector<128xf32> to vector<128x1xf32>
    %cst_47 = arith.constant dense<0x7F800000> : vector<1xf32>
    %116 = vector.multi_reduction <minimumf>, %115, %cst_47 [0] : vector<128x1xf32> to vector<1xf32>
    %117 = vector.shape_cast %116 : vector<1xf32> to vector<1x1xf32>
    %118 = arith.subf %113, %117 : vector<1x1xf32>
    %cst_48 = arith.constant 9.99999997E-7 : f32
    %119 = vector.broadcast %cst_48 : f32 to vector<1x1xf32>
    %120 = arith.maximumf %118, %119 : vector<1x1xf32>
    %cst_49 = arith.constant 5.120000e+02 : f32
    %121 = vector.broadcast %cst_49 : f32 to vector<1x1xf32>
    %122 = arith.divf %120, %121 : vector<1x1xf32>
    %cst_50 = arith.constant 0.000000e+00 : f32
    %123 = vector.broadcast %cst_50 : f32 to vector<1x128xf32>
    %c-1_i32 = arith.constant -1 : i32
    %124 = vector.broadcast %c-1_i32 : i32 to vector<1x128xi32>
    %c-1_i32_51 = arith.constant -1 : i32
    %125 = vector.broadcast %c-1_i32_51 : i32 to vector<128x1xi32>
    %c0_i32 = arith.constant 0 : i32
    %c500_i32 = arith.constant 500 : i32
    %126 = arith.addi %c0_i32, %c500_i32 : i32
    %c1_i32 = arith.constant 1 : i32
    %127:3 = scf.for %arg6 = %c0_i32 to %126 step %c1_i32 iter_args(%arg7 = %123, %arg8 = %124, %arg9 = %125) -> (vector<1x128xf32>, vector<1x128xi32>, vector<128x1xi32>)  : i32 {
      %146 = vector.broadcast %arg7 : vector<1x128xf32> to vector<128x128xf32>
      %147 = arith.subf %109, %146 : vector<128x128xf32>
      %cst_60 = arith.constant dense<0xFF800000> : vector<128xf32>
      %148 = vector.multi_reduction <maximumf>, %147, %cst_60 [1] : vector<128x128xf32> to vector<128xf32>
      %149 = vector.shape_cast %148 : vector<128xf32> to vector<128x1xf32>
      %150 = vector.broadcast %149 : vector<128x1xf32> to vector<128x128xf32>
      %151 = arith.cmpf oge, %147, %150 : vector<128x128xf32>
      %c128_i32 = arith.constant 128 : i32
      %152 = vector.broadcast %c128_i32 : i32 to vector<128x128xi32>
      %153 = arith.select %151, %13, %152 : vector<128x128xi1>, vector<128x128xi32>
      %cst_61 = arith.constant dense<2147483647> : vector<128xi32>
      %154 = vector.multi_reduction <minsi>, %153, %cst_61 [1] : vector<128x128xi32> to vector<128xi32>
      %155 = vector.shape_cast %154 : vector<128xi32> to vector<128x1xi32>
      %156 = vector.broadcast %155 : vector<128x1xi32> to vector<128x128xi32>
      %157 = arith.cmpi eq, %13, %156 : vector<128x128xi32>
      %cst_62 = arith.constant 0xFF800000 : f32
      %158 = vector.broadcast %cst_62 : f32 to vector<128x128xf32>
      %159 = arith.select %157, %158, %147 : vector<128x128xi1>, vector<128x128xf32>
      %cst_63 = arith.constant dense<0xFF800000> : vector<128xf32>
      %160 = vector.multi_reduction <maximumf>, %159, %cst_63 [1] : vector<128x128xf32> to vector<128xf32>
      %161 = vector.shape_cast %160 : vector<128xf32> to vector<128x1xf32>
      %c0_i32_64 = arith.constant 0 : i32
      %162 = vector.broadcast %c0_i32_64 : i32 to vector<128x1xi32>
      %163 = arith.cmpi slt, %arg9, %162 : vector<128x1xi32>
      %164 = arith.subf %149, %161 : vector<128x1xf32>
      %165 = vector.broadcast %122 : vector<1x1xf32> to vector<128x1xf32>
      %166 = arith.addf %164, %165 : vector<128x1xf32>
      %167 = vector.broadcast %155 : vector<128x1xi32> to vector<128x128xi32>
      %168 = arith.cmpi eq, %13, %167 : vector<128x128xi32>
      %169 = vector.broadcast %163 : vector<128x1xi1> to vector<128x128xi1>
      %170 = arith.andi %168, %169 : vector<128x128xi1>
      %cst_65 = arith.constant 0xFF800000 : f32
      %171 = vector.shape_cast %166 : vector<128x1xf32> to vector<128x1xf32>
      %172 = vector.broadcast %171 : vector<128x1xf32> to vector<128x128xf32>
      %173 = vector.broadcast %cst_65 : f32 to vector<128x128xf32>
      %174 = arith.select %170, %172, %173 : vector<128x128xi1>, vector<128x128xf32>
      %cst_66 = arith.constant dense<0xFF800000> : vector<128xf32>
      %175 = vector.multi_reduction <maximumf>, %174, %cst_66 [0] : vector<128x128xf32> to vector<128xf32>
      %176 = vector.shape_cast %175 : vector<128xf32> to vector<1x128xf32>
      %cst_67 = arith.constant 0xFF800000 : f32
      %177 = vector.broadcast %cst_67 : f32 to vector<1x128xf32>
      %178 = arith.cmpf ogt, %176, %177 : vector<1x128xf32>
      %179 = vector.broadcast %176 : vector<1x128xf32> to vector<128x128xf32>
      %180 = arith.cmpf oge, %174, %179 : vector<128x128xf32>
      %c128_i32_68 = arith.constant 128 : i32
      %181 = vector.broadcast %c128_i32_68 : i32 to vector<128x128xi32>
      %182 = arith.select %180, %12, %181 : vector<128x128xi1>, vector<128x128xi32>
      %cst_69 = arith.constant dense<2147483647> : vector<128xi32>
      %183 = vector.multi_reduction <minsi>, %182, %cst_69 [0] : vector<128x128xi32> to vector<128xi32>
      %184 = vector.shape_cast %183 : vector<128xi32> to vector<1x128xi32>
      %185 = arith.select %178, %184, %arg8 : vector<1x128xi1>, vector<1x128xi32>
      %186 = arith.addf %arg7, %176 : vector<1x128xf32>
      %187 = arith.select %178, %186, %arg7 : vector<1x128xi1>, vector<1x128xf32>
      %188 = vector.broadcast %185 : vector<1x128xi32> to vector<128x128xi32>
      %189 = arith.cmpi eq, %188, %12 : vector<128x128xi32>
      %c-1_i32_70 = arith.constant -1 : i32
      %190 = vector.broadcast %c-1_i32_70 : i32 to vector<128x128xi32>
      %191 = arith.select %189, %13, %190 : vector<128x128xi1>, vector<128x128xi32>
      %cst_71 = arith.constant dense<-2147483648> : vector<128xi32>
      %192 = vector.multi_reduction <maxsi>, %191, %cst_71 [1] : vector<128x128xi32> to vector<128xi32>
      %193 = vector.shape_cast %192 : vector<128xi32> to vector<128x1xi32>
      scf.yield %187, %185, %193 : vector<1x128xf32>, vector<1x128xi32>, vector<128x1xi32>
    }
    %128 = vector.broadcast %127#2 : vector<128x1xi32> to vector<128x128xi32>
    %129 = arith.cmpi eq, %13, %128 : vector<128x128xi32>
    %cst_52 = arith.constant 0.000000e+00 : f32
    %130 = vector.broadcast %cst_52 : f32 to vector<128x128xf32>
    %131 = arith.select %129, %8, %130 : vector<128x128xi1>, vector<128x128xf32>
    %cst_53 = arith.constant dense<0.000000e+00> : vector<128xf32>
    %132 = vector.multi_reduction <add>, %131, %cst_53 [1] : vector<128x128xf32> to vector<128xf32>
    %133 = vector.shape_cast %132 : vector<128xf32> to vector<128x1xf32>
    %cst_54 = arith.constant dense<0x7F800000> : vector<128xf32>
    %134 = vector.multi_reduction <minimumf>, %8, %cst_54 [1] : vector<128x128xf32> to vector<128xf32>
    %135 = vector.shape_cast %134 : vector<128xf32> to vector<128x1xf32>
    %c0_i32_55 = arith.constant 0 : i32
    %136 = vector.broadcast %c0_i32_55 : i32 to vector<128x1xi32>
    %137 = arith.cmpi sge, %127#2, %136 : vector<128x1xi32>
    %138 = arith.select %137, %133, %135 : vector<128x1xi1>, vector<128x1xf32>
    %139 = vector.shape_cast %138 : vector<128x1xf32> to vector<1x128x1xf32>
    %cst_56 = arith.constant dense<0.000000e+00> : vector<1xf32>
    %140 = vector.multi_reduction <add>, %139, %cst_56 [1, 2] : vector<1x128x1xf32> to vector<1xf32>
    %141 = vector.shape_cast %140 : vector<1xf32> to vector<1x1x1xf32>
    %142 = vector.extract %141[0, 0, 0] : f32 from vector<1x1x1xf32>
    %143 = vector.broadcast %142 : f32 to vector<1x1xf32>
    %144 = vector.shape_cast %143 : vector<1x1xf32> to vector<1x1x1xf32>
    %c0_57 = arith.constant 0 : index
    %c0_58 = arith.constant 0 : index
    %c0_59 = arith.constant 0 : index
    %145 = vector.load %arg4[%c0_57, %c0_58, %c0_59] : memref<1x1x1xf32, #tpu.memory_space<vmem>>, vector<1x1x1xf32>
    tpu.vector_store %arg4[%c0_57, %c0_58, %c0_59], %144 {strides = array<i32>} : memref<1x1x1xf32, #tpu.memory_space<vmem>>, vector<1x1x1xf32>,
    return
  }
  func.func @transform_0(%arg0: i32) -> (i32, i32, i32) {
    %c0_i32 = arith.constant 0 : i32
    %c0_i32_0 = arith.constant 0 : i32
    %c0_i32_1 = arith.constant 0 : i32
    return %arg0, %c0_i32, %c0_i32_0 : i32, i32, i32
  }
  func.func @transform_1(%arg0: i32) -> (i32, i32, i32) {
    %c0_i32 = arith.constant 0 : i32
    %c0_i32_0 = arith.constant 0 : i32
    %c0_i32_1 = arith.constant 0 : i32
    return %arg0, %c0_i32, %c0_i32_0 : i32, i32, i32
  }
  func.func @transform_2(%arg0: i32) -> (i32, i32, i32) {
    %c0_i32 = arith.constant 0 : i32
    %c0_i32_0 = arith.constant 0 : i32
    %c0_i32_1 = arith.constant 0 : i32
    return %arg0, %c0_i32, %c0_i32_0 : i32, i32, i32
  }
  func.func @transform_3(%arg0: i32) -> (i32, i32, i32) {
    %c0_i32 = arith.constant 0 : i32
    %c0_i32_0 = arith.constant 0 : i32
    %c0_i32_1 = arith.constant 0 : i32
    return %arg0, %c0_i32, %c0_i32_0 : i32, i32, i32
  }
  func.func @transform_4(%arg0: i32) -> (i32, i32, i32) {
    %c0_i32 = arith.constant 0 : i32
    %c0_i32_0 = arith.constant 0 : i32
    %c0_i32_1 = arith.constant 0 : i32
    return %arg0, %c0_i32, %c0_i32_0 : i32, i32, i32
  }
}

</mosaic_0001>

<llo_original>
// kernel: upsample_loss_forward.1
$region0: #{upsample_loss_forward.1}
  #allocation0 [shape = 'u32[]', space=smem, size = 0x4, offset = 0x4, fixed_abs, tag = 'smem constant byte address 0x4 - core index']
  #allocation1 [shape = 'u32[72,128]{1,0:T(1,128)}', space=vmem, size = 0x9000, scoped, tag = 'internal scratch']
  %s0 = inlined_call_operand.vmem [shape: f32[2,128,5], index: 0, kind: input, shape index: {}]
  %s1 = inlined_call_operand.vmem [shape: f32[2,5,128], index: 1, kind: input, shape index: {}]
  %s2 = inlined_call_operand.vmem [shape: f32[2,5,128], index: 2, kind: input, shape index: {}]
  %s3 = inlined_call_operand.vmem [shape: f32[2,1,1], index: 3, kind: output, shape index: {0}]
  %s4 = inlined_call_operand.vmem [shape: f32[2,1,1], index: 4, kind: output, shape index: {1}]
  %5 = xla_tuple %s3, %s4
  %s6 = sld [smem:[#allocation0]]
  $region60: #{upsample_loss_forward.1} parent=0
    _
  %s8 = ssub.s32 1, %s6
  %s9 = scalar_select 0, %s8, %s6
  loop: start=0, step=1, limit=4
  $region2: #{upsample_loss_forward.1} parent=0 // loop_pre_header
    _
  $region3: #{upsample_loss_forward.1} parent=0 // loop_header
    %s11 = sphi 0, %s15
    %p12 = scmp.ge.s32.totalorder %s11, 4
    %s21 = sphi 0, %s23
    %s24 = sphi 0, %s21
    %s25 = sphi 0, %s24
    %s41 = sphi 0, %s25
    %s47 = sphi 0, %s49
    %s50 = sphi 0, %s47
    %s51 = sphi 0, %s50
    %s67 = sphi 0, %s51
    %s73 = sphi 0, %s75
    %s76 = sphi 0, %s73
    %s77 = sphi 0, %s76
    %s93 = sphi 0, %s77
    %s99 = sphi 0, %s101
    %s102 = sphi 0, %s99
    %s103 = sphi 0, %s102
    %s119 = sphi 0, %s103
    %s125 = sphi 0, %s127
    %s128 = sphi 0, %s125
    %s129 = sphi 0, %s128
    %s145 = sphi 0, %s129
  $region4: #{upsample_loss_forward.1} parent=0 // loop_header_branch
    %14 = sbr.rel (%p12) target = $region8
  $region5: #{upsample_loss_forward.1} parent=0 // loop_body
    %s16 = ssub.s32 %s11, 1
    %s17 = ssub.s32 %s11, 2
    %s18 = sadd.s32 %s11, 1
    %s19 = ssub.s32 %s11, %s18
    %p20 = scmp.eq.s32.totalorder %s19, 0
    %s22 = sadd.s32 %s21, 1
    %s23 = scalar_select %p20, %s21, %s22
    %p26 = pneg %p20
    %p27 = scmp.eq.s32.totalorder %s11, 1
    %p28 = por %p26, %p27
    %p29 = scmp.ne.s32.totalorder %s21, %s24
    %p30 = scmp.eq.s32.totalorder %s11, 0
    %p31 = por %p29, %p30
    %p32 = scmp.ne.s32.totalorder %s21, %s24
    %p33 = scmp.eq.s32.totalorder %s16, 1
    %p34 = por %p32, %p33
    %p35 = scmp.ne.s32.totalorder %s24, %s25
    %p36 = scmp.eq.s32.totalorder %s16, 0
    %p37 = por %p35, %p36
    %p38 = scmp.ne.s32.totalorder %s24, %s25
    %p39 = scmp.eq.s32.totalorder %s17, 1
    %p40 = por %p38, %p39
    %p42 = scmp.ne.s32.totalorder %s25, %s41
    %p43 = scmp.eq.s32.totalorder %s17, 0
    %p44 = por %p42, %p43
    %s45 = ssub.s32 %s11, %s18
    %p46 = scmp.eq.s32.totalorder %s45, 0
    %s48 = sadd.s32 %s47, 1
    %s49 = scalar_select %p46, %s47, %s48
    %p52 = pneg %p46
    %p53 = scmp.eq.s32.totalorder %s11, 1
    %p54 = por %p52, %p53
    %p55 = scmp.ne.s32.totalorder %s47, %s50
    %p56 = scmp.eq.s32.totalorder %s11, 0
    %p57 = por %p55, %p56
    %p58 = scmp.ne.s32.totalorder %s47, %s50
    %p59 = scmp.eq.s32.totalorder %s16, 1
    %p60 = por %p58, %p59
    %p61 = scmp.ne.s32.totalorder %s50, %s51
    %p62 = scmp.eq.s32.totalorder %s16, 0
    %p63 = por %p61, %p62
    %p64 = scmp.ne.s32.totalorder %s50, %s51
    %p65 = scmp.eq.s32.totalorder %s17, 1
    %p66 = por %p64, %p65
    %p68 = scmp.ne.s32.totalorder %s51, %s67
    %p69 = scmp.eq.s32.totalorder %s17, 0
    %p70 = por %p68, %p69
    %s71 = ssub.s32 %s11, %s18
    %p72 = scmp.eq.s32.totalorder %s71, 0
    %s74 = sadd.s32 %s73, 1
    %s75 = scalar_select %p72, %s73, %s74
    %p78 = pneg %p72
    %p79 = scmp.eq.s32.totalorder %s11, 1
    %p80 = por %p78, %p79
    %p81 = scmp.ne.s32.totalorder %s73, %s76
    %p82 = scmp.eq.s32.totalorder %s11, 0
    %p83 = por %p81, %p82
    %p84 = scmp.ne.s32.totalorder %s73, %s76
    %p85 = scmp.eq.s32.totalorder %s16, 1
    %p86 = por %p84, %p85
    %p87 = scmp.ne.s32.totalorder %s76, %s77
    %p88 = scmp.eq.s32.totalorder %s16, 0
    %p89 = por %p87, %p88
    %p90 = scmp.ne.s32.totalorder %s76, %s77
    %p91 = scmp.eq.s32.totalorder %s17, 1
    %p92 = por %p90, %p91
    %p94 = scmp.ne.s32.totalorder %s77, %s93
    %p95 = scmp.eq.s32.totalorder %s17, 0
    %p96 = por %p94, %p95
    %s97 = ssub.s32 %s11, %s18
    %p98 = scmp.eq.s32.totalorder %s97, 0
    %s100 = sadd.s32 %s99, 1
    %s101 = scalar_select %p98, %s99, %s100
    %p104 = pneg %p98
    %p105 = scmp.eq.s32.totalorder %s11, 1
    %p106 = por %p104, %p105
    %p107 = scmp.ne.s32.totalorder %s99, %s102
    %p108 = scmp.eq.s32.totalorder %s11, 0
    %p109 = por %p107, %p108
    %p110 = scmp.ne.s32.totalorder %s99, %s102
    %p111 = scmp.eq.s32.totalorder %s16, 1
    %p112 = por %p110, %p111
    %p113 = scmp.ne.s32.totalorder %s102, %s103
    %p114 = scmp.eq.s32.totalorder %s16, 0
    %p115 = por %p113, %p114
    %p116 = scmp.ne.s32.totalorder %s102, %s103
    %p117 = scmp.eq.s32.totalorder %s17, 1
    %p118 = por %p116, %p117
    %p120 = scmp.ne.s32.totalorder %s103, %s119
    %p121 = scmp.eq.s32.totalorder %s17, 0
    %p122 = por %p120, %p121
    %s123 = ssub.s32 %s11, %s18
    %p124 = scmp.eq.s32.totalorder %s123, 0
    %s126 = sadd.s32 %s125, 1
    %s127 = scalar_select %p124, %s125, %s126
    %p130 = pneg %p124
    %p131 = scmp.eq.s32.totalorder %s11, 1
    %p132 = por %p130, %p131
    %p133 = scmp.ne.s32.totalorder %s125, %s128
    %p134 = scmp.eq.s32.totalorder %s11, 0
    %p135 = por %p133, %p134
    %p136 = scmp.ne.s32.totalorder %s125, %s128
    %p137 = scmp.eq.s32.totalorder %s16, 1
    %p138 = por %p136, %p137
    %p139 = scmp.ne.s32.totalorder %s128, %s129
    %p140 = scmp.eq.s32.totalorder %s16, 0
    %p141 = por %p139, %p140
    %p142 = scmp.ne.s32.totalorder %s128, %s129
    %p143 = scmp.eq.s32.totalorder %s17, 1
    %p144 = por %p142, %p143
    %p146 = scmp.ne.s32.totalorder %s129, %s145
    %p147 = scmp.eq.s32.totalorder %s17, 0
    %p148 = por %p146, %p147
    %p149 = scmp.le.s32.totalorder 1, %s11
    %p150 = scmp.lt.s32.totalorder %s11, 3
    %p151 = pnand %p149, %p150
    %p152 = pneg %p151
    // Predicated region
    $region9: #{upsample_loss_forward.1} parent=5 // pred_check
      _
    $region10: #{upsample_loss_forward.1} parent=5 // pred_check_branch
      %154 = sbr.rel (%p151) target = $region12
    $region11: #{upsample_loss_forward.1} parent=5 // pred_region
      %s155 = ssub.s32 %s11, 1
    $region12: #{upsample_loss_forward.1} parent=5 // pred_fallthru
      _
    %p156 = scmp.lt.s32.totalorder %s11, 2
    // Predicated region
    $region13: #{upsample_loss_forward.1} parent=5 // pred_check
      %p157 = pneg %p156
    $region14: #{upsample_loss_forward.1} parent=5 // pred_check_branch
      %159 = sbr.rel (%p157) target = $region16
    $region15: #{upsample_loss_forward.1} parent=5 // pred_region
      // Predicated region
      $region17: #{upsample_loss_forward.1} parent=15 // pred_check
        %p160 = pneg %p31
      $region18: #{upsample_loss_forward.1} parent=15 // pred_check_branch
        %162 = sbr.rel (%p160) target = $region20
      $region19: #{upsample_loss_forward.1} parent=15 // pred_region
        %p163 = scmp.lt.s32.totalorder %s11, 1
        %s164 = scalar_select %p163, %s11, 1
        %s165 = smul.addr %s164, 16
        %s166 = smul.addr %s165, 8
        %s167 = scalar_lea.vmem %s0, %s166
      $region20: #{upsample_loss_forward.1} parent=15 // pred_fallthru
        _
      // Predicated region
      $region21: #{upsample_loss_forward.1} parent=15 // pred_check
        %p168 = pneg %p57
      $region22: #{upsample_loss_forward.1} parent=15 // pred_check_branch
        %170 = sbr.rel (%p168) target = $region24
      $region23: #{upsample_loss_forward.1} parent=15 // pred_region
        %p171 = scmp.lt.s32.totalorder %s11, 1
        %s172 = scalar_select %p171, %s11, 1
        %s173 = smul.addr %s172, 8
        %s174 = scalar_lea.vmem %s1, %s173
      $region24: #{upsample_loss_forward.1} parent=15 // pred_fallthru
        _
      // Predicated region
      $region25: #{upsample_loss_forward.1} parent=15 // pred_check
        %p175 = pneg %p83
      $region26: #{upsample_loss_forward.1} parent=15 // pred_check_branch
        %177 = sbr.rel (%p175) target = $region28
      $region27: #{upsample_loss_forward.1} parent=15 // pred_region
        %p178 = scmp.lt.s32.totalorder %s11, 1
        %s179 = scalar_select %p178, %s11, 1
        %s180 = smul.addr %s179, 8
        %s181 = scalar_lea.vmem %s2, %s180
      $region28: #{upsample_loss_forward.1} parent=15 // pred_fallthru
        _
    $region16: #{upsample_loss_forward.1} parent=5 // pred_fallthru
      _
    %p182 = scmp.le.s32.totalorder 1, %s11
    %p183 = scmp.lt.s32.totalorder %s11, 3
    %p184 = pnand %p182, %p183
    %p185 = pneg %p184
    // Predicated region
    $region29: #{upsample_loss_forward.1} parent=5 // pred_check
      _
    $region30: #{upsample_loss_forward.1} parent=5 // pred_check_branch
      %187 = sbr.rel (%p184) target = $region32
    $region31: #{upsample_loss_forward.1} parent=5 // pred_region
      %s188 = ssub.s32 %s11, 1
      %p189 = scmp.lt.s32.totalorder %s16, 1
      %s190 = scalar_select %p189, %s16, 1
      %s191 = smul.addr %s190, 16
      %s192 = smul.addr %s191, 8
      %s193 = scalar_lea.vmem %s0, %s192
      %p194 = pneg %p37
      %p195 = pneg %p34
      %p196 = scmp.lt.s32.totalorder %s16, 1
      %s197 = scalar_select %p196, %s16, 1
      %s198 = smul.addr %s197, 8
      %s199 = scalar_lea.vmem %s1, %s198
      %p200 = pneg %p63
      %p201 = pneg %p60
      %p202 = scmp.lt.s32.totalorder %s16, 1
      %s203 = scalar_select %p202, %s16, 1
      %s204 = smul.addr %s203, 8
      %s205 = scalar_lea.vmem %s2, %s204
      %p206 = pneg %p89
      %p207 = pneg %p86
      %p208 = pneg %p115
      %p209 = pneg %p112
      %p210 = scmp.lt.s32.totalorder %s16, 1
      %s211 = scalar_select %p210, %s16, 1
      %s212 = scalar_lea.vmem %s3, %s211
      %p213 = pneg %p141
      %p214 = pneg %p138
      %p215 = scmp.lt.s32.totalorder %s16, 1
      %s216 = scalar_select %p215, %s16, 1
      %s217 = scalar_lea.vmem %s4, %s216
      %p218 = scmp.lt.s32.totalorder %s16, 1
      %s219 = scalar_select %p218, %s16, 1
      %s220 = smul.addr %s219, 16
      %s221 = smul.addr %s220, 8
      %s222 = scalar_lea.vmem %s0, %s221
      %p223 = scmp.lt.s32.totalorder %s16, 1
      %s224 = scalar_select %p223, %s16, 1
      %s225 = smul.addr %s224, 8
      %s226 = scalar_lea.vmem %s1, %s225
      %p227 = scmp.lt.s32.totalorder %s16, 1
      %s228 = scalar_select %p227, %s16, 1
      %s229 = smul.addr %s228, 8
      %s230 = scalar_lea.vmem %s2, %s229
      %p231 = scmp.lt.s32.totalorder %s16, 1
      %s232 = scalar_select %p231, %s16, 1
      %s233 = scalar_lea.vmem %s3, %s232
      %p234 = scmp.lt.s32.totalorder %s16, 1
      %s235 = scalar_select %p234, %s16, 1
      %s236 = scalar_lea.vmem %s4, %s235
      %v237 = vld [vmem:[%s222] sm:$0xff]
      %v238 = vld [vmem:[%s222 + $0x8] sm:$0xff]
      %v239 = vld [vmem:[%s222 + $0x10] sm:$0xff]
      %v240 = vld [vmem:[%s222 + $0x18] sm:$0xff]
      %v241 = vld [vmem:[%s222 + $0x20] sm:$0xff]
      %v242 = vld [vmem:[%s222 + $0x28] sm:$0xff]
      %v243 = vld [vmem:[%s222 + $0x30] sm:$0xff]
      %v244 = vld [vmem:[%s222 + $0x38] sm:$0xff]
      %v245 = vld [vmem:[%s222 + $0x40] sm:$0xff]
      %v246 = vld [vmem:[%s222 + $0x48] sm:$0xff]
      %v247 = vld [vmem:[%s222 + $0x50] sm:$0xff]
      %v248 = vld [vmem:[%s222 + $0x58] sm:$0xff]
      %v249 = vld [vmem:[%s222 + $0x60] sm:$0xff]
      %v250 = vld [vmem:[%s222 + $0x68] sm:$0xff]
      %v251 = vld [vmem:[%s222 + $0x70] sm:$0xff]
      %v252 = vld [vmem:[%s222 + $0x78] sm:$0xff]
      %v253 = vld [vmem:[%s226] sm:$0x1f]
      %v254 = vld [vmem:[%s230] sm:$0x1f]
      %vm255 = vcmask 39936
      %v257 = vsel %vm255, %v237, 0
      %v260 = vsel %vm255, %v238, 0
      %v263 = vsel %vm255, %v239, 0
      %v266 = vsel %vm255, %v240, 0
      %v269 = vsel %vm255, %v241, 0
      %v272 = vsel %vm255, %v242, 0
      %v275 = vsel %vm255, %v243, 0
      %v278 = vsel %vm255, %v244, 0
      %v281 = vsel %vm255, %v245, 0
      %v284 = vsel %vm255, %v246, 0
      %v287 = vsel %vm255, %v247, 0
      %v290 = vsel %vm255, %v248, 0
      %v293 = vsel %vm255, %v249, 0
      %v296 = vsel %vm255, %v250, 0
      %v299 = vsel %vm255, %v251, 0
      %v302 = vsel %vm255, %v252, 0
      %vm304 = vcmask 1044480
      %v306 = vsel %vm304, %v253, 0
      %308 = vmatpush.msra.mxu0 0.0
      %309 = vmatpush.msra.mxu0 0.0
      %310 = vmatpush.msra.mxu0 0.0
      %311 = vmatpush.msra.mxu0 0.0
      %312 = vmatpush.msra.mxu0 0.0
      %313 = vmatpush.msra.mxu0 0.0
      %314 = vmatpush.msra.mxu0 0.0
      %315 = vmatpush.msra.mxu0 0.0
      %316 = vmatpush.msra.mxu0 0.0
      %317 = vmatpush.msra.mxu0 0.0
      %318 = vmatpush.msra.mxu0 0.0
      %319 = vmatpush.msra.mxu0 0.0
      %320 = vmatpush.msra.mxu0 0.0
      %321 = vmatpush.msra.mxu0 0.0
      %322 = vmatpush.msra.mxu0 0.0
      %323 = vmatpush.msra.mxu0 %v306
      %324 = vmatmul.f32.gmra.mxu0 %v257
      %v325 = vpop.f32.mrf.mxu0
      %v326 = vadd.f32 0.0, %v325
      %327 = vmatmul.f32.gmra.mxu0 %v260
      %v328 = vpop.f32.mrf.mxu0
      %v329 = vadd.f32 0.0, %v328
      %330 = vmatmul.f32.gmra.mxu0 %v263
      %v331 = vpop.f32.mrf.mxu0
      %v332 = vadd.f32 0.0, %v331
      %333 = vmatmul.f32.gmra.mxu0 %v266
      %v334 = vpop.f32.mrf.mxu0
      %v335 = vadd.f32 0.0, %v334
      %336 = vmatmul.f32.gmra.mxu0 %v269
      %v337 = vpop.f32.mrf.mxu0
      %v338 = vadd.f32 0.0, %v337
      %339 = vmatmul.f32.gmra.mxu0 %v272
      %v340 = vpop.f32.mrf.mxu0
      %v341 = vadd.f32 0.0, %v340
      %342 = vmatmul.f32.gmra.mxu0 %v275
      %v343 = vpop.f32.mrf.mxu0
      %v344 = vadd.f32 0.0, %v343
      %345 = vmatmul.f32.gmra.mxu0 %v278
      %v346 = vpop.f32.mrf.mxu0
      %v347 = vadd.f32 0.0, %v346
      %348 = vmatmul.f32.gmra.mxu0 %v281
      %v349 = vpop.f32.mrf.mxu0
      %v350 = vadd.f32 0.0, %v349
      %351 = vmatmul.f32.gmra.mxu0 %v284
      %v352 = vpop.f32.mrf.mxu0
      %v353 = vadd.f32 0.0, %v352
      %354 = vmatmul.f32.gmra.mxu0 %v287
      %v355 = vpop.f32.mrf.mxu0
      %v356 = vadd.f32 0.0, %v355
      %357 = vmatmul.f32.gmra.mxu0 %v290
      %v358 = vpop.f32.mrf.mxu0
      %v359 = vadd.f32 0.0, %v358
      %360 = vmatmul.f32.gmra.mxu0 %v293
      %v361 = vpop.f32.mrf.mxu0
      %v362 = vadd.f32 0.0, %v361
      %363 = vmatmul.f32.gmra.mxu0 %v296
      %v364 = vpop.f32.mrf.mxu0
      %v365 = vadd.f32 0.0, %v364
      %366 = vmatmul.f32.gmra.mxu0 %v299
      %v367 = vpop.f32.mrf.mxu0
      %v368 = vadd.f32 0.0, %v367
      %369 = vmatmul.f32.gmra.mxu0 %v302
      %v370 = vpop.f32.mrf.mxu0
      %v371 = vadd.f32 0.0, %v370
      %372 = vdwg.mxu0
      %v373 = vmax.f32 %v326, 0.0
      %v374 = vmax.f32 %v329, 0.0
      %v375 = vmax.f32 %v332, 0.0
      %v376 = vmax.f32 %v335, 0.0
      %v377 = vmax.f32 %v338, 0.0
      %v378 = vmax.f32 %v341, 0.0
      %v379 = vmax.f32 %v344, 0.0
      %v380 = vmax.f32 %v347, 0.0
      %v381 = vmax.f32 %v350, 0.0
      %v382 = vmax.f32 %v353, 0.0
      %v383 = vmax.f32 %v356, 0.0
      %v384 = vmax.f32 %v359, 0.0
      %v385 = vmax.f32 %v362, 0.0
      %v386 = vmax.f32 %v365, 0.0
      %v387 = vmax.f32 %v368, 0.0
      %v388 = vmax.f32 %v371, 0.0
      %v390 = vsel %vm304, %v254, 0
      %392 = vmatpush.msra.mxu0 0.0
      %393 = vmatpush.msra.mxu0 0.0
      %394 = vmatpush.msra.mxu0 0.0
      %395 = vmatpush.msra.mxu0 0.0
      %396 = vmatpush.msra.mxu0 0.0
      %397 = vmatpush.msra.mxu0 0.0
      %398 = vmatpush.msra.mxu0 0.0
      %399 = vmatpush.msra.mxu0 0.0
      %400 = vmatpush.msra.mxu0 0.0
      %401 = vmatpush.msra.mxu0 0.0
      %402 = vmatpush.msra.mxu0 0.0
      %403 = vmatpush.msra.mxu0 0.0
      %404 = vmatpush.msra.mxu0 0.0
      %405 = vmatpush.msra.mxu0 0.0
      %406 = vmatpush.msra.mxu0 0.0
      %407 = vmatpush.msra.mxu0 %v390
      %408 = vmatmul.f32.gmra.mxu0 %v257
      %v409 = vpop.f32.mrf.mxu0
      %v410 = vadd.f32 0.0, %v409
      %411 = vmatmul.f32.gmra.mxu0 %v260
      %v412 = vpop.f32.mrf.mxu0
      %v413 = vadd.f32 0.0, %v412
      %414 = vmatmul.f32.gmra.mxu0 %v263
      %v415 = vpop.f32.mrf.mxu0
      %v416 = vadd.f32 0.0, %v415
      %417 = vmatmul.f32.gmra.mxu0 %v266
      %v418 = vpop.f32.mrf.mxu0
      %v419 = vadd.f32 0.0, %v418
      %420 = vmatmul.f32.gmra.mxu0 %v269
      %v421 = vpop.f32.mrf.mxu0
      %v422 = vadd.f32 0.0, %v421
      %423 = vmatmul.f32.gmra.mxu0 %v272
      %v424 = vpop.f32.mrf.mxu0
      %v425 = vadd.f32 0.0, %v424
      %426 = vmatmul.f32.gmra.mxu0 %v275
      %v427 = vpop.f32.mrf.mxu0
      %v428 = vadd.f32 0.0, %v427
      %429 = vmatmul.f32.gmra.mxu0 %v278
      %v430 = vpop.f32.mrf.mxu0
      %v431 = vadd.f32 0.0, %v430
      %432 = vmatmul.f32.gmra.mxu0 %v281
      %v433 = vpop.f32.mrf.mxu0
      %v434 = vadd.f32 0.0, %v433
      %435 = vmatmul.f32.gmra.mxu0 %v284
      %v436 = vpop.f32.mrf.mxu0
      %v437 = vadd.f32 0.0, %v436
      %438 = vmatmul.f32.gmra.mxu0 %v287
      %v439 = vpop.f32.mrf.mxu0
      %v440 = vadd.f32 0.0, %v439
      %441 = vmatmul.f32.gmra.mxu0 %v290
      %v442 = vpop.f32.mrf.mxu0
      %v443 = vadd.f32 0.0, %v442
      %444 = vmatmul.f32.gmra.mxu0 %v293
      %v445 = vpop.f32.mrf.mxu0
      %v446 = vadd.f32 0.0, %v445
      %447 = vmatmul.f32.gmra.mxu0 %v296
      %v448 = vpop.f32.mrf.mxu0
      %v449 = vadd.f32 0.0, %v448
      %450 = vmatmul.f32.gmra.mxu0 %v299
      %v451 = vpop.f32.mrf.mxu0
      %v452 = vadd.f32 0.0, %v451
      %453 = vmatmul.f32.gmra.mxu0 %v302
      %v454 = vpop.f32.mrf.mxu0
      %v455 = vadd.f32 0.0, %v454
      %456 = vdwg.mxu0
      %v457 = vmax.f32 %v410, 0.0
      %v458 = vmax.f32 %v413, 0.0
      %v459 = vmax.f32 %v416, 0.0
      %v460 = vmax.f32 %v419, 0.0
      %v461 = vmax.f32 %v422, 0.0
      %v462 = vmax.f32 %v425, 0.0
      %v463 = vmax.f32 %v428, 0.0
      %v464 = vmax.f32 %v431, 0.0
      %v465 = vmax.f32 %v434, 0.0
      %v466 = vmax.f32 %v437, 0.0
      %v467 = vmax.f32 %v440, 0.0
      %v468 = vmax.f32 %v443, 0.0
      %v469 = vmax.f32 %v446, 0.0
      %v470 = vmax.f32 %v449, 0.0
      %v471 = vmax.f32 %v452, 0.0
      %v472 = vmax.f32 %v455, 0.0
      %v473 = vlaneseq
      %v474 = vshrl.u32 %v473, 7
      %v475 = vadd.s32 %v474, 8
      %v476 = vadd.s32 %v474, 16
      %v477 = vadd.s32 %v474, 24
      %v478 = vadd.s32 %v474, 32
      %v479 = vadd.s32 %v474, 40
      %v480 = vadd.s32 %v474, 48
      %v481 = vadd.s32 %v474, 56
      %v482 = vadd.s32 %v474, 64
      %v483 = vadd.s32 %v474, 72
      %v484 = vadd.s32 %v474, 80
      %v485 = vadd.s32 %v474, 88
      %v486 = vadd.s32 %v474, 96
      %v487 = vadd.s32 %v474, 104
      %v488 = vadd.s32 %v474, 112
      %v489 = vadd.s32 %v474, 120
      %v490 = vlaneseq
      %v491 = vand.u32 %v490, 127
      %vm492 = vcmp.eq.s32.totalorder %v474, %v491
      %vm493 = vcmp.eq.s32.totalorder %v475, %v491
      %vm494 = vcmp.eq.s32.totalorder %v476, %v491
      %vm495 = vcmp.eq.s32.totalorder %v477, %v491
      %vm496 = vcmp.eq.s32.totalorder %v478, %v491
      %vm497 = vcmp.eq.s32.totalorder %v479, %v491
      %vm498 = vcmp.eq.s32.totalorder %v480, %v491
      %vm499 = vcmp.eq.s32.totalorder %v481, %v491
      %vm500 = vcmp.eq.s32.totalorder %v482, %v491
      %vm501 = vcmp.eq.s32.totalorder %v483, %v491
      %vm502 = vcmp.eq.s32.totalorder %v484, %v491
      %vm503 = vcmp.eq.s32.totalorder %v485, %v491
      %vm504 = vcmp.eq.s32.totalorder %v486, %v491
      %vm505 = vcmp.eq.s32.totalorder %v487, %v491
      %vm506 = vcmp.eq.s32.totalorder %v488, %v491
      %vm507 = vcmp.eq.s32.totalorder %v489, %v491
      %v508 = vsel %vm492, inf, %v457
      %v509 = vsel %vm493, inf, %v458
      %v510 = vsel %vm494, inf, %v459
      %v511 = vsel %vm495, inf, %v460
      %v512 = vsel %vm496, inf, %v461
      %v513 = vsel %vm497, inf, %v462
      %v514 = vsel %vm498, inf, %v463
      %v515 = vsel %vm499, inf, %v464
      %v516 = vsel %vm500, inf, %v465
      %v517 = vsel %vm501, inf, %v466
      %v518 = vsel %vm502, inf, %v467
      %v519 = vsel %vm503, inf, %v468
      %v520 = vsel %vm504, inf, %v469
      %v521 = vsel %vm505, inf, %v470
      %v522 = vsel %vm506, inf, %v471
      %v523 = vsel %vm507, inf, %v472
      %524 = vmin.xlane.f32.xlu0 %v508
      %v525 = vpop.xlane.xlu0 %524
      %526 = vmin.xlane.f32.xlu0 %v509
      %v527 = vpop.xlane.xlu0 %526
      %528 = vmin.xlane.f32.xlu0 %v510
      %v529 = vpop.xlane.xlu0 %528
      %530 = vmin.xlane.f32.xlu0 %v511
      %v531 = vpop.xlane.xlu0 %530
      %532 = vmin.xlane.f32.xlu0 %v512
      %v533 = vpop.xlane.xlu0 %532
      %534 = vmin.xlane.f32.xlu0 %v513
      %v535 = vpop.xlane.xlu0 %534
      %536 = vmin.xlane.f32.xlu0 %v514
      %v537 = vpop.xlane.xlu0 %536
      %538 = vmin.xlane.f32.xlu0 %v515
      %v539 = vpop.xlane.xlu0 %538
      %540 = vmin.xlane.f32.xlu0 %v516
      %v541 = vpop.xlane.xlu0 %540
      %542 = vmin.xlane.f32.xlu0 %v517
      %v543 = vpop.xlane.xlu0 %542
      %544 = vmin.xlane.f32.xlu0 %v518
      %v545 = vpop.xlane.xlu0 %544
      %546 = vmin.xlane.f32.xlu0 %v519
      %v547 = vpop.xlane.xlu0 %546
      %548 = vmin.xlane.f32.xlu0 %v520
      %v549 = vpop.xlane.xlu0 %548
      %550 = vmin.xlane.f32.xlu0 %v521
      %v551 = vpop.xlane.xlu0 %550
      %552 = vmin.xlane.f32.xlu0 %v522
      %v553 = vpop.xlane.xlu0 %552
      %554 = vmin.xlane.f32.xlu0 %v523
      %v555 = vpop.xlane.xlu0 %554
      %v556 = vmax.f32 %v525, 1e-12
      %v557 = vmax.f32 %v527, 1e-12
      %v558 = vmax.f32 %v529, 1e-12
      %v559 = vmax.f32 %v531, 1e-12
      %v560 = vmax.f32 %v533, 1e-12
      %v561 = vmax.f32 %v535, 1e-12
      %v562 = vmax.f32 %v537, 1e-12
      %v563 = vmax.f32 %v539, 1e-12
      %v564 = vmax.f32 %v541, 1e-12
      %v565 = vmax.f32 %v543, 1e-12
      %v566 = vmax.f32 %v545, 1e-12
      %v567 = vmax.f32 %v547, 1e-12
      %v568 = vmax.f32 %v549, 1e-12
      %v569 = vmax.f32 %v551, 1e-12
      %v570 = vmax.f32 %v553, 1e-12
      %v571 = vmax.f32 %v555, 1e-12
      %v572 = vrsqrt.pop %v556
      %v573 = vmul.f32 %v572, %v556
      %v574 = vmul.f32 %v573, %v572
      %v575 = vmul.f32 0.5, %v574
      %v576 = vsub.f32 1.5, %v575
      %v577 = vmul.f32 %v572, %v576
      %v578 = vmul.f32 %v556, %v577
      %vm579 = vcmp.eq.f32.partialorder %v556, inf
      %v580 = vsel %vm579, %v556, %v578
      %vm581 = vcmp.eq.f32.partialorder %v556, 0.0
      %v582 = vand.u32 %v556, 2147483648
      %v583 = vsel %vm581, %v582, %v580
      %v584 = vrsqrt.pop %v557
      %v585 = vmul.f32 %v584, %v557
      %v586 = vmul.f32 %v585, %v584
      %v587 = vmul.f32 0.5, %v586
      %v588 = vsub.f32 1.5, %v587
      %v589 = vmul.f32 %v584, %v588
      %v590 = vmul.f32 %v557, %v589
      %vm591 = vcmp.eq.f32.partialorder %v557, inf
      %v592 = vsel %vm591, %v557, %v590
      %vm593 = vcmp.eq.f32.partialorder %v557, 0.0
      %v594 = vand.u32 %v557, 2147483648
      %v595 = vsel %vm593, %v594, %v592
      %v596 = vrsqrt.pop %v558
      %v597 = vmul.f32 %v596, %v558
      %v598 = vmul.f32 %v597, %v596
      %v599 = vmul.f32 0.5, %v598
      %v600 = vsub.f32 1.5, %v599
      %v601 = vmul.f32 %v596, %v600
      %v602 = vmul.f32 %v558, %v601
      %vm603 = vcmp.eq.f32.partialorder %v558, inf
      %v604 = vsel %vm603, %v558, %v602
      %vm605 = vcmp.eq.f32.partialorder %v558, 0.0
      %v606 = vand.u32 %v558, 2147483648
      %v607 = vsel %vm605, %v606, %v604
      %v608 = vrsqrt.pop %v559
      %v609 = vmul.f32 %v608, %v559
      %v610 = vmul.f32 %v609, %v608
      %v611 = vmul.f32 0.5, %v610
      %v612 = vsub.f32 1.5, %v611
      %v613 = vmul.f32 %v608, %v612
      %v614 = vmul.f32 %v559, %v613
      %vm615 = vcmp.eq.f32.partialorder %v559, inf
      %v616 = vsel %vm615, %v559, %v614
      %vm617 = vcmp.eq.f32.partialorder %v559, 0.0
      %v618 = vand.u32 %v559, 2147483648
      %v619 = vsel %vm617, %v618, %v616
      %v620 = vrsqrt.pop %v560
      %v621 = vmul.f32 %v620, %v560
      %v622 = vmul.f32 %v621, %v620
      %v623 = vmul.f32 0.5, %v622
      %v624 = vsub.f32 1.5, %v623
      %v625 = vmul.f32 %v620, %v624
      %v626 = vmul.f32 %v560, %v625
      %vm627 = vcmp.eq.f32.partialorder %v560, inf
      %v628 = vsel %vm627, %v560, %v626
      %vm629 = vcmp.eq.f32.partialorder %v560, 0.0
      %v630 = vand.u32 %v560, 2147483648
      %v631 = vsel %vm629, %v630, %v628
      %v632 = vrsqrt.pop %v561
      %v633 = vmul.f32 %v632, %v561
      %v634 = vmul.f32 %v633, %v632
      %v635 = vmul.f32 0.5, %v634
      %v636 = vsub.f32 1.5, %v635
      %v637 = vmul.f32 %v632, %v636
      %v638 = vmul.f32 %v561, %v637
      %vm639 = vcmp.eq.f32.partialorder %v561, inf
      %v640 = vsel %vm639, %v561, %v638
      %vm641 = vcmp.eq.f32.partialorder %v561, 0.0
      %v642 = vand.u32 %v561, 2147483648
      %v643 = vsel %vm641, %v642, %v640
      %v644 = vrsqrt.pop %v562
      %v645 = vmul.f32 %v644, %v562
      %v646 = vmul.f32 %v645, %v644
      %v647 = vmul.f32 0.5, %v646
      %v648 = vsub.f32 1.5, %v647
      %v649 = vmul.f32 %v644, %v648
      %v650 = vmul.f32 %v562, %v649
      %vm651 = vcmp.eq.f32.partialorder %v562, inf
      %v652 = vsel %vm651, %v562, %v650
      %vm653 = vcmp.eq.f32.partialorder %v562, 0.0
      %v654 = vand.u32 %v562, 2147483648
      %v655 = vsel %vm653, %v654, %v652
      %v656 = vrsqrt.pop %v563
      %v657 = vmul.f32 %v656, %v563
      %v658 = vmul.f32 %v657, %v656
      %v659 = vmul.f32 0.5, %v658
      %v660 = vsub.f32 1.5, %v659
      %v661 = vmul.f32 %v656, %v660
      %v662 = vmul.f32 %v563, %v661
      %vm663 = vcmp.eq.f32.partialorder %v563, inf
      %v664 = vsel %vm663, %v563, %v662
      %vm665 = vcmp.eq.f32.partialorder %v563, 0.0
      %v666 = vand.u32 %v563, 2147483648
      %v667 = vsel %vm665, %v666, %v664
      %v668 = vrsqrt.pop %v564
      %v669 = vmul.f32 %v668, %v564
      %v670 = vmul.f32 %v669, %v668
      %v671 = vmul.f32 0.5, %v670
      %v672 = vsub.f32 1.5, %v671
      %v673 = vmul.f32 %v668, %v672
      %v674 = vmul.f32 %v564, %v673
      %vm675 = vcmp.eq.f32.partialorder %v564, inf
      %v676 = vsel %vm675, %v564, %v674
      %vm677 = vcmp.eq.f32.partialorder %v564, 0.0
      %v678 = vand.u32 %v564, 2147483648
      %v679 = vsel %vm677, %v678, %v676
      %v680 = vrsqrt.pop %v565
      %v681 = vmul.f32 %v680, %v565
      %v682 = vmul.f32 %v681, %v680
      %v683 = vmul.f32 0.5, %v682
      %v684 = vsub.f32 1.5, %v683
      %v685 = vmul.f32 %v680, %v684
      %v686 = vmul.f32 %v565, %v685
      %vm687 = vcmp.eq.f32.partialorder %v565, inf
      %v688 = vsel %vm687, %v565, %v686
      %vm689 = vcmp.eq.f32.partialorder %v565, 0.0
      %v690 = vand.u32 %v565, 2147483648
      %v691 = vsel %vm689, %v690, %v688
      %v692 = vrsqrt.pop %v566
      %v693 = vmul.f32 %v692, %v566
      %v694 = vmul.f32 %v693, %v692
      %v695 = vmul.f32 0.5, %v694
      %v696 = vsub.f32 1.5, %v695
      %v697 = vmul.f32 %v692, %v696
      %v698 = vmul.f32 %v566, %v697
      %vm699 = vcmp.eq.f32.partialorder %v566, inf
      %v700 = vsel %vm699, %v566, %v698
      %vm701 = vcmp.eq.f32.partialorder %v566, 0.0
      %v702 = vand.u32 %v566, 2147483648
      %v703 = vsel %vm701, %v702, %v700
      %v704 = vrsqrt.pop %v567
      %v705 = vmul.f32 %v704, %v567
      %v706 = vmul.f32 %v705, %v704
      %v707 = vmul.f32 0.5, %v706
      %v708 = vsub.f32 1.5, %v707
      %v709 = vmul.f32 %v704, %v708
      %v710 = vmul.f32 %v567, %v709
      %vm711 = vcmp.eq.f32.partialorder %v567, inf
      %v712 = vsel %vm711, %v567, %v710
      %vm713 = vcmp.eq.f32.partialorder %v567, 0.0
      %v714 = vand.u32 %v567, 2147483648
      %v715 = vsel %vm713, %v714, %v712
      %v716 = vrsqrt.pop %v568
      %v717 = vmul.f32 %v716, %v568
      %v718 = vmul.f32 %v717, %v716
      %v719 = vmul.f32 0.5, %v718
      %v720 = vsub.f32 1.5, %v719
      %v721 = vmul.f32 %v716, %v720
      %v722 = vmul.f32 %v568, %v721
      %vm723 = vcmp.eq.f32.partialorder %v568, inf
      %v724 = vsel %vm723, %v568, %v722
      %vm725 = vcmp.eq.f32.partialorder %v568, 0.0
      %v726 = vand.u32 %v568, 2147483648
      %v727 = vsel %vm725, %v726, %v724
      %v728 = vrsqrt.pop %v569
      %v729 = vmul.f32 %v728, %v569
      %v730 = vmul.f32 %v729, %v728
      %v731 = vmul.f32 0.5, %v730
      %v732 = vsub.f32 1.5, %v731
      %v733 = vmul.f32 %v728, %v732
      %v734 = vmul.f32 %v569, %v733
      %vm735 = vcmp.eq.f32.partialorder %v569, inf
      %v736 = vsel %vm735, %v569, %v734
      %vm737 = vcmp.eq.f32.partialorder %v569, 0.0
      %v738 = vand.u32 %v569, 2147483648
      %v739 = vsel %vm737, %v738, %v736
      %v740 = vrsqrt.pop %v570
      %v741 = vmul.f32 %v740, %v570
      %v742 = vmul.f32 %v741, %v740
      %v743 = vmul.f32 0.5, %v742
      %v744 = vsub.f32 1.5, %v743
      %v745 = vmul.f32 %v740, %v744
      %v746 = vmul.f32 %v570, %v745
      %vm747 = vcmp.eq.f32.partialorder %v570, inf
      %v748 = vsel %vm747, %v570, %v746
      %vm749 = vcmp.eq.f32.partialorder %v570, 0.0
      %v750 = vand.u32 %v570, 2147483648
      %v751 = vsel %vm749, %v750, %v748
      %v752 = vrsqrt.pop %v571
      %v753 = vmul.f32 %v752, %v571
      %v754 = vmul.f32 %v753, %v752
      %v755 = vmul.f32 0.5, %v754
      %v756 = vsub.f32 1.5, %v755
      %v757 = vmul.f32 %v752, %v756
      %v758 = vmul.f32 %v571, %v757
      %vm759 = vcmp.eq.f32.partialorder %v571, inf
      %v760 = vsel %vm759, %v571, %v758
      %vm761 = vcmp.eq.f32.partialorder %v571, 0.0
      %v762 = vand.u32 %v571, 2147483648
      %v763 = vsel %vm761, %v762, %v760
      %v764 = vsub.f32 0.0, %v556
      %v765 = vsub.f32 0.0, %v557
      %v766 = vsub.f32 0.0, %v558
      %v767 = vsub.f32 0.0, %v559
      %v768 = vsub.f32 0.0, %v560
      %v769 = vsub.f32 0.0, %v561
      %v770 = vsub.f32 0.0, %v562
      %v771 = vsub.f32 0.0, %v563
      %v772 = vsub.f32 0.0, %v564
      %v773 = vsub.f32 0.0, %v565
      %v774 = vsub.f32 0.0, %v566
      %v775 = vsub.f32 0.0, %v567
      %v776 = vsub.f32 0.0, %v568
      %v777 = vsub.f32 0.0, %v569
      %v778 = vsub.f32 0.0, %v570
      %v779 = vsub.f32 0.0, %v571
      %v780 = vrcp.pop 0.0009
      %v781 = vmul.f32 0.0009, %v780
      %v782 = vsub.f32 1.0, %v781
      %v783 = vmul.f32 %v780, %v782
      %v784 = vadd.f32 %v780, %v783
      %vm785 = vweird.f32 %v780
      %v786 = vsel %vm785, %v780, %v784
      %v787 = vmul.f32 %v764, %v786
      %v788 = vmul.f32 %v765, %v786
      %v789 = vmul.f32 %v766, %v786
      %v790 = vmul.f32 %v767, %v786
      %v791 = vmul.f32 %v768, %v786
      %v792 = vmul.f32 %v769, %v786
      %v793 = vmul.f32 %v770, %v786
      %v794 = vmul.f32 %v771, %v786
      %v795 = vmul.f32 %v772, %v786
      %v796 = vmul.f32 %v773, %v786
      %v797 = vmul.f32 %v774, %v786
      %v798 = vmul.f32 %v775, %v786
      %v799 = vmul.f32 %v776, %v786
      %v800 = vmul.f32 %v777, %v786
      %v801 = vmul.f32 %v778, %v786
      %v802 = vmul.f32 %v779, %v786
      %v803 = vmul.f32 %v787, 1.442695
      %v804 = vpow.pop %v803
      %v805 = vmul.f32 %v788, 1.442695
      %v806 = vpow.pop %v805
      %v807 = vmul.f32 %v789, 1.442695
      %v808 = vpow.pop %v807
      %v809 = vmul.f32 %v790, 1.442695
      %v810 = vpow.pop %v809
      %v811 = vmul.f32 %v791, 1.442695
      %v812 = vpow.pop %v811
      %v813 = vmul.f32 %v792, 1.442695
      %v814 = vpow.pop %v813
      %v815 = vmul.f32 %v793, 1.442695
      %v816 = vpow.pop %v815
      %v817 = vmul.f32 %v794, 1.442695
      %v818 = vpow.pop %v817
      %v819 = vmul.f32 %v795, 1.442695
      %v820 = vpow.pop %v819
      %v821 = vmul.f32 %v796, 1.442695
      %v822 = vpow.pop %v821
      %v823 = vmul.f32 %v797, 1.442695
      %v824 = vpow.pop %v823
      %v825 = vmul.f32 %v798, 1.442695
      %v826 = vpow.pop %v825
      %v827 = vmul.f32 %v799, 1.442695
      %v828 = vpow.pop %v827
      %v829 = vmul.f32 %v800, 1.442695
      %v830 = vpow.pop %v829
      %v831 = vmul.f32 %v801, 1.442695
      %v832 = vpow.pop %v831
      %v833 = vmul.f32 %v802, 1.442695
      %v834 = vpow.pop %v833
      %v835 = vsub.f32 0.07, %v583
      %v836 = vsub.f32 0.07, %v595
      %v837 = vsub.f32 0.07, %v607
      %v838 = vsub.f32 0.07, %v619
      %v839 = vsub.f32 0.07, %v631
      %v840 = vsub.f32 0.07, %v643
      %v841 = vsub.f32 0.07, %v655
      %v842 = vsub.f32 0.07, %v667
      %v843 = vsub.f32 0.07, %v679
      %v844 = vsub.f32 0.07, %v691
      %v845 = vsub.f32 0.07, %v703
      %v846 = vsub.f32 0.07, %v715
      %v847 = vsub.f32 0.07, %v727
      %v848 = vsub.f32 0.07, %v739
      %v849 = vsub.f32 0.07, %v751
      %v850 = vsub.f32 0.07, %v763
      %v851 = vmul.f32 %v835, %v804
      %v852 = vmul.f32 %v836, %v806
      %v853 = vmul.f32 %v837, %v808
      %v854 = vmul.f32 %v838, %v810
      %v855 = vmul.f32 %v839, %v812
      %v856 = vmul.f32 %v840, %v814
      %v857 = vmul.f32 %v841, %v816
      %v858 = vmul.f32 %v842, %v818
      %v859 = vmul.f32 %v843, %v820
      %v860 = vmul.f32 %v844, %v822
      %v861 = vmul.f32 %v845, %v824
      %v862 = vmul.f32 %v846, %v826
      %v863 = vmul.f32 %v847, %v828
      %v864 = vmul.f32 %v848, %v830
      %v865 = vmul.f32 %v849, %v832
      %v866 = vmul.f32 %v850, %v834
      %vm867 = vcmask 7168
      %v868 = vsel %vm867, %v851, 0.0
      %v869 = vsel %vm867, %v852, 0.0
      %v870 = vadd.f32 %v868, %v869
      %v871 = vsel %vm867, %v853, 0.0
      %v872 = vadd.f32 %v870, %v871
      %v873 = vsel %vm867, %v854, 0.0
      %v874 = vadd.f32 %v872, %v873
      %v875 = vsel %vm867, %v855, 0.0
      %v876 = vadd.f32 %v874, %v875
      %v877 = vsel %vm867, %v856, 0.0
      %v878 = vadd.f32 %v876, %v877
      %v879 = vsel %vm867, %v857, 0.0
      %v880 = vadd.f32 %v878, %v879
      %v881 = vsel %vm867, %v858, 0.0
      %v882 = vadd.f32 %v880, %v881
      %v883 = vsel %vm867, %v859, 0.0
      %v884 = vadd.f32 %v882, %v883
      %v885 = vsel %vm867, %v860, 0.0
      %v886 = vadd.f32 %v884, %v885
      %v887 = vsel %vm867, %v861, 0.0
      %v888 = vadd.f32 %v886, %v887
      %v889 = vsel %vm867, %v862, 0.0
      %v890 = vadd.f32 %v888, %v889
      %v891 = vsel %vm867, %v863, 0.0
      %v892 = vadd.f32 %v890, %v891
      %v893 = vsel %vm867, %v864, 0.0
      %v894 = vadd.f32 %v892, %v893
      %v895 = vsel %vm867, %v865, 0.0
      %v896 = vadd.f32 %v894, %v895
      %v897 = vsel %vm867, %v866, 0.0
      %v898 = vadd.f32 %v896, %v897
      %899 = vadd.xlane.f32.xlu0 %v898
      %v900 = vpop.xlane.xlu0 %899
      %v901 = vrot.slane %v900, 4
      %v902 = vadd.f32 %v900, %v901
      %v903 = vrot.slane %v902, 2
      %v904 = vadd.f32 %v902, %v903
      %v905 = vrot.slane %v904, 1
      %v906 = vadd.f32 %v904, %v905
      %s907 = vtos %v906
      %v908 = vstv %s907
      %v909 = vadd.f32 %v908, 0.0
      %vm910 = vcmp.eq.f32.partialorder %v508, %v525
      %vm911 = vcmp.eq.f32.partialorder %v509, %v527
      %vm912 = vcmp.eq.f32.partialorder %v510, %v529
      %vm913 = vcmp.eq.f32.partialorder %v511, %v531
      %vm914 = vcmp.eq.f32.partialorder %v512, %v533
      %vm915 = vcmp.eq.f32.partialorder %v513, %v535
      %vm916 = vcmp.eq.f32.partialorder %v514, %v537
      %vm917 = vcmp.eq.f32.partialorder %v515, %v539
      %vm918 = vcmp.eq.f32.partialorder %v516, %v541
      %vm919 = vcmp.eq.f32.partialorder %v517, %v543
      %vm920 = vcmp.eq.f32.partialorder %v518, %v545
      %vm921 = vcmp.eq.f32.partialorder %v519, %v547
      %vm922 = vcmp.eq.f32.partialorder %v520, %v549
      %vm923 = vcmp.eq.f32.partialorder %v521, %v551
      %vm924 = vcmp.eq.f32.partialorder %v522, %v553
      %vm925 = vcmp.eq.f32.partialorder %v523, %v555
      %v926 = vsel %vm910, inf, %v508
      %v927 = vsel %vm911, inf, %v509
      %v928 = vsel %vm912, inf, %v510
      %v929 = vsel %vm913, inf, %v511
      %v930 = vsel %vm914, inf, %v512
      %v931 = vsel %vm915, inf, %v513
      %v932 = vsel %vm916, inf, %v514
      %v933 = vsel %vm917, inf, %v515
      %v934 = vsel %vm918, inf, %v516
      %v935 = vsel %vm919, inf, %v517
      %v936 = vsel %vm920, inf, %v518
      %v937 = vsel %vm921, inf, %v519
      %v938 = vsel %vm922, inf, %v520
      %v939 = vsel %vm923, inf, %v521
      %v940 = vsel %vm924, inf, %v522
      %v941 = vsel %vm925, inf, %v523
      %942 = vmin.xlane.f32.xlu0 %v926
      %v943 = vpop.xlane.xlu0 %942
      %944 = vmin.xlane.f32.xlu0 %v927
      %v945 = vpop.xlane.xlu0 %944
      %946 = vmin.xlane.f32.xlu0 %v928
      %v947 = vpop.xlane.xlu0 %946
      %948 = vmin.xlane.f32.xlu0 %v929
      %v949 = vpop.xlane.xlu0 %948
      %950 = vmin.xlane.f32.xlu0 %v930
      %v951 = vpop.xlane.xlu0 %950
      %952 = vmin.xlane.f32.xlu0 %v931
      %v953 = vpop.xlane.xlu0 %952
      %954 = vmin.xlane.f32.xlu0 %v932
      %v955 = vpop.xlane.xlu0 %954
      %956 = vmin.xlane.f32.xlu0 %v933
      %v957 = vpop.xlane.xlu0 %956
      %958 = vmin.xlane.f32.xlu0 %v934
      %v959 = vpop.xlane.xlu0 %958
      %960 = vmin.xlane.f32.xlu0 %v935
      %v961 = vpop.xlane.xlu0 %960
      %962 = vmin.xlane.f32.xlu0 %v936
      %v963 = vpop.xlane.xlu0 %962
      %964 = vmin.xlane.f32.xlu0 %v937
      %v965 = vpop.xlane.xlu0 %964
      %966 = vmin.xlane.f32.xlu0 %v938
      %v967 = vpop.xlane.xlu0 %966
      %968 = vmin.xlane.f32.xlu0 %v939
      %v969 = vpop.xlane.xlu0 %968
      %970 = vmin.xlane.f32.xlu0 %v940
      %v971 = vpop.xlane.xlu0 %970
      %972 = vmin.xlane.f32.xlu0 %v941
      %v973 = vpop.xlane.xlu0 %972
      %v974 = vmax.f32 %v943, 1e-12
      %v975 = vmax.f32 %v945, 1e-12
      %v976 = vmax.f32 %v947, 1e-12
      %v977 = vmax.f32 %v949, 1e-12
      %v978 = vmax.f32 %v951, 1e-12
      %v979 = vmax.f32 %v953, 1e-12
      %v980 = vmax.f32 %v955, 1e-12
      %v981 = vmax.f32 %v957, 1e-12
      %v982 = vmax.f32 %v959, 1e-12
      %v983 = vmax.f32 %v961, 1e-12
      %v984 = vmax.f32 %v963, 1e-12
      %v985 = vmax.f32 %v965, 1e-12
      %v986 = vmax.f32 %v967, 1e-12
      %v987 = vmax.f32 %v969, 1e-12
      %v988 = vmax.f32 %v971, 1e-12
      %v989 = vmax.f32 %v973, 1e-12
      %v990 = vrsqrt.pop %v974
      %v991 = vmul.f32 %v990, %v974
      %v992 = vmul.f32 %v991, %v990
      %v993 = vmul.f32 0.5, %v992
      %v994 = vsub.f32 1.5, %v993
      %v995 = vmul.f32 %v990, %v994
      %v996 = vmul.f32 %v974, %v995
      %vm997 = vcmp.eq.f32.partialorder %v974, inf
      %v998 = vsel %vm997, %v974, %v996
      %vm999 = vcmp.eq.f32.partialorder %v974, 0.0
      %v1000 = vand.u32 %v974, 2147483648
      %v1001 = vsel %vm999, %v1000, %v998
      %v1002 = vrsqrt.pop %v975
      %v1003 = vmul.f32 %v1002, %v975
      %v1004 = vmul.f32 %v1003, %v1002
      %v1005 = vmul.f32 0.5, %v1004
      %v1006 = vsub.f32 1.5, %v1005
      %v1007 = vmul.f32 %v1002, %v1006
      %v1008 = vmul.f32 %v975, %v1007
      %vm1009 = vcmp.eq.f32.partialorder %v975, inf
      %v1010 = vsel %vm1009, %v975, %v1008
      %vm1011 = vcmp.eq.f32.partialorder %v975, 0.0
      %v1012 = vand.u32 %v975, 2147483648
      %v1013 = vsel %vm1011, %v1012, %v1010
      %v1014 = vrsqrt.pop %v976
      %v1015 = vmul.f32 %v1014, %v976
      %v1016 = vmul.f32 %v1015, %v1014
      %v1017 = vmul.f32 0.5, %v1016
      %v1018 = vsub.f32 1.5, %v1017
      %v1019 = vmul.f32 %v1014, %v1018
      %v1020 = vmul.f32 %v976, %v1019
      %vm1021 = vcmp.eq.f32.partialorder %v976, inf
      %v1022 = vsel %vm1021, %v976, %v1020
      %vm1023 = vcmp.eq.f32.partialorder %v976, 0.0
      %v1024 = vand.u32 %v976, 2147483648
      %v1025 = vsel %vm1023, %v1024, %v1022
      %v1026 = vrsqrt.pop %v977
      %v1027 = vmul.f32 %v1026, %v977
      %v1028 = vmul.f32 %v1027, %v1026
      %v1029 = vmul.f32 0.5, %v1028
      %v1030 = vsub.f32 1.5, %v1029
      %v1031 = vmul.f32 %v1026, %v1030
      %v1032 = vmul.f32 %v977, %v1031
      %vm1033 = vcmp.eq.f32.partialorder %v977, inf
      %v1034 = vsel %vm1033, %v977, %v1032
      %vm1035 = vcmp.eq.f32.partialorder %v977, 0.0
      %v1036 = vand.u32 %v977, 2147483648
      %v1037 = vsel %vm1035, %v1036, %v1034
      %v1038 = vrsqrt.pop %v978
      %v1039 = vmul.f32 %v1038, %v978
      %v1040 = vmul.f32 %v1039, %v1038
      %v1041 = vmul.f32 0.5, %v1040
      %v1042 = vsub.f32 1.5, %v1041
      %v1043 = vmul.f32 %v1038, %v1042
      %v1044 = vmul.f32 %v978, %v1043
      %vm1045 = vcmp.eq.f32.partialorder %v978, inf
      %v1046 = vsel %vm1045, %v978, %v1044
      %vm1047 = vcmp.eq.f32.partialorder %v978, 0.0
      %v1048 = vand.u32 %v978, 2147483648
      %v1049 = vsel %vm1047, %v1048, %v1046
      %v1050 = vrsqrt.pop %v979
      %v1051 = vmul.f32 %v1050, %v979
      %v1052 = vmul.f32 %v1051, %v1050
      %v1053 = vmul.f32 0.5, %v1052
      %v1054 = vsub.f32 1.5, %v1053
      %v1055 = vmul.f32 %v1050, %v1054
      %v1056 = vmul.f32 %v979, %v1055
      %vm1057 = vcmp.eq.f32.partialorder %v979, inf
      %v1058 = vsel %vm1057, %v979, %v1056
      %vm1059 = vcmp.eq.f32.partialorder %v979, 0.0
      %v1060 = vand.u32 %v979, 2147483648
      %v1061 = vsel %vm1059, %v1060, %v1058
      %v1062 = vrsqrt.pop %v980
      %v1063 = vmul.f32 %v1062, %v980
      %v1064 = vmul.f32 %v1063, %v1062
      %v1065 = vmul.f32 0.5, %v1064
      %v1066 = vsub.f32 1.5, %v1065
      %v1067 = vmul.f32 %v1062, %v1066
      %v1068 = vmul.f32 %v980, %v1067
      %vm1069 = vcmp.eq.f32.partialorder %v980, inf
      %v1070 = vsel %vm1069, %v980, %v1068
      %vm1071 = vcmp.eq.f32.partialorder %v980, 0.0
      %v1072 = vand.u32 %v980, 2147483648
      %v1073 = vsel %vm1071, %v1072, %v1070
      %v1074 = vrsqrt.pop %v981
      %v1075 = vmul.f32 %v1074, %v981
      %v1076 = vmul.f32 %v1075, %v1074
      %v1077 = vmul.f32 0.5, %v1076
      %v1078 = vsub.f32 1.5, %v1077
      %v1079 = vmul.f32 %v1074, %v1078
      %v1080 = vmul.f32 %v981, %v1079
      %vm1081 = vcmp.eq.f32.partialorder %v981, inf
      %v1082 = vsel %vm1081, %v981, %v1080
      %vm1083 = vcmp.eq.f32.partialorder %v981, 0.0
      %v1084 = vand.u32 %v981, 2147483648
      %v1085 = vsel %vm1083, %v1084, %v1082
      %v1086 = vrsqrt.pop %v982
      %v1087 = vmul.f32 %v1086, %v982
      %v1088 = vmul.f32 %v1087, %v1086
      %v1089 = vmul.f32 0.5, %v1088
      %v1090 = vsub.f32 1.5, %v1089
      %v1091 = vmul.f32 %v1086, %v1090
      %v1092 = vmul.f32 %v982, %v1091
      %vm1093 = vcmp.eq.f32.partialorder %v982, inf
      %v1094 = vsel %vm1093, %v982, %v1092
      %vm1095 = vcmp.eq.f32.partialorder %v982, 0.0
      %v1096 = vand.u32 %v982, 2147483648
      %v1097 = vsel %vm1095, %v1096, %v1094
      %v1098 = vrsqrt.pop %v983
      %v1099 = vmul.f32 %v1098, %v983
      %v1100 = vmul.f32 %v1099, %v1098
      %v1101 = vmul.f32 0.5, %v1100
      %v1102 = vsub.f32 1.5, %v1101
      %v1103 = vmul.f32 %v1098, %v1102
      %v1104 = vmul.f32 %v983, %v1103
      %vm1105 = vcmp.eq.f32.partialorder %v983, inf
      %v1106 = vsel %vm1105, %v983, %v1104
      %vm1107 = vcmp.eq.f32.partialorder %v983, 0.0
      %v1108 = vand.u32 %v983, 2147483648
      %v1109 = vsel %vm1107, %v1108, %v1106
      %v1110 = vrsqrt.pop %v984
      %v1111 = vmul.f32 %v1110, %v984
      %v1112 = vmul.f32 %v1111, %v1110
      %v1113 = vmul.f32 0.5, %v1112
      %v1114 = vsub.f32 1.5, %v1113
      %v1115 = vmul.f32 %v1110, %v1114
      %v1116 = vmul.f32 %v984, %v1115
      %vm1117 = vcmp.eq.f32.partialorder %v984, inf
      %v1118 = vsel %vm1117, %v984, %v1116
      %vm1119 = vcmp.eq.f32.partialorder %v984, 0.0
      %v1120 = vand.u32 %v984, 2147483648
      %v1121 = vsel %vm1119, %v1120, %v1118
      %v1122 = vrsqrt.pop %v985
      %v1123 = vmul.f32 %v1122, %v985
      %v1124 = vmul.f32 %v1123, %v1122
      %v1125 = vmul.f32 0.5, %v1124
      %v1126 = vsub.f32 1.5, %v1125
      %v1127 = vmul.f32 %v1122, %v1126
      %v1128 = vmul.f32 %v985, %v1127
      %vm1129 = vcmp.eq.f32.partialorder %v985, inf
      %v1130 = vsel %vm1129, %v985, %v1128
      %vm1131 = vcmp.eq.f32.partialorder %v985, 0.0
      %v1132 = vand.u32 %v985, 2147483648
      %v1133 = vsel %vm1131, %v1132, %v1130
      %v1134 = vrsqrt.pop %v986
      %v1135 = vmul.f32 %v1134, %v986
      %v1136 = vmul.f32 %v1135, %v1134
      %v1137 = vmul.f32 0.5, %v1136
      %v1138 = vsub.f32 1.5, %v1137
      %v1139 = vmul.f32 %v1134, %v1138
      %v1140 = vmul.f32 %v986, %v1139
      %vm1141 = vcmp.eq.f32.partialorder %v986, inf
      %v1142 = vsel %vm1141, %v986, %v1140
      %vm1143 = vcmp.eq.f32.partialorder %v986, 0.0
      %v1144 = vand.u32 %v986, 2147483648
      %v1145 = vsel %vm1143, %v1144, %v1142
      %v1146 = vrsqrt.pop %v987
      %v1147 = vmul.f32 %v1146, %v987
      %v1148 = vmul.f32 %v1147, %v1146
      %v1149 = vmul.f32 0.5, %v1148
      %v1150 = vsub.f32 1.5, %v1149
      %v1151 = vmul.f32 %v1146, %v1150
      %v1152 = vmul.f32 %v987, %v1151
      %vm1153 = vcmp.eq.f32.partialorder %v987, inf
      %v1154 = vsel %vm1153, %v987, %v1152
      %vm1155 = vcmp.eq.f32.partialorder %v987, 0.0
      %v1156 = vand.u32 %v987, 2147483648
      %v1157 = vsel %vm1155, %v1156, %v1154
      %v1158 = vrsqrt.pop %v988
      %v1159 = vmul.f32 %v1158, %v988
      %v1160 = vmul.f32 %v1159, %v1158
      %v1161 = vmul.f32 0.5, %v1160
      %v1162 = vsub.f32 1.5, %v1161
      %v1163 = vmul.f32 %v1158, %v1162
      %v1164 = vmul.f32 %v988, %v1163
      %vm1165 = vcmp.eq.f32.partialorder %v988, inf
      %v1166 = vsel %vm1165, %v988, %v1164
      %vm1167 = vcmp.eq.f32.partialorder %v988, 0.0
      %v1168 = vand.u32 %v988, 2147483648
      %v1169 = vsel %vm1167, %v1168, %v1166
      %v1170 = vrsqrt.pop %v989
      %v1171 = vmul.f32 %v1170, %v989
      %v1172 = vmul.f32 %v1171, %v1170
      %v1173 = vmul.f32 0.5, %v1172
      %v1174 = vsub.f32 1.5, %v1173
      %v1175 = vmul.f32 %v1170, %v1174
      %v1176 = vmul.f32 %v989, %v1175
      %vm1177 = vcmp.eq.f32.partialorder %v989, inf
      %v1178 = vsel %vm1177, %v989, %v1176
      %vm1179 = vcmp.eq.f32.partialorder %v989, 0.0
      %v1180 = vand.u32 %v989, 2147483648
      %v1181 = vsel %vm1179, %v1180, %v1178
      %v1182 = vsub.f32 0.0, %v974
      %v1183 = vsub.f32 0.0, %v975
      %v1184 = vsub.f32 0.0, %v976
      %v1185 = vsub.f32 0.0, %v977
      %v1186 = vsub.f32 0.0, %v978
      %v1187 = vsub.f32 0.0, %v979
      %v1188 = vsub.f32 0.0, %v980
      %v1189 = vsub.f32 0.0, %v981
      %v1190 = vsub.f32 0.0, %v982
      %v1191 = vsub.f32 0.0, %v983
      %v1192 = vsub.f32 0.0, %v984
      %v1193 = vsub.f32 0.0, %v985
      %v1194 = vsub.f32 0.0, %v986
      %v1195 = vsub.f32 0.0, %v987
      %v1196 = vsub.f32 0.0, %v988
      %v1197 = vsub.f32 0.0, %v989
      %v1198 = vmul.f32 %v1182, %v786
      %v1199 = vmul.f32 %v1183, %v786
      %v1200 = vmul.f32 %v1184, %v786
      %v1201 = vmul.f32 %v1185, %v786
      %v1202 = vmul.f32 %v1186, %v786
      %v1203 = vmul.f32 %v1187, %v786
      %v1204 = vmul.f32 %v1188, %v786
      %v1205 = vmul.f32 %v1189, %v786
      %v1206 = vmul.f32 %v1190, %v786
      %v1207 = vmul.f32 %v1191, %v786
      %v1208 = vmul.f32 %v1192, %v786
      %v1209 = vmul.f32 %v1193, %v786
      %v1210 = vmul.f32 %v1194, %v786
      %v1211 = vmul.f32 %v1195, %v786
      %v1212 = vmul.f32 %v1196, %v786
      %v1213 = vmul.f32 %v1197, %v786
      %v1214 = vmul.f32 %v1198, 1.442695
      %v1215 = vpow.pop %v1214
      %v1216 = vmul.f32 %v1199, 1.442695
      %v1217 = vpow.pop %v1216
      %v1218 = vmul.f32 %v1200, 1.442695
      %v1219 = vpow.pop %v1218
      %v1220 = vmul.f32 %v1201, 1.442695
      %v1221 = vpow.pop %v1220
      %v1222 = vmul.f32 %v1202, 1.442695
      %v1223 = vpow.pop %v1222
      %v1224 = vmul.f32 %v1203, 1.442695
      %v1225 = vpow.pop %v1224
      %v1226 = vmul.f32 %v1204, 1.442695
      %v1227 = vpow.pop %v1226
      %v1228 = vmul.f32 %v1205, 1.442695
      %v1229 = vpow.pop %v1228
      %v1230 = vmul.f32 %v1206, 1.442695
      %v1231 = vpow.pop %v1230
      %v1232 = vmul.f32 %v1207, 1.442695
      %v1233 = vpow.pop %v1232
      %v1234 = vmul.f32 %v1208, 1.442695
      %v1235 = vpow.pop %v1234
      %v1236 = vmul.f32 %v1209, 1.442695
      %v1237 = vpow.pop %v1236
      %v1238 = vmul.f32 %v1210, 1.442695
      %v1239 = vpow.pop %v1238
      %v1240 = vmul.f32 %v1211, 1.442695
      %v1241 = vpow.pop %v1240
      %v1242 = vmul.f32 %v1212, 1.442695
      %v1243 = vpow.pop %v1242
      %v1244 = vmul.f32 %v1213, 1.442695
      %v1245 = vpow.pop %v1244
      %v1246 = vsub.f32 0.07, %v1001
      %v1247 = vsub.f32 0.07, %v1013
      %v1248 = vsub.f32 0.07, %v1025
      %v1249 = vsub.f32 0.07, %v1037
      %v1250 = vsub.f32 0.07, %v1049
      %v1251 = vsub.f32 0.07, %v1061
      %v1252 = vsub.f32 0.07, %v1073
      %v1253 = vsub.f32 0.07, %v1085
      %v1254 = vsub.f32 0.07, %v1097
      %v1255 = vsub.f32 0.07, %v1109
      %v1256 = vsub.f32 0.07, %v1121
      %v1257 = vsub.f32 0.07, %v1133
      %v1258 = vsub.f32 0.07, %v1145
      %v1259 = vsub.f32 0.07, %v1157
      %v1260 = vsub.f32 0.07, %v1169
      %v1261 = vsub.f32 0.07, %v1181
      %v1262 = vmul.f32 %v1246, %v1215
      %v1263 = vmul.f32 %v1247, %v1217
      %v1264 = vmul.f32 %v1248, %v1219
      %v1265 = vmul.f32 %v1249, %v1221
      %v1266 = vmul.f32 %v1250, %v1223
      %v1267 = vmul.f32 %v1251, %v1225
      %v1268 = vmul.f32 %v1252, %v1227
      %v1269 = vmul.f32 %v1253, %v1229
      %v1270 = vmul.f32 %v1254, %v1231
      %v1271 = vmul.f32 %v1255, %v1233
      %v1272 = vmul.f32 %v1256, %v1235
      %v1273 = vmul.f32 %v1257, %v1237
      %v1274 = vmul.f32 %v1258, %v1239
      %v1275 = vmul.f32 %v1259, %v1241
      %v1276 = vmul.f32 %v1260, %v1243
      %v1277 = vmul.f32 %v1261, %v1245
      %v1278 = vsel %vm867, %v1262, 0.0
      %v1279 = vsel %vm867, %v1263, 0.0
      %v1280 = vadd.f32 %v1278, %v1279
      %v1281 = vsel %vm867, %v1264, 0.0
      %v1282 = vadd.f32 %v1280, %v1281
      %v1283 = vsel %vm867, %v1265, 0.0
      %v1284 = vadd.f32 %v1282, %v1283
      %v1285 = vsel %vm867, %v1266, 0.0
      %v1286 = vadd.f32 %v1284, %v1285
      %v1287 = vsel %vm867, %v1267, 0.0
      %v1288 = vadd.f32 %v1286, %v1287
      %v1289 = vsel %vm867, %v1268, 0.0
      %v1290 = vadd.f32 %v1288, %v1289
      %v1291 = vsel %vm867, %v1269, 0.0
      %v1292 = vadd.f32 %v1290, %v1291
      %v1293 = vsel %vm867, %v1270, 0.0
      %v1294 = vadd.f32 %v1292, %v1293
      %v1295 = vsel %vm867, %v1271, 0.0
      %v1296 = vadd.f32 %v1294, %v1295
      %v1297 = vsel %vm867, %v1272, 0.0
      %v1298 = vadd.f32 %v1296, %v1297
      %v1299 = vsel %vm867, %v1273, 0.0
      %v1300 = vadd.f32 %v1298, %v1299
      %v1301 = vsel %vm867, %v1274, 0.0
      %v1302 = vadd.f32 %v1300, %v1301
      %v1303 = vsel %vm867, %v1275, 0.0
      %v1304 = vadd.f32 %v1302, %v1303
      %v1305 = vsel %vm867, %v1276, 0.0
      %v1306 = vadd.f32 %v1304, %v1305
      %v1307 = vsel %vm867, %v1277, 0.0
      %v1308 = vadd.f32 %v1306, %v1307
      %1309 = vadd.xlane.f32.xlu0 %v1308
      %v1310 = vpop.xlane.xlu0 %1309
      %v1311 = vrot.slane %v1310, 4
      %v1312 = vadd.f32 %v1310, %v1311
      %v1313 = vrot.slane %v1312, 2
      %v1314 = vadd.f32 %v1312, %v1313
      %v1315 = vrot.slane %v1314, 1
      %v1316 = vadd.f32 %v1314, %v1315
      %s1317 = vtos %v1316
      %v1318 = vstv %s1317
      %v1319 = vadd.f32 %v909, %v1318
      %vm1320 = vcmp.eq.f32.partialorder %v926, %v943
      %vm1321 = vcmp.eq.f32.partialorder %v927, %v945
      %vm1322 = vcmp.eq.f32.partialorder %v928, %v947
      %vm1323 = vcmp.eq.f32.partialorder %v929, %v949
      %vm1324 = vcmp.eq.f32.partialorder %v930, %v951
      %vm1325 = vcmp.eq.f32.partialorder %v931, %v953
      %vm1326 = vcmp.eq.f32.partialorder %v932, %v955
      %vm1327 = vcmp.eq.f32.partialorder %v933, %v957
      %vm1328 = vcmp.eq.f32.partialorder %v934, %v959
      %vm1329 = vcmp.eq.f32.partialorder %v935, %v961
      %vm1330 = vcmp.eq.f32.partialorder %v936, %v963
      %vm1331 = vcmp.eq.f32.partialorder %v937, %v965
      %vm1332 = vcmp.eq.f32.partialorder %v938, %v967
      %vm1333 = vcmp.eq.f32.partialorder %v939, %v969
      %vm1334 = vcmp.eq.f32.partialorder %v940, %v971
      %vm1335 = vcmp.eq.f32.partialorder %v941, %v973
      %v1336 = vsel %vm1320, inf, %v926
      %v1337 = vsel %vm1321, inf, %v927
      %v1338 = vsel %vm1322, inf, %v928
      %v1339 = vsel %vm1323, inf, %v929
      %v1340 = vsel %vm1324, inf, %v930
      %v1341 = vsel %vm1325, inf, %v931
      %v1342 = vsel %vm1326, inf, %v932
      %v1343 = vsel %vm1327, inf, %v933
      %v1344 = vsel %vm1328, inf, %v934
      %v1345 = vsel %vm1329, inf, %v935
      %v1346 = vsel %vm1330, inf, %v936
      %v1347 = vsel %vm1331, inf, %v937
      %v1348 = vsel %vm1332, inf, %v938
      %v1349 = vsel %vm1333, inf, %v939
      %v1350 = vsel %vm1334, inf, %v940
      %v1351 = vsel %vm1335, inf, %v941
      %1352 = vmin.xlane.f32.xlu0 %v1336
      %v1353 = vpop.xlane.xlu0 %1352
      %1354 = vmin.xlane.f32.xlu0 %v1337
      %v1355 = vpop.xlane.xlu0 %1354
      %1356 = vmin.xlane.f32.xlu0 %v1338
      %v1357 = vpop.xlane.xlu0 %1356
      %1358 = vmin.xlane.f32.xlu0 %v1339
      %v1359 = vpop.xlane.xlu0 %1358
      %1360 = vmin.xlane.f32.xlu0 %v1340
      %v1361 = vpop.xlane.xlu0 %1360
      %1362 = vmin.xlane.f32.xlu0 %v1341
      %v1363 = vpop.xlane.xlu0 %1362
      %1364 = vmin.xlane.f32.xlu0 %v1342
      %v1365 = vpop.xlane.xlu0 %1364
      %1366 = vmin.xlane.f32.xlu0 %v1343
      %v1367 = vpop.xlane.xlu0 %1366
      %1368 = vmin.xlane.f32.xlu0 %v1344
      %v1369 = vpop.xlane.xlu0 %1368
      %1370 = vmin.xlane.f32.xlu0 %v1345
      %v1371 = vpop.xlane.xlu0 %1370
      %1372 = vmin.xlane.f32.xlu0 %v1346
      %v1373 = vpop.xlane.xlu0 %1372
      %1374 = vmin.xlane.f32.xlu0 %v1347
      %v1375 = vpop.xlane.xlu0 %1374
      %1376 = vmin.xlane.f32.xlu0 %v1348
      %v1377 = vpop.xlane.xlu0 %1376
      %1378 = vmin.xlane.f32.xlu0 %v1349
      %v1379 = vpop.xlane.xlu0 %1378
      %1380 = vmin.xlane.f32.xlu0 %v1350
      %v1381 = vpop.xlane.xlu0 %1380
      %1382 = vmin.xlane.f32.xlu0 %v1351
      %v1383 = vpop.xlane.xlu0 %1382
      %v1384 = vmax.f32 %v1353, 1e-12
      %v1385 = vmax.f32 %v1355, 1e-12
      %v1386 = vmax.f32 %v1357, 1e-12
      %v1387 = vmax.f32 %v1359, 1e-12
      %v1388 = vmax.f32 %v1361, 1e-12
      %v1389 = vmax.f32 %v1363, 1e-12
      %v1390 = vmax.f32 %v1365, 1e-12
      %v1391 = vmax.f32 %v1367, 1e-12
      %v1392 = vmax.f32 %v1369, 1e-12
      %v1393 = vmax.f32 %v1371, 1e-12
      %v1394 = vmax.f32 %v1373, 1e-12
      %v1395 = vmax.f32 %v1375, 1e-12
      %v1396 = vmax.f32 %v1377, 1e-12
      %v1397 = vmax.f32 %v1379, 1e-12
      %v1398 = vmax.f32 %v1381, 1e-12
      %v1399 = vmax.f32 %v1383, 1e-12
      %v1400 = vrsqrt.pop %v1384
      %v1401 = vmul.f32 %v1400, %v1384
      %v1402 = vmul.f32 %v1401, %v1400
      %v1403 = vmul.f32 0.5, %v1402
      %v1404 = vsub.f32 1.5, %v1403
      %v1405 = vmul.f32 %v1400, %v1404
      %v1406 = vmul.f32 %v1384, %v1405
      %vm1407 = vcmp.eq.f32.partialorder %v1384, inf
      %v1408 = vsel %vm1407, %v1384, %v1406
      %vm1409 = vcmp.eq.f32.partialorder %v1384, 0.0
      %v1410 = vand.u32 %v1384, 2147483648
      %v1411 = vsel %vm1409, %v1410, %v1408
      %v1412 = vrsqrt.pop %v1385
      %v1413 = vmul.f32 %v1412, %v1385
      %v1414 = vmul.f32 %v1413, %v1412
      %v1415 = vmul.f32 0.5, %v1414
      %v1416 = vsub.f32 1.5, %v1415
      %v1417 = vmul.f32 %v1412, %v1416
      %v1418 = vmul.f32 %v1385, %v1417
      %vm1419 = vcmp.eq.f32.partialorder %v1385, inf
      %v1420 = vsel %vm1419, %v1385, %v1418
      %vm1421 = vcmp.eq.f32.partialorder %v1385, 0.0
      %v1422 = vand.u32 %v1385, 2147483648
      %v1423 = vsel %vm1421, %v1422, %v1420
      %v1424 = vrsqrt.pop %v1386
      %v1425 = vmul.f32 %v1424, %v1386
      %v1426 = vmul.f32 %v1425, %v1424
      %v1427 = vmul.f32 0.5, %v1426
      %v1428 = vsub.f32 1.5, %v1427
      %v1429 = vmul.f32 %v1424, %v1428
      %v1430 = vmul.f32 %v1386, %v1429
      %vm1431 = vcmp.eq.f32.partialorder %v1386, inf
      %v1432 = vsel %vm1431, %v1386, %v1430
      %vm1433 = vcmp.eq.f32.partialorder %v1386, 0.0
      %v1434 = vand.u32 %v1386, 2147483648
      %v1435 = vsel %vm1433, %v1434, %v1432
      %v1436 = vrsqrt.pop %v1387
      %v1437 = vmul.f32 %v1436, %v1387
      %v1438 = vmul.f32 %v1437, %v1436
      %v1439 = vmul.f32 0.5, %v1438
      %v1440 = vsub.f32 1.5, %v1439
      %v1441 = vmul.f32 %v1436, %v1440
      %v1442 = vmul.f32 %v1387, %v1441
      %vm1443 = vcmp.eq.f32.partialorder %v1387, inf
      %v1444 = vsel %vm1443, %v1387, %v1442
      %vm1445 = vcmp.eq.f32.partialorder %v1387, 0.0
      %v1446 = vand.u32 %v1387, 2147483648
      %v1447 = vsel %vm1445, %v1446, %v1444
      %v1448 = vrsqrt.pop %v1388
      %v1449 = vmul.f32 %v1448, %v1388
      %v1450 = vmul.f32 %v1449, %v1448
      %v1451 = vmul.f32 0.5, %v1450
      %v1452 = vsub.f32 1.5, %v1451
      %v1453 = vmul.f32 %v1448, %v1452
      %v1454 = vmul.f32 %v1388, %v1453
      %vm1455 = vcmp.eq.f32.partialorder %v1388, inf
      %v1456 = vsel %vm1455, %v1388, %v1454
      %vm1457 = vcmp.eq.f32.partialorder %v1388, 0.0
      %v1458 = vand.u32 %v1388, 2147483648
      %v1459 = vsel %vm1457, %v1458, %v1456
      %v1460 = vrsqrt.pop %v1389
      %v1461 = vmul.f32 %v1460, %v1389
      %v1462 = vmul.f32 %v1461, %v1460
      %v1463 = vmul.f32 0.5, %v1462
      %v1464 = vsub.f32 1.5, %v1463
      %v1465 = vmul.f32 %v1460, %v1464
      %v1466 = vmul.f32 %v1389, %v1465
      %vm1467 = vcmp.eq.f32.partialorder %v1389, inf
      %v1468 = vsel %vm1467, %v1389, %v1466
      %vm1469 = vcmp.eq.f32.partialorder %v1389, 0.0
      %v1470 = vand.u32 %v1389, 2147483648
      %v1471 = vsel %vm1469, %v1470, %v1468
      %v1472 = vrsqrt.pop %v1390
      %v1473 = vmul.f32 %v1472, %v1390
      %v1474 = vmul.f32 %v1473, %v1472
      %v1475 = vmul.f32 0.5, %v1474
      %v1476 = vsub.f32 1.5, %v1475
      %v1477 = vmul.f32 %v1472, %v1476
      %v1478 = vmul.f32 %v1390, %v1477
      %vm1479 = vcmp.eq.f32.partialorder %v1390, inf
      %v1480 = vsel %vm1479, %v1390, %v1478
      %vm1481 = vcmp.eq.f32.partialorder %v1390, 0.0
      %v1482 = vand.u32 %v1390, 2147483648
      %v1483 = vsel %vm1481, %v1482, %v1480
      %v1484 = vrsqrt.pop %v1391
      %v1485 = vmul.f32 %v1484, %v1391
      %v1486 = vmul.f32 %v1485, %v1484
      %v1487 = vmul.f32 0.5, %v1486
      %v1488 = vsub.f32 1.5, %v1487
      %v1489 = vmul.f32 %v1484, %v1488
      %v1490 = vmul.f32 %v1391, %v1489
      %vm1491 = vcmp.eq.f32.partialorder %v1391, inf
      %v1492 = vsel %vm1491, %v1391, %v1490
      %vm1493 = vcmp.eq.f32.partialorder %v1391, 0.0
      %v1494 = vand.u32 %v1391, 2147483648
      %v1495 = vsel %vm1493, %v1494, %v1492
      %v1496 = vrsqrt.pop %v1392
      %v1497 = vmul.f32 %v1496, %v1392
      %v1498 = vmul.f32 %v1497, %v1496
      %v1499 = vmul.f32 0.5, %v1498
      %v1500 = vsub.f32 1.5, %v1499
      %v1501 = vmul.f32 %v1496, %v1500
      %v1502 = vmul.f32 %v1392, %v1501
      %vm1503 = vcmp.eq.f32.partialorder %v1392, inf
      %v1504 = vsel %vm1503, %v1392, %v1502
      %vm1505 = vcmp.eq.f32.partialorder %v1392, 0.0
      %v1506 = vand.u32 %v1392, 2147483648
      %v1507 = vsel %vm1505, %v1506, %v1504
      %v1508 = vrsqrt.pop %v1393
      %v1509 = vmul.f32 %v1508, %v1393
      %v1510 = vmul.f32 %v1509, %v1508
      %v1511 = vmul.f32 0.5, %v1510
      %v1512 = vsub.f32 1.5, %v1511
      %v1513 = vmul.f32 %v1508, %v1512
      %v1514 = vmul.f32 %v1393, %v1513
      %vm1515 = vcmp.eq.f32.partialorder %v1393, inf
      %v1516 = vsel %vm1515, %v1393, %v1514
      %vm1517 = vcmp.eq.f32.partialorder %v1393, 0.0
      %v1518 = vand.u32 %v1393, 2147483648
      %v1519 = vsel %vm1517, %v1518, %v1516
      %v1520 = vrsqrt.pop %v1394
      %v1521 = vmul.f32 %v1520, %v1394
      %v1522 = vmul.f32 %v1521, %v1520
      %v1523 = vmul.f32 0.5, %v1522
      %v1524 = vsub.f32 1.5, %v1523
      %v1525 = vmul.f32 %v1520, %v1524
      %v1526 = vmul.f32 %v1394, %v1525
      %vm1527 = vcmp.eq.f32.partialorder %v1394, inf
      %v1528 = vsel %vm1527, %v1394, %v1526
      %vm1529 = vcmp.eq.f32.partialorder %v1394, 0.0
      %v1530 = vand.u32 %v1394, 2147483648
      %v1531 = vsel %vm1529, %v1530, %v1528
      %v1532 = vrsqrt.pop %v1395
      %v1533 = vmul.f32 %v1532, %v1395
      %v1534 = vmul.f32 %v1533, %v1532
      %v1535 = vmul.f32 0.5, %v1534
      %v1536 = vsub.f32 1.5, %v1535
      %v1537 = vmul.f32 %v1532, %v1536
      %v1538 = vmul.f32 %v1395, %v1537
      %vm1539 = vcmp.eq.f32.partialorder %v1395, inf
      %v1540 = vsel %vm1539, %v1395, %v1538
      %vm1541 = vcmp.eq.f32.partialorder %v1395, 0.0
      %v1542 = vand.u32 %v1395, 2147483648
      %v1543 = vsel %vm1541, %v1542, %v1540
      %v1544 = vrsqrt.pop %v1396
      %v1545 = vmul.f32 %v1544, %v1396
      %v1546 = vmul.f32 %v1545, %v1544
      %v1547 = vmul.f32 0.5, %v1546
      %v1548 = vsub.f32 1.5, %v1547
      %v1549 = vmul.f32 %v1544, %v1548
      %v1550 = vmul.f32 %v1396, %v1549
      %vm1551 = vcmp.eq.f32.partialorder %v1396, inf
      %v1552 = vsel %vm1551, %v1396, %v1550
      %vm1553 = vcmp.eq.f32.partialorder %v1396, 0.0
      %v1554 = vand.u32 %v1396, 2147483648
      %v1555 = vsel %vm1553, %v1554, %v1552
      %v1556 = vrsqrt.pop %v1397
      %v1557 = vmul.f32 %v1556, %v1397
      %v1558 = vmul.f32 %v1557, %v1556
      %v1559 = vmul.f32 0.5, %v1558
      %v1560 = vsub.f32 1.5, %v1559
      %v1561 = vmul.f32 %v1556, %v1560
      %v1562 = vmul.f32 %v1397, %v1561
      %vm1563 = vcmp.eq.f32.partialorder %v1397, inf
      %v1564 = vsel %vm1563, %v1397, %v1562
      %vm1565 = vcmp.eq.f32.partialorder %v1397, 0.0
      %v1566 = vand.u32 %v1397, 2147483648
      %v1567 = vsel %vm1565, %v1566, %v1564
      %v1568 = vrsqrt.pop %v1398
      %v1569 = vmul.f32 %v1568, %v1398
      %v1570 = vmul.f32 %v1569, %v1568
      %v1571 = vmul.f32 0.5, %v1570
      %v1572 = vsub.f32 1.5, %v1571
      %v1573 = vmul.f32 %v1568, %v1572
      %v1574 = vmul.f32 %v1398, %v1573
      %vm1575 = vcmp.eq.f32.partialorder %v1398, inf
      %v1576 = vsel %vm1575, %v1398, %v1574
      %vm1577 = vcmp.eq.f32.partialorder %v1398, 0.0
      %v1578 = vand.u32 %v1398, 2147483648
      %v1579 = vsel %vm1577, %v1578, %v1576
      %v1580 = vrsqrt.pop %v1399
      %v1581 = vmul.f32 %v1580, %v1399
      %v1582 = vmul.f32 %v1581, %v1580
      %v1583 = vmul.f32 0.5, %v1582
      %v1584 = vsub.f32 1.5, %v1583
      %v1585 = vmul.f32 %v1580, %v1584
      %v1586 = vmul.f32 %v1399, %v1585
      %vm1587 = vcmp.eq.f32.partialorder %v1399, inf
      %v1588 = vsel %vm1587, %v1399, %v1586
      %vm1589 = vcmp.eq.f32.partialorder %v1399, 0.0
      %v1590 = vand.u32 %v1399, 2147483648
      %v1591 = vsel %vm1589, %v1590, %v1588
      %v1592 = vsub.f32 0.0, %v1384
      %v1593 = vsub.f32 0.0, %v1385
      %v1594 = vsub.f32 0.0, %v1386
      %v1595 = vsub.f32 0.0, %v1387
      %v1596 = vsub.f32 0.0, %v1388
      %v1597 = vsub.f32 0.0, %v1389
      %v1598 = vsub.f32 0.0, %v1390
      %v1599 = vsub.f32 0.0, %v1391
      %v1600 = vsub.f32 0.0, %v1392
      %v1601 = vsub.f32 0.0, %v1393
      %v1602 = vsub.f32 0.0, %v1394
      %v1603 = vsub.f32 0.0, %v1395
      %v1604 = vsub.f32 0.0, %v1396
      %v1605 = vsub.f32 0.0, %v1397
      %v1606 = vsub.f32 0.0, %v1398
      %v1607 = vsub.f32 0.0, %v1399
      %v1608 = vmul.f32 %v1592, %v786
      %v1609 = vmul.f32 %v1593, %v786
      %v1610 = vmul.f32 %v1594, %v786
      %v1611 = vmul.f32 %v1595, %v786
      %v1612 = vmul.f32 %v1596, %v786
      %v1613 = vmul.f32 %v1597, %v786
      %v1614 = vmul.f32 %v1598, %v786
      %v1615 = vmul.f32 %v1599, %v786
      %v1616 = vmul.f32 %v1600, %v786
      %v1617 = vmul.f32 %v1601, %v786
      %v1618 = vmul.f32 %v1602, %v786
      %v1619 = vmul.f32 %v1603, %v786
      %v1620 = vmul.f32 %v1604, %v786
      %v1621 = vmul.f32 %v1605, %v786
      %v1622 = vmul.f32 %v1606, %v786
      %v1623 = vmul.f32 %v1607, %v786
      %v1624 = vmul.f32 %v1608, 1.442695
      %v1625 = vpow.pop %v1624
      %v1626 = vmul.f32 %v1609, 1.442695
      %v1627 = vpow.pop %v1626
      %v1628 = vmul.f32 %v1610, 1.442695
      %v1629 = vpow.pop %v1628
      %v1630 = vmul.f32 %v1611, 1.442695
      %v1631 = vpow.pop %v1630
      %v1632 = vmul.f32 %v1612, 1.442695
      %v1633 = vpow.pop %v1632
      %v1634 = vmul.f32 %v1613, 1.442695
      %v1635 = vpow.pop %v1634
      %v1636 = vmul.f32 %v1614, 1.442695
      %v1637 = vpow.pop %v1636
      %v1638 = vmul.f32 %v1615, 1.442695
      %v1639 = vpow.pop %v1638
      %v1640 = vmul.f32 %v1616, 1.442695
      %v1641 = vpow.pop %v1640
      %v1642 = vmul.f32 %v1617, 1.442695
      %v1643 = vpow.pop %v1642
      %v1644 = vmul.f32 %v1618, 1.442695
      %v1645 = vpow.pop %v1644
      %v1646 = vmul.f32 %v1619, 1.442695
      %v1647 = vpow.pop %v1646
      %v1648 = vmul.f32 %v1620, 1.442695
      %v1649 = vpow.pop %v1648
      %v1650 = vmul.f32 %v1621, 1.442695
      %v1651 = vpow.pop %v1650
      %v1652 = vmul.f32 %v1622, 1.442695
      %v1653 = vpow.pop %v1652
      %v1654 = vmul.f32 %v1623, 1.442695
      %v1655 = vpow.pop %v1654
      %v1656 = vsub.f32 0.07, %v1411
      %v1657 = vsub.f32 0.07, %v1423
      %v1658 = vsub.f32 0.07, %v1435
      %v1659 = vsub.f32 0.07, %v1447
      %v1660 = vsub.f32 0.07, %v1459
      %v1661 = vsub.f32 0.07, %v1471
      %v1662 = vsub.f32 0.07, %v1483
      %v1663 = vsub.f32 0.07, %v1495
      %v1664 = vsub.f32 0.07, %v1507
      %v1665 = vsub.f32 0.07, %v1519
      %v1666 = vsub.f32 0.07, %v1531
      %v1667 = vsub.f32 0.07, %v1543
      %v1668 = vsub.f32 0.07, %v1555
      %v1669 = vsub.f32 0.07, %v1567
      %v1670 = vsub.f32 0.07, %v1579
      %v1671 = vsub.f32 0.07, %v1591
      %v1672 = vmul.f32 %v1656, %v1625
      %v1673 = vmul.f32 %v1657, %v1627
      %v1674 = vmul.f32 %v1658, %v1629
      %v1675 = vmul.f32 %v1659, %v1631
      %v1676 = vmul.f32 %v1660, %v1633
      %v1677 = vmul.f32 %v1661, %v1635
      %v1678 = vmul.f32 %v1662, %v1637
      %v1679 = vmul.f32 %v1663, %v1639
      %v1680 = vmul.f32 %v1664, %v1641
      %v1681 = vmul.f32 %v1665, %v1643
      %v1682 = vmul.f32 %v1666, %v1645
      %v1683 = vmul.f32 %v1667, %v1647
      %v1684 = vmul.f32 %v1668, %v1649
      %v1685 = vmul.f32 %v1669, %v1651
      %v1686 = vmul.f32 %v1670, %v1653
      %v1687 = vmul.f32 %v1671, %v1655
      %v1688 = vsel %vm867, %v1672, 0.0
      %v1689 = vsel %vm867, %v1673, 0.0
      %v1690 = vadd.f32 %v1688, %v1689
      %v1691 = vsel %vm867, %v1674, 0.0
      %v1692 = vadd.f32 %v1690, %v1691
      %v1693 = vsel %vm867, %v1675, 0.0
      %v1694 = vadd.f32 %v1692, %v1693
      %v1695 = vsel %vm867, %v1676, 0.0
      %v1696 = vadd.f32 %v1694, %v1695
      %v1697 = vsel %vm867, %v1677, 0.0
      %v1698 = vadd.f32 %v1696, %v1697
      %v1699 = vsel %vm867, %v1678, 0.0
      %v1700 = vadd.f32 %v1698, %v1699
      %v1701 = vsel %vm867, %v1679, 0.0
      %v1702 = vadd.f32 %v1700, %v1701
      %v1703 = vsel %vm867, %v1680, 0.0
      %v1704 = vadd.f32 %v1702, %v1703
      %v1705 = vsel %vm867, %v1681, 0.0
      %v1706 = vadd.f32 %v1704, %v1705
      %v1707 = vsel %vm867, %v1682, 0.0
      %v1708 = vadd.f32 %v1706, %v1707
      %v1709 = vsel %vm867, %v1683, 0.0
      %v1710 = vadd.f32 %v1708, %v1709
      %v1711 = vsel %vm867, %v1684, 0.0
      %v1712 = vadd.f32 %v1710, %v1711
      %v1713 = vsel %vm867, %v1685, 0.0
      %v1714 = vadd.f32 %v1712, %v1713
      %v1715 = vsel %vm867, %v1686, 0.0
      %v1716 = vadd.f32 %v1714, %v1715
      %v1717 = vsel %vm867, %v1687, 0.0
      %v1718 = vadd.f32 %v1716, %v1717
      %1719 = vadd.xlane.f32.xlu0 %v1718
      %v1720 = vpop.xlane.xlu0 %1719
      %v1721 = vrot.slane %v1720, 4
      %v1722 = vadd.f32 %v1720, %v1721
      %v1723 = vrot.slane %v1722, 2
      %v1724 = vadd.f32 %v1722, %v1723
      %v1725 = vrot.slane %v1724, 1
      %v1726 = vadd.f32 %v1724, %v1725
      %s1727 = vtos %v1726
      %v1728 = vstv %s1727
      %v1729 = vadd.f32 %v1319, %v1728
      %vm1730 = vcmp.eq.f32.partialorder %v1336, %v1353
      %vm1731 = vcmp.eq.f32.partialorder %v1337, %v1355
      %vm1732 = vcmp.eq.f32.partialorder %v1338, %v1357
      %vm1733 = vcmp.eq.f32.partialorder %v1339, %v1359
      %vm1734 = vcmp.eq.f32.partialorder %v1340, %v1361
      %vm1735 = vcmp.eq.f32.partialorder %v1341, %v1363
      %vm1736 = vcmp.eq.f32.partialorder %v1342, %v1365
      %vm1737 = vcmp.eq.f32.partialorder %v1343, %v1367
      %vm1738 = vcmp.eq.f32.partialorder %v1344, %v1369
      %vm1739 = vcmp.eq.f32.partialorder %v1345, %v1371
      %vm1740 = vcmp.eq.f32.partialorder %v1346, %v1373
      %vm1741 = vcmp.eq.f32.partialorder %v1347, %v1375
      %vm1742 = vcmp.eq.f32.partialorder %v1348, %v1377
      %vm1743 = vcmp.eq.f32.partialorder %v1349, %v1379
      %vm1744 = vcmp.eq.f32.partialorder %v1350, %v1381
      %vm1745 = vcmp.eq.f32.partialorder %v1351, %v1383
      %v1746 = vsel %vm1730, inf, %v1336
      %v1747 = vsel %vm1731, inf, %v1337
      %v1748 = vsel %vm1732, inf, %v1338
      %v1749 = vsel %vm1733, inf, %v1339
      %v1750 = vsel %vm1734, inf, %v1340
      %v1751 = vsel %vm1735, inf, %v1341
      %v1752 = vsel %vm1736, inf, %v1342
      %v1753 = vsel %vm1737, inf, %v1343
      %v1754 = vsel %vm1738, inf, %v1344
      %v1755 = vsel %vm1739, inf, %v1345
      %v1756 = vsel %vm1740, inf, %v1346
      %v1757 = vsel %vm1741, inf, %v1347
      %v1758 = vsel %vm1742, inf, %v1348
      %v1759 = vsel %vm1743, inf, %v1349
      %v1760 = vsel %vm1744, inf, %v1350
      %v1761 = vsel %vm1745, inf, %v1351
      %1762 = vmin.xlane.f32.xlu0 %v1746
      %v1763 = vpop.xlane.xlu0 %1762
      %1764 = vmin.xlane.f32.xlu0 %v1747
      %v1765 = vpop.xlane.xlu0 %1764
      %1766 = vmin.xlane.f32.xlu0 %v1748
      %v1767 = vpop.xlane.xlu0 %1766
      %1768 = vmin.xlane.f32.xlu0 %v1749
      %v1769 = vpop.xlane.xlu0 %1768
      %1770 = vmin.xlane.f32.xlu0 %v1750
      %v1771 = vpop.xlane.xlu0 %1770
      %1772 = vmin.xlane.f32.xlu0 %v1751
      %v1773 = vpop.xlane.xlu0 %1772
      %1774 = vmin.xlane.f32.xlu0 %v1752
      %v1775 = vpop.xlane.xlu0 %1774
      %1776 = vmin.xlane.f32.xlu0 %v1753
      %v1777 = vpop.xlane.xlu0 %1776
      %1778 = vmin.xlane.f32.xlu0 %v1754
      %v1779 = vpop.xlane.xlu0 %1778
      %1780 = vmin.xlane.f32.xlu0 %v1755
      %v1781 = vpop.xlane.xlu0 %1780
      %1782 = vmin.xlane.f32.xlu0 %v1756
      %v1783 = vpop.xlane.xlu0 %1782
      %1784 = vmin.xlane.f32.xlu0 %v1757
      %v1785 = vpop.xlane.xlu0 %1784
      %1786 = vmin.xlane.f32.xlu0 %v1758
      %v1787 = vpop.xlane.xlu0 %1786
      %1788 = vmin.xlane.f32.xlu0 %v1759
      %v1789 = vpop.xlane.xlu0 %1788
      %1790 = vmin.xlane.f32.xlu0 %v1760
      %v1791 = vpop.xlane.xlu0 %1790
      %1792 = vmin.xlane.f32.xlu0 %v1761
      %v1793 = vpop.xlane.xlu0 %1792
      %v1794 = vmax.f32 %v1763, 1e-12
      %v1795 = vmax.f32 %v1765, 1e-12
      %v1796 = vmax.f32 %v1767, 1e-12
      %v1797 = vmax.f32 %v1769, 1e-12
      %v1798 = vmax.f32 %v1771, 1e-12
      %v1799 = vmax.f32 %v1773, 1e-12
      %v1800 = vmax.f32 %v1775, 1e-12
      %v1801 = vmax.f32 %v1777, 1e-12
      %v1802 = vmax.f32 %v1779, 1e-12
      %v1803 = vmax.f32 %v1781, 1e-12
      %v1804 = vmax.f32 %v1783, 1e-12
      %v1805 = vmax.f32 %v1785, 1e-12
      %v1806 = vmax.f32 %v1787, 1e-12
      %v1807 = vmax.f32 %v1789, 1e-12
      %v1808 = vmax.f32 %v1791, 1e-12
      %v1809 = vmax.f32 %v1793, 1e-12
      %v1810 = vrsqrt.pop %v1794
      %v1811 = vmul.f32 %v1810, %v1794
      %v1812 = vmul.f32 %v1811, %v1810
      %v1813 = vmul.f32 0.5, %v1812
      %v1814 = vsub.f32 1.5, %v1813
      %v1815 = vmul.f32 %v1810, %v1814
      %v1816 = vmul.f32 %v1794, %v1815
      %vm1817 = vcmp.eq.f32.partialorder %v1794, inf
      %v1818 = vsel %vm1817, %v1794, %v1816
      %vm1819 = vcmp.eq.f32.partialorder %v1794, 0.0
      %v1820 = vand.u32 %v1794, 2147483648
      %v1821 = vsel %vm1819, %v1820, %v1818
      %v1822 = vrsqrt.pop %v1795
      %v1823 = vmul.f32 %v1822, %v1795
      %v1824 = vmul.f32 %v1823, %v1822
      %v1825 = vmul.f32 0.5, %v1824
      %v1826 = vsub.f32 1.5, %v1825
      %v1827 = vmul.f32 %v1822, %v1826
      %v1828 = vmul.f32 %v1795, %v1827
      %vm1829 = vcmp.eq.f32.partialorder %v1795, inf
      %v1830 = vsel %vm1829, %v1795, %v1828
      %vm1831 = vcmp.eq.f32.partialorder %v1795, 0.0
      %v1832 = vand.u32 %v1795, 2147483648
      %v1833 = vsel %vm1831, %v1832, %v1830
      %v1834 = vrsqrt.pop %v1796
      %v1835 = vmul.f32 %v1834, %v1796
      %v1836 = vmul.f32 %v1835, %v1834
      %v1837 = vmul.f32 0.5, %v1836
      %v1838 = vsub.f32 1.5, %v1837
      %v1839 = vmul.f32 %v1834, %v1838
      %v1840 = vmul.f32 %v1796, %v1839
      %vm1841 = vcmp.eq.f32.partialorder %v1796, inf
      %v1842 = vsel %vm1841, %v1796, %v1840
      %vm1843 = vcmp.eq.f32.partialorder %v1796, 0.0
      %v1844 = vand.u32 %v1796, 2147483648
      %v1845 = vsel %vm1843, %v1844, %v1842
      %v1846 = vrsqrt.pop %v1797
      %v1847 = vmul.f32 %v1846, %v1797
      %v1848 = vmul.f32 %v1847, %v1846
      %v1849 = vmul.f32 0.5, %v1848
      %v1850 = vsub.f32 1.5, %v1849
      %v1851 = vmul.f32 %v1846, %v1850
      %v1852 = vmul.f32 %v1797, %v1851
      %vm1853 = vcmp.eq.f32.partialorder %v1797, inf
      %v1854 = vsel %vm1853, %v1797, %v1852
      %vm1855 = vcmp.eq.f32.partialorder %v1797, 0.0
      %v1856 = vand.u32 %v1797, 2147483648
      %v1857 = vsel %vm1855, %v1856, %v1854
      %v1858 = vrsqrt.pop %v1798
      %v1859 = vmul.f32 %v1858, %v1798
      %v1860 = vmul.f32 %v1859, %v1858
      %v1861 = vmul.f32 0.5, %v1860
      %v1862 = vsub.f32 1.5, %v1861
      %v1863 = vmul.f32 %v1858, %v1862
      %v1864 = vmul.f32 %v1798, %v1863
      %vm1865 = vcmp.eq.f32.partialorder %v1798, inf
      %v1866 = vsel %vm1865, %v1798, %v1864
      %vm1867 = vcmp.eq.f32.partialorder %v1798, 0.0
      %v1868 = vand.u32 %v1798, 2147483648
      %v1869 = vsel %vm1867, %v1868, %v1866
      %v1870 = vrsqrt.pop %v1799
      %v1871 = vmul.f32 %v1870, %v1799
      %v1872 = vmul.f32 %v1871, %v1870
      %v1873 = vmul.f32 0.5, %v1872
      %v1874 = vsub.f32 1.5, %v1873
      %v1875 = vmul.f32 %v1870, %v1874
      %v1876 = vmul.f32 %v1799, %v1875
      %vm1877 = vcmp.eq.f32.partialorder %v1799, inf
      %v1878 = vsel %vm1877, %v1799, %v1876
      %vm1879 = vcmp.eq.f32.partialorder %v1799, 0.0
      %v1880 = vand.u32 %v1799, 2147483648
      %v1881 = vsel %vm1879, %v1880, %v1878
      %v1882 = vrsqrt.pop %v1800
      %v1883 = vmul.f32 %v1882, %v1800
      %v1884 = vmul.f32 %v1883, %v1882
      %v1885 = vmul.f32 0.5, %v1884
      %v1886 = vsub.f32 1.5, %v1885
      %v1887 = vmul.f32 %v1882, %v1886
      %v1888 = vmul.f32 %v1800, %v1887
      %vm1889 = vcmp.eq.f32.partialorder %v1800, inf
      %v1890 = vsel %vm1889, %v1800, %v1888
      %vm1891 = vcmp.eq.f32.partialorder %v1800, 0.0
      %v1892 = vand.u32 %v1800, 2147483648
      %v1893 = vsel %vm1891, %v1892, %v1890
      %v1894 = vrsqrt.pop %v1801
      %v1895 = vmul.f32 %v1894, %v1801
      %v1896 = vmul.f32 %v1895, %v1894
      %v1897 = vmul.f32 0.5, %v1896
      %v1898 = vsub.f32 1.5, %v1897
      %v1899 = vmul.f32 %v1894, %v1898
      %v1900 = vmul.f32 %v1801, %v1899
      %vm1901 = vcmp.eq.f32.partialorder %v1801, inf
      %v1902 = vsel %vm1901, %v1801, %v1900
      %vm1903 = vcmp.eq.f32.partialorder %v1801, 0.0
      %v1904 = vand.u32 %v1801, 2147483648
      %v1905 = vsel %vm1903, %v1904, %v1902
      %v1906 = vrsqrt.pop %v1802
      %v1907 = vmul.f32 %v1906, %v1802
      %v1908 = vmul.f32 %v1907, %v1906
      %v1909 = vmul.f32 0.5, %v1908
      %v1910 = vsub.f32 1.5, %v1909
      %v1911 = vmul.f32 %v1906, %v1910
      %v1912 = vmul.f32 %v1802, %v1911
      %vm1913 = vcmp.eq.f32.partialorder %v1802, inf
      %v1914 = vsel %vm1913, %v1802, %v1912
      %vm1915 = vcmp.eq.f32.partialorder %v1802, 0.0
      %v1916 = vand.u32 %v1802, 2147483648
      %v1917 = vsel %vm1915, %v1916, %v1914
      %v1918 = vrsqrt.pop %v1803
      %v1919 = vmul.f32 %v1918, %v1803
      %v1920 = vmul.f32 %v1919, %v1918
      %v1921 = vmul.f32 0.5, %v1920
      %v1922 = vsub.f32 1.5, %v1921
      %v1923 = vmul.f32 %v1918, %v1922
      %v1924 = vmul.f32 %v1803, %v1923
      %vm1925 = vcmp.eq.f32.partialorder %v1803, inf
      %v1926 = vsel %vm1925, %v1803, %v1924
      %vm1927 = vcmp.eq.f32.partialorder %v1803, 0.0
      %v1928 = vand.u32 %v1803, 2147483648
      %v1929 = vsel %vm1927, %v1928, %v1926
      %v1930 = vrsqrt.pop %v1804
      %v1931 = vmul.f32 %v1930, %v1804
      %v1932 = vmul.f32 %v1931, %v1930
      %v1933 = vmul.f32 0.5, %v1932
      %v1934 = vsub.f32 1.5, %v1933
      %v1935 = vmul.f32 %v1930, %v1934
      %v1936 = vmul.f32 %v1804, %v1935
      %vm1937 = vcmp.eq.f32.partialorder %v1804, inf
      %v1938 = vsel %vm1937, %v1804, %v1936
      %vm1939 = vcmp.eq.f32.partialorder %v1804, 0.0
      %v1940 = vand.u32 %v1804, 2147483648
      %v1941 = vsel %vm1939, %v1940, %v1938
      %v1942 = vrsqrt.pop %v1805
      %v1943 = vmul.f32 %v1942, %v1805
      %v1944 = vmul.f32 %v1943, %v1942
      %v1945 = vmul.f32 0.5, %v1944
      %v1946 = vsub.f32 1.5, %v1945
      %v1947 = vmul.f32 %v1942, %v1946
      %v1948 = vmul.f32 %v1805, %v1947
      %vm1949 = vcmp.eq.f32.partialorder %v1805, inf
      %v1950 = vsel %vm1949, %v1805, %v1948
      %vm1951 = vcmp.eq.f32.partialorder %v1805, 0.0
      %v1952 = vand.u32 %v1805, 2147483648
      %v1953 = vsel %vm1951, %v1952, %v1950
      %v1954 = vrsqrt.pop %v1806
      %v1955 = vmul.f32 %v1954, %v1806
      %v1956 = vmul.f32 %v1955, %v1954
      %v1957 = vmul.f32 0.5, %v1956
      %v1958 = vsub.f32 1.5, %v1957
      %v1959 = vmul.f32 %v1954, %v1958
      %v1960 = vmul.f32 %v1806, %v1959
      %vm1961 = vcmp.eq.f32.partialorder %v1806, inf
      %v1962 = vsel %vm1961, %v1806, %v1960
      %vm1963 = vcmp.eq.f32.partialorder %v1806, 0.0
      %v1964 = vand.u32 %v1806, 2147483648
      %v1965 = vsel %vm1963, %v1964, %v1962
      %v1966 = vrsqrt.pop %v1807
      %v1967 = vmul.f32 %v1966, %v1807
      %v1968 = vmul.f32 %v1967, %v1966
      %v1969 = vmul.f32 0.5, %v1968
      %v1970 = vsub.f32 1.5, %v1969
      %v1971 = vmul.f32 %v1966, %v1970
      %v1972 = vmul.f32 %v1807, %v1971
      %vm1973 = vcmp.eq.f32.partialorder %v1807, inf
      %v1974 = vsel %vm1973, %v1807, %v1972
      %vm1975 = vcmp.eq.f32.partialorder %v1807, 0.0
      %v1976 = vand.u32 %v1807, 2147483648
      %v1977 = vsel %vm1975, %v1976, %v1974
      %v1978 = vrsqrt.pop %v1808
      %v1979 = vmul.f32 %v1978, %v1808
      %v1980 = vmul.f32 %v1979, %v1978
      %v1981 = vmul.f32 0.5, %v1980
      %v1982 = vsub.f32 1.5, %v1981
      %v1983 = vmul.f32 %v1978, %v1982
      %v1984 = vmul.f32 %v1808, %v1983
      %vm1985 = vcmp.eq.f32.partialorder %v1808, inf
      %v1986 = vsel %vm1985, %v1808, %v1984
      %vm1987 = vcmp.eq.f32.partialorder %v1808, 0.0
      %v1988 = vand.u32 %v1808, 2147483648
      %v1989 = vsel %vm1987, %v1988, %v1986
      %v1990 = vrsqrt.pop %v1809
      %v1991 = vmul.f32 %v1990, %v1809
      %v1992 = vmul.f32 %v1991, %v1990
      %v1993 = vmul.f32 0.5, %v1992
      %v1994 = vsub.f32 1.5, %v1993
      %v1995 = vmul.f32 %v1990, %v1994
      %v1996 = vmul.f32 %v1809, %v1995
      %vm1997 = vcmp.eq.f32.partialorder %v1809, inf
      %v1998 = vsel %vm1997, %v1809, %v1996
      %vm1999 = vcmp.eq.f32.partialorder %v1809, 0.0
      %v2000 = vand.u32 %v1809, 2147483648
      %v2001 = vsel %vm1999, %v2000, %v1998
      %v2002 = vsub.f32 0.0, %v1794
      %v2003 = vsub.f32 0.0, %v1795
      %v2004 = vsub.f32 0.0, %v1796
      %v2005 = vsub.f32 0.0, %v1797
      %v2006 = vsub.f32 0.0, %v1798
      %v2007 = vsub.f32 0.0, %v1799
      %v2008 = vsub.f32 0.0, %v1800
      %v2009 = vsub.f32 0.0, %v1801
      %v2010 = vsub.f32 0.0, %v1802
      %v2011 = vsub.f32 0.0, %v1803
      %v2012 = vsub.f32 0.0, %v1804
      %v2013 = vsub.f32 0.0, %v1805
      %v2014 = vsub.f32 0.0, %v1806
      %v2015 = vsub.f32 0.0, %v1807
      %v2016 = vsub.f32 0.0, %v1808
      %v2017 = vsub.f32 0.0, %v1809
      %v2018 = vmul.f32 %v2002, %v786
      %v2019 = vmul.f32 %v2003, %v786
      %v2020 = vmul.f32 %v2004, %v786
      %v2021 = vmul.f32 %v2005, %v786
      %v2022 = vmul.f32 %v2006, %v786
      %v2023 = vmul.f32 %v2007, %v786
      %v2024 = vmul.f32 %v2008, %v786
      %v2025 = vmul.f32 %v2009, %v786
      %v2026 = vmul.f32 %v2010, %v786
      %v2027 = vmul.f32 %v2011, %v786
      %v2028 = vmul.f32 %v2012, %v786
      %v2029 = vmul.f32 %v2013, %v786
      %v2030 = vmul.f32 %v2014, %v786
      %v2031 = vmul.f32 %v2015, %v786
      %v2032 = vmul.f32 %v2016, %v786
      %v2033 = vmul.f32 %v2017, %v786
      %v2034 = vmul.f32 %v2018, 1.442695
      %v2035 = vpow.pop %v2034
      %v2036 = vmul.f32 %v2019, 1.442695
      %v2037 = vpow.pop %v2036
      %v2038 = vmul.f32 %v2020, 1.442695
      %v2039 = vpow.pop %v2038
      %v2040 = vmul.f32 %v2021, 1.442695
      %v2041 = vpow.pop %v2040
      %v2042 = vmul.f32 %v2022, 1.442695
      %v2043 = vpow.pop %v2042
      %v2044 = vmul.f32 %v2023, 1.442695
      %v2045 = vpow.pop %v2044
      %v2046 = vmul.f32 %v2024, 1.442695
      %v2047 = vpow.pop %v2046
      %v2048 = vmul.f32 %v2025, 1.442695
      %v2049 = vpow.pop %v2048
      %v2050 = vmul.f32 %v2026, 1.442695
      %v2051 = vpow.pop %v2050
      %v2052 = vmul.f32 %v2027, 1.442695
      %v2053 = vpow.pop %v2052
      %v2054 = vmul.f32 %v2028, 1.442695
      %v2055 = vpow.pop %v2054
      %v2056 = vmul.f32 %v2029, 1.442695
      %v2057 = vpow.pop %v2056
      %v2058 = vmul.f32 %v2030, 1.442695
      %v2059 = vpow.pop %v2058
      %v2060 = vmul.f32 %v2031, 1.442695
      %v2061 = vpow.pop %v2060
      %v2062 = vmul.f32 %v2032, 1.442695
      %v2063 = vpow.pop %v2062
      %v2064 = vmul.f32 %v2033, 1.442695
      %v2065 = vpow.pop %v2064
      %v2066 = vsub.f32 0.07, %v1821
      %v2067 = vsub.f32 0.07, %v1833
      %v2068 = vsub.f32 0.07, %v1845
      %v2069 = vsub.f32 0.07, %v1857
      %v2070 = vsub.f32 0.07, %v1869
      %v2071 = vsub.f32 0.07, %v1881
      %v2072 = vsub.f32 0.07, %v1893
      %v2073 = vsub.f32 0.07, %v1905
      %v2074 = vsub.f32 0.07, %v1917
      %v2075 = vsub.f32 0.07, %v1929
      %v2076 = vsub.f32 0.07, %v1941
      %v2077 = vsub.f32 0.07, %v1953
      %v2078 = vsub.f32 0.07, %v1965
      %v2079 = vsub.f32 0.07, %v1977
      %v2080 = vsub.f32 0.07, %v1989
      %v2081 = vsub.f32 0.07, %v2001
      %v2082 = vmul.f32 %v2066, %v2035
      %v2083 = vmul.f32 %v2067, %v2037
      %v2084 = vmul.f32 %v2068, %v2039
      %v2085 = vmul.f32 %v2069, %v2041
      %v2086 = vmul.f32 %v2070, %v2043
      %v2087 = vmul.f32 %v2071, %v2045
      %v2088 = vmul.f32 %v2072, %v2047
      %v2089 = vmul.f32 %v2073, %v2049
      %v2090 = vmul.f32 %v2074, %v2051
      %v2091 = vmul.f32 %v2075, %v2053
      %v2092 = vmul.f32 %v2076, %v2055
      %v2093 = vmul.f32 %v2077, %v2057
      %v2094 = vmul.f32 %v2078, %v2059
      %v2095 = vmul.f32 %v2079, %v2061
      %v2096 = vmul.f32 %v2080, %v2063
      %v2097 = vmul.f32 %v2081, %v2065
      %v2098 = vsel %vm867, %v2082, 0.0
      %v2099 = vsel %vm867, %v2083, 0.0
      %v2100 = vadd.f32 %v2098, %v2099
      %v2101 = vsel %vm867, %v2084, 0.0
      %v2102 = vadd.f32 %v2100, %v2101
      %v2103 = vsel %vm867, %v2085, 0.0
      %v2104 = vadd.f32 %v2102, %v2103
      %v2105 = vsel %vm867, %v2086, 0.0
      %v2106 = vadd.f32 %v2104, %v2105
      %v2107 = vsel %vm867, %v2087, 0.0
      %v2108 = vadd.f32 %v2106, %v2107
      %v2109 = vsel %vm867, %v2088, 0.0
      %v2110 = vadd.f32 %v2108, %v2109
      %v2111 = vsel %vm867, %v2089, 0.0
      %v2112 = vadd.f32 %v2110, %v2111
      %v2113 = vsel %vm867, %v2090, 0.0
      %v2114 = vadd.f32 %v2112, %v2113
      %v2115 = vsel %vm867, %v2091, 0.0
      %v2116 = vadd.f32 %v2114, %v2115
      %v2117 = vsel %vm867, %v2092, 0.0
      %v2118 = vadd.f32 %v2116, %v2117
      %v2119 = vsel %vm867, %v2093, 0.0
      %v2120 = vadd.f32 %v2118, %v2119
      %v2121 = vsel %vm867, %v2094, 0.0
      %v2122 = vadd.f32 %v2120, %v2121
      %v2123 = vsel %vm867, %v2095, 0.0
      %v2124 = vadd.f32 %v2122, %v2123
      %v2125 = vsel %vm867, %v2096, 0.0
      %v2126 = vadd.f32 %v2124, %v2125
      %v2127 = vsel %vm867, %v2097, 0.0
      %v2128 = vadd.f32 %v2126, %v2127
      %2129 = vadd.xlane.f32.xlu0 %v2128
      %v2130 = vpop.xlane.xlu0 %2129
      %v2131 = vrot.slane %v2130, 4
      %v2132 = vadd.f32 %v2130, %v2131
      %v2133 = vrot.slane %v2132, 2
      %v2134 = vadd.f32 %v2132, %v2133
      %v2135 = vrot.slane %v2134, 1
      %v2136 = vadd.f32 %v2134, %v2135
      %s2137 = vtos %v2136
      %v2138 = vstv %s2137
      %v2139 = vadd.f32 %v1729, %v2138
      %vm2140 = vcmask 0
      %2141 = vst.msk [vmem:[%s236] sm:$0x1] %vm2140, %v2139
      %v2142 = vsub.f32 0.0, %v373
      %v2143 = vsub.f32 0.0, %v374
      %v2144 = vsub.f32 0.0, %v375
      %v2145 = vsub.f32 0.0, %v376
      %v2146 = vsub.f32 0.0, %v377
      %v2147 = vsub.f32 0.0, %v378
      %v2148 = vsub.f32 0.0, %v379
      %v2149 = vsub.f32 0.0, %v380
      %v2150 = vsub.f32 0.0, %v381
      %v2151 = vsub.f32 0.0, %v382
      %v2152 = vsub.f32 0.0, %v383
      %v2153 = vsub.f32 0.0, %v384
      %v2154 = vsub.f32 0.0, %v385
      %v2155 = vsub.f32 0.0, %v386
      %v2156 = vsub.f32 0.0, %v387
      %v2157 = vsub.f32 0.0, %v388
      %2158 = vmax.xlane.f32.xlu0 %v373
      %v2159 = vpop.xlane.xlu0 %2158
      %2160 = vmax.xlane.f32.xlu0 %v374
      %v2161 = vpop.xlane.xlu0 %2160
      %2162 = vmax.xlane.f32.xlu0 %v375
      %v2163 = vpop.xlane.xlu0 %2162
      %2164 = vmax.xlane.f32.xlu0 %v376
      %v2165 = vpop.xlane.xlu0 %2164
      %2166 = vmax.xlane.f32.xlu0 %v377
      %v2167 = vpop.xlane.xlu0 %2166
      %2168 = vmax.xlane.f32.xlu0 %v378
      %v2169 = vpop.xlane.xlu0 %2168
      %2170 = vmax.xlane.f32.xlu0 %v379
      %v2171 = vpop.xlane.xlu0 %2170
      %2172 = vmax.xlane.f32.xlu0 %v380
      %v2173 = vpop.xlane.xlu0 %2172
      %2174 = vmax.xlane.f32.xlu0 %v381
      %v2175 = vpop.xlane.xlu0 %2174
      %2176 = vmax.xlane.f32.xlu0 %v382
      %v2177 = vpop.xlane.xlu0 %2176
      %2178 = vmax.xlane.f32.xlu0 %v383
      %v2179 = vpop.xlane.xlu0 %2178
      %2180 = vmax.xlane.f32.xlu0 %v384
      %v2181 = vpop.xlane.xlu0 %2180
      %2182 = vmax.xlane.f32.xlu0 %v385
      %v2183 = vpop.xlane.xlu0 %2182
      %2184 = vmax.xlane.f32.xlu0 %v386
      %v2185 = vpop.xlane.xlu0 %2184
      %2186 = vmax.xlane.f32.xlu0 %v387
      %v2187 = vpop.xlane.xlu0 %2186
      %2188 = vmax.xlane.f32.xlu0 %v388
      %v2189 = vpop.xlane.xlu0 %2188
      %v2190 = vmax.f32 %v2159, %v2167
      %v2191 = vmax.f32 %v2161, %v2169
      %v2192 = vmax.f32 %v2163, %v2171
      %v2193 = vmax.f32 %v2165, %v2173
      %v2194 = vmax.f32 %v2190, %v2175
      %v2195 = vmax.f32 %v2191, %v2177
      %v2196 = vmax.f32 %v2192, %v2179
      %v2197 = vmax.f32 %v2193, %v2181
      %v2198 = vmax.f32 %v2194, %v2183
      %v2199 = vmax.f32 %v2195, %v2185
      %v2200 = vmax.f32 %v2196, %v2187
      %v2201 = vmax.f32 %v2197, %v2189
      %v2202 = vmax.f32 %v2198, %v2199
      %v2203 = vmax.f32 %v2200, %v2201
      %v2204 = vmax.f32 %v2202, %v2203
      %v2205 = vrot.slane %v2204, 4
      %v2206 = vmax.f32 %v2204, %v2205
      %v2207 = vrot.slane %v2206, 2
      %v2208 = vmax.f32 %v2206, %v2207
      %v2209 = vrot.slane %v2208, 1
      %v2210 = vmax.f32 %v2208, %v2209
      %2211 = vmin.xlane.f32.xlu0 %v373
      %v2212 = vpop.xlane.xlu0 %2211
      %2213 = vmin.xlane.f32.xlu0 %v374
      %v2214 = vpop.xlane.xlu0 %2213
      %2215 = vmin.xlane.f32.xlu0 %v375
      %v2216 = vpop.xlane.xlu0 %2215
      %2217 = vmin.xlane.f32.xlu0 %v376
      %v2218 = vpop.xlane.xlu0 %2217
      %2219 = vmin.xlane.f32.xlu0 %v377
      %v2220 = vpop.xlane.xlu0 %2219
      %2221 = vmin.xlane.f32.xlu0 %v378
      %v2222 = vpop.xlane.xlu0 %2221
      %2223 = vmin.xlane.f32.xlu0 %v379
      %v2224 = vpop.xlane.xlu0 %2223
      %2225 = vmin.xlane.f32.xlu0 %v380
      %v2226 = vpop.xlane.xlu0 %2225
      %2227 = vmin.xlane.f32.xlu0 %v381
      %v2228 = vpop.xlane.xlu0 %2227
      %2229 = vmin.xlane.f32.xlu0 %v382
      %v2230 = vpop.xlane.xlu0 %2229
      %2231 = vmin.xlane.f32.xlu0 %v383
      %v2232 = vpop.xlane.xlu0 %2231
      %2233 = vmin.xlane.f32.xlu0 %v384
      %v2234 = vpop.xlane.xlu0 %2233
      %2235 = vmin.xlane.f32.xlu0 %v385
      %v2236 = vpop.xlane.xlu0 %2235
      %2237 = vmin.xlane.f32.xlu0 %v386
      %v2238 = vpop.xlane.xlu0 %2237
      %2239 = vmin.xlane.f32.xlu0 %v387
      %v2240 = vpop.xlane.xlu0 %2239
      %2241 = vmin.xlane.f32.xlu0 %v388
      %v2242 = vpop.xlane.xlu0 %2241
      %v2243 = vmin.f32 %v2212, %v2220
      %v2244 = vmin.f32 %v2214, %v2222
      %v2245 = vmin.f32 %v2216, %v2224
      %v2246 = vmin.f32 %v2218, %v2226
      %v2247 = vmin.f32 %v2243, %v2228
      %v2248 = vmin.f32 %v2244, %v2230
      %v2249 = vmin.f32 %v2245, %v2232
      %v2250 = vmin.f32 %v2246, %v2234
      %v2251 = vmin.f32 %v2247, %v2236
      %v2252 = vmin.f32 %v2248, %v2238
      %v2253 = vmin.f32 %v2249, %v2240
      %v2254 = vmin.f32 %v2250, %v2242
      %v2255 = vmin.f32 %v2251, %v2252
      %v2256 = vmin.f32 %v2253, %v2254
      %v2257 = vmin.f32 %v2255, %v2256
      %v2258 = vrot.slane %v2257, 4
      %v2259 = vmin.f32 %v2257, %v2258
      %v2260 = vrot.slane %v2259, 2
      %v2261 = vmin.f32 %v2259, %v2260
      %v2262 = vrot.slane %v2261, 1
      %v2263 = vmin.f32 %v2261, %v2262
      %v2264 = vsub.f32 %v2210, %v2263
      %v2265 = vmax.f32 %v2264, 1e-06
      %v2266 = vrcp.pop 512.0
      %v2267 = vmul.f32 512.0, %v2266
      %v2268 = vsub.f32 1.0, %v2267
      %v2269 = vmul.f32 %v2266, %v2268
      %v2270 = vadd.f32 %v2266, %v2269
      %vm2271 = vweird.f32 %v2266
      %v2272 = vsel %vm2271, %v2266, %v2270
      %v2273 = vmul.f32 %v2265, %v2272
      loop: start=0, step=1, limit=500
      $region33: #{upsample_loss_forward.1} parent=31 // loop_pre_header
        _
      $region34: #{upsample_loss_forward.1} parent=31 // loop_header
        %s2275 = sphi 0, %s2279
        %p2276 = scmp.ge.s32.totalorder %s2275, 500
        %v2280 = vphi 0.0, %v2873
        %v2281 = vphi 4294967295, %v2871
        %v2282 = vphi 4294967295, %v2919
        %v2283 = vphi 4294967295, %v2933
        %v2284 = vphi 4294967295, %v2947
        %v2285 = vphi 4294967295, %v2961
        %v2286 = vphi 4294967295, %v2975
        %v2287 = vphi 4294967295, %v2989
        %v2288 = vphi 4294967295, %v3003
        %v2289 = vphi 4294967295, %v3017
        %v2290 = vphi 4294967295, %v3031
        %v2291 = vphi 4294967295, %v3045
        %v2292 = vphi 4294967295, %v3059
        %v2293 = vphi 4294967295, %v3073
        %v2294 = vphi 4294967295, %v3087
        %v2295 = vphi 4294967295, %v3101
        %v2296 = vphi 4294967295, %v3115
        %v2297 = vphi 4294967295, %v3129
      $region35: #{upsample_loss_forward.1} parent=31 // loop_header_branch
        %2278 = sbr.rel (%p2276) target = $region39
      $region36: #{upsample_loss_forward.1} parent=31 // loop_body
        %v2298 = vsub.f32 %v2142, %v2280
        %v2299 = vsub.f32 %v2143, %v2280
        %v2300 = vsub.f32 %v2144, %v2280
        %v2301 = vsub.f32 %v2145, %v2280
        %v2302 = vsub.f32 %v2146, %v2280
        %v2303 = vsub.f32 %v2147, %v2280
        %v2304 = vsub.f32 %v2148, %v2280
        %v2305 = vsub.f32 %v2149, %v2280
        %v2306 = vsub.f32 %v2150, %v2280
        %v2307 = vsub.f32 %v2151, %v2280
        %v2308 = vsub.f32 %v2152, %v2280
        %v2309 = vsub.f32 %v2153, %v2280
        %v2310 = vsub.f32 %v2154, %v2280
        %v2311 = vsub.f32 %v2155, %v2280
        %v2312 = vsub.f32 %v2156, %v2280
        %v2313 = vsub.f32 %v2157, %v2280
        %2314 = vmax.xlane.f32.xlu0 %v2298
        %v2315 = vpop.xlane.xlu0 %2314
        %2316 = vmax.xlane.f32.xlu0 %v2299
        %v2317 = vpop.xlane.xlu0 %2316
        %2318 = vmax.xlane.f32.xlu0 %v2300
        %v2319 = vpop.xlane.xlu0 %2318
        %2320 = vmax.xlane.f32.xlu0 %v2301
        %v2321 = vpop.xlane.xlu0 %2320
        %2322 = vmax.xlane.f32.xlu0 %v2302
        %v2323 = vpop.xlane.xlu0 %2322
        %2324 = vmax.xlane.f32.xlu0 %v2303
        %v2325 = vpop.xlane.xlu0 %2324
        %2326 = vmax.xlane.f32.xlu0 %v2304
        %v2327 = vpop.xlane.xlu0 %2326
        %2328 = vmax.xlane.f32.xlu0 %v2305
        %v2329 = vpop.xlane.xlu0 %2328
        %2330 = vmax.xlane.f32.xlu0 %v2306
        %v2331 = vpop.xlane.xlu0 %2330
        %2332 = vmax.xlane.f32.xlu0 %v2307
        %v2333 = vpop.xlane.xlu0 %2332
        %2334 = vmax.xlane.f32.xlu0 %v2308
        %v2335 = vpop.xlane.xlu0 %2334
        %2336 = vmax.xlane.f32.xlu0 %v2309
        %v2337 = vpop.xlane.xlu0 %2336
        %2338 = vmax.xlane.f32.xlu0 %v2310
        %v2339 = vpop.xlane.xlu0 %2338
        %2340 = vmax.xlane.f32.xlu0 %v2311
        %v2341 = vpop.xlane.xlu0 %2340
        %2342 = vmax.xlane.f32.xlu0 %v2312
        %v2343 = vpop.xlane.xlu0 %2342
        %2344 = vmax.xlane.f32.xlu0 %v2313
        %v2345 = vpop.xlane.xlu0 %2344
        %vm2346 = vcmp.ge.f32.partialorder %v2298, %v2315
        %vm2347 = vcmp.ge.f32.partialorder %v2299, %v2317
        %vm2348 = vcmp.ge.f32.partialorder %v2300, %v2319
        %vm2349 = vcmp.ge.f32.partialorder %v2301, %v2321
        %vm2350 = vcmp.ge.f32.partialorder %v2302, %v2323
        %vm2351 = vcmp.ge.f32.partialorder %v2303, %v2325
        %vm2352 = vcmp.ge.f32.partialorder %v2304, %v2327
        %vm2353 = vcmp.ge.f32.partialorder %v2305, %v2329
        %vm2354 = vcmp.ge.f32.partialorder %v2306, %v2331
        %vm2355 = vcmp.ge.f32.partialorder %v2307, %v2333
        %vm2356 = vcmp.ge.f32.partialorder %v2308, %v2335
        %vm2357 = vcmp.ge.f32.partialorder %v2309, %v2337
        %vm2358 = vcmp.ge.f32.partialorder %v2310, %v2339
        %vm2359 = vcmp.ge.f32.partialorder %v2311, %v2341
        %vm2360 = vcmp.ge.f32.partialorder %v2312, %v2343
        %vm2361 = vcmp.ge.f32.partialorder %v2313, %v2345
        %v2362 = vsel %vm2346, %v491, 128
        %v2363 = vsel %vm2347, %v491, 128
        %v2364 = vsel %vm2348, %v491, 128
        %v2365 = vsel %vm2349, %v491, 128
        %v2366 = vsel %vm2350, %v491, 128
        %v2367 = vsel %vm2351, %v491, 128
        %v2368 = vsel %vm2352, %v491, 128
        %v2369 = vsel %vm2353, %v491, 128
        %v2370 = vsel %vm2354, %v491, 128
        %v2371 = vsel %vm2355, %v491, 128
        %v2372 = vsel %vm2356, %v491, 128
        %v2373 = vsel %vm2357, %v491, 128
        %v2374 = vsel %vm2358, %v491, 128
        %v2375 = vsel %vm2359, %v491, 128
        %v2376 = vsel %vm2360, %v491, 128
        %v2377 = vsel %vm2361, %v491, 128
        %v2378 = vand.u32 %v2362, 65535
        %v2379 = vshra.s32 %v2362, 16
        %v2380 = vcvt.s32.f32 %v2378
        %v2381 = vcvt.s32.f32 %v2379
        %2382 = vmin.xlane.f32.xlu0 %v2381
        %v2383 = vpop.xlane.xlu0 %2382
        %vm2384 = vcmp.eq.f32.partialorder %v2381, %v2383
        %v2385 = vsel %vm2384, %v2380, inf
        %2386 = vmin.xlane.f32.xlu0 %v2385
        %v2387 = vpop.xlane.xlu0 %2386
        %v2388 = vcvt.f32.s32 %v2387
        %v2389 = vcvt.f32.s32 %v2383
        %v2390 = vshll.u32 %v2389, 16
        %v2391 = vadd.s32 %v2390, %v2388
        %v2392 = vand.u32 %v2363, 65535
        %v2393 = vshra.s32 %v2363, 16
        %v2394 = vcvt.s32.f32 %v2392
        %v2395 = vcvt.s32.f32 %v2393
        %2396 = vmin.xlane.f32.xlu0 %v2395
        %v2397 = vpop.xlane.xlu0 %2396
        %vm2398 = vcmp.eq.f32.partialorder %v2395, %v2397
        %v2399 = vsel %vm2398, %v2394, inf
        %2400 = vmin.xlane.f32.xlu0 %v2399
        %v2401 = vpop.xlane.xlu0 %2400
        %v2402 = vcvt.f32.s32 %v2401
        %v2403 = vcvt.f32.s32 %v2397
        %v2404 = vshll.u32 %v2403, 16
        %v2405 = vadd.s32 %v2404, %v2402
        %v2406 = vand.u32 %v2364, 65535
        %v2407 = vshra.s32 %v2364, 16
        %v2408 = vcvt.s32.f32 %v2406
        %v2409 = vcvt.s32.f32 %v2407
        %2410 = vmin.xlane.f32.xlu0 %v2409
        %v2411 = vpop.xlane.xlu0 %2410
        %vm2412 = vcmp.eq.f32.partialorder %v2409, %v2411
        %v2413 = vsel %vm2412, %v2408, inf
        %2414 = vmin.xlane.f32.xlu0 %v2413
        %v2415 = vpop.xlane.xlu0 %2414
        %v2416 = vcvt.f32.s32 %v2415
        %v2417 = vcvt.f32.s32 %v2411
        %v2418 = vshll.u32 %v2417, 16
        %v2419 = vadd.s32 %v2418, %v2416
        %v2420 = vand.u32 %v2365, 65535
        %v2421 = vshra.s32 %v2365, 16
        %v2422 = vcvt.s32.f32 %v2420
        %v2423 = vcvt.s32.f32 %v2421
        %2424 = vmin.xlane.f32.xlu0 %v2423
        %v2425 = vpop.xlane.xlu0 %2424
        %vm2426 = vcmp.eq.f32.partialorder %v2423, %v2425
        %v2427 = vsel %vm2426, %v2422, inf
        %2428 = vmin.xlane.f32.xlu0 %v2427
        %v2429 = vpop.xlane.xlu0 %2428
        %v2430 = vcvt.f32.s32 %v2429
        %v2431 = vcvt.f32.s32 %v2425
        %v2432 = vshll.u32 %v2431, 16
        %v2433 = vadd.s32 %v2432, %v2430
        %v2434 = vand.u32 %v2366, 65535
        %v2435 = vshra.s32 %v2366, 16
        %v2436 = vcvt.s32.f32 %v2434
        %v2437 = vcvt.s32.f32 %v2435
        %2438 = vmin.xlane.f32.xlu0 %v2437
        %v2439 = vpop.xlane.xlu0 %2438
        %vm2440 = vcmp.eq.f32.partialorder %v2437, %v2439
        %v2441 = vsel %vm2440, %v2436, inf
        %2442 = vmin.xlane.f32.xlu0 %v2441
        %v2443 = vpop.xlane.xlu0 %2442
        %v2444 = vcvt.f32.s32 %v2443
        %v2445 = vcvt.f32.s32 %v2439
        %v2446 = vshll.u32 %v2445, 16
        %v2447 = vadd.s32 %v2446, %v2444
        %v2448 = vand.u32 %v2367, 65535
        %v2449 = vshra.s32 %v2367, 16
        %v2450 = vcvt.s32.f32 %v2448
        %v2451 = vcvt.s32.f32 %v2449
        %2452 = vmin.xlane.f32.xlu0 %v2451
        %v2453 = vpop.xlane.xlu0 %2452
        %vm2454 = vcmp.eq.f32.partialorder %v2451, %v2453
        %v2455 = vsel %vm2454, %v2450, inf
        %2456 = vmin.xlane.f32.xlu0 %v2455
        %v2457 = vpop.xlane.xlu0 %2456
        %v2458 = vcvt.f32.s32 %v2457
        %v2459 = vcvt.f32.s32 %v2453
        %v2460 = vshll.u32 %v2459, 16
        %v2461 = vadd.s32 %v2460, %v2458
        %v2462 = vand.u32 %v2368, 65535
        %v2463 = vshra.s32 %v2368, 16
        %v2464 = vcvt.s32.f32 %v2462
        %v2465 = vcvt.s32.f32 %v2463
        %2466 = vmin.xlane.f32.xlu0 %v2465
        %v2467 = vpop.xlane.xlu0 %2466
        %vm2468 = vcmp.eq.f32.partialorder %v2465, %v2467
        %v2469 = vsel %vm2468, %v2464, inf
        %2470 = vmin.xlane.f32.xlu0 %v2469
        %v2471 = vpop.xlane.xlu0 %2470
        %v2472 = vcvt.f32.s32 %v2471
        %v2473 = vcvt.f32.s32 %v2467
        %v2474 = vshll.u32 %v2473, 16
        %v2475 = vadd.s32 %v2474, %v2472
        %v2476 = vand.u32 %v2369, 65535
        %v2477 = vshra.s32 %v2369, 16
        %v2478 = vcvt.s32.f32 %v2476
        %v2479 = vcvt.s32.f32 %v2477
        %2480 = vmin.xlane.f32.xlu0 %v2479
        %v2481 = vpop.xlane.xlu0 %2480
        %vm2482 = vcmp.eq.f32.partialorder %v2479, %v2481
        %v2483 = vsel %vm2482, %v2478, inf
        %2484 = vmin.xlane.f32.xlu0 %v2483
        %v2485 = vpop.xlane.xlu0 %2484
        %v2486 = vcvt.f32.s32 %v2485
        %v2487 = vcvt.f32.s32 %v2481
        %v2488 = vshll.u32 %v2487, 16
        %v2489 = vadd.s32 %v2488, %v2486
        %v2490 = vand.u32 %v2370, 65535
        %v2491 = vshra.s32 %v2370, 16
        %v2492 = vcvt.s32.f32 %v2490
        %v2493 = vcvt.s32.f32 %v2491
        %2494 = vmin.xlane.f32.xlu0 %v2493
        %v2495 = vpop.xlane.xlu0 %2494
        %vm2496 = vcmp.eq.f32.partialorder %v2493, %v2495
        %v2497 = vsel %vm2496, %v2492, inf
        %2498 = vmin.xlane.f32.xlu0 %v2497
        %v2499 = vpop.xlane.xlu0 %2498
        %v2500 = vcvt.f32.s32 %v2499
        %v2501 = vcvt.f32.s32 %v2495
        %v2502 = vshll.u32 %v2501, 16
        %v2503 = vadd.s32 %v2502, %v2500
        %v2504 = vand.u32 %v2371, 65535
        %v2505 = vshra.s32 %v2371, 16
        %v2506 = vcvt.s32.f32 %v2504
        %v2507 = vcvt.s32.f32 %v2505
        %2508 = vmin.xlane.f32.xlu0 %v2507
        %v2509 = vpop.xlane.xlu0 %2508
        %vm2510 = vcmp.eq.f32.partialorder %v2507, %v2509
        %v2511 = vsel %vm2510, %v2506, inf
        %2512 = vmin.xlane.f32.xlu0 %v2511
        %v2513 = vpop.xlane.xlu0 %2512
        %v2514 = vcvt.f32.s32 %v2513
        %v2515 = vcvt.f32.s32 %v2509
        %v2516 = vshll.u32 %v2515, 16
        %v2517 = vadd.s32 %v2516, %v2514
        %v2518 = vand.u32 %v2372, 65535
        %v2519 = vshra.s32 %v2372, 16
        %v2520 = vcvt.s32.f32 %v2518
        %v2521 = vcvt.s32.f32 %v2519
        %2522 = vmin.xlane.f32.xlu0 %v2521
        %v2523 = vpop.xlane.xlu0 %2522
        %vm2524 = vcmp.eq.f32.partialorder %v2521, %v2523
        %v2525 = vsel %vm2524, %v2520, inf
        %2526 = vmin.xlane.f32.xlu0 %v2525
        %v2527 = vpop.xlane.xlu0 %2526
        %v2528 = vcvt.f32.s32 %v2527
        %v2529 = vcvt.f32.s32 %v2523
        %v2530 = vshll.u32 %v2529, 16
        %v2531 = vadd.s32 %v2530, %v2528
        %v2532 = vand.u32 %v2373, 65535
        %v2533 = vshra.s32 %v2373, 16
        %v2534 = vcvt.s32.f32 %v2532
        %v2535 = vcvt.s32.f32 %v2533
        %2536 = vmin.xlane.f32.xlu0 %v2535
        %v2537 = vpop.xlane.xlu0 %2536
        %vm2538 = vcmp.eq.f32.partialorder %v2535, %v2537
        %v2539 = vsel %vm2538, %v2534, inf
        %2540 = vmin.xlane.f32.xlu0 %v2539
        %v2541 = vpop.xlane.xlu0 %2540
        %v2542 = vcvt.f32.s32 %v2541
        %v2543 = vcvt.f32.s32 %v2537
        %v2544 = vshll.u32 %v2543, 16
        %v2545 = vadd.s32 %v2544, %v2542
        %v2546 = vand.u32 %v2374, 65535
        %v2547 = vshra.s32 %v2374, 16
        %v2548 = vcvt.s32.f32 %v2546
        %v2549 = vcvt.s32.f32 %v2547
        %2550 = vmin.xlane.f32.xlu0 %v2549
        %v2551 = vpop.xlane.xlu0 %2550
        %vm2552 = vcmp.eq.f32.partialorder %v2549, %v2551
        %v2553 = vsel %vm2552, %v2548, inf
        %2554 = vmin.xlane.f32.xlu0 %v2553
        %v2555 = vpop.xlane.xlu0 %2554
        %v2556 = vcvt.f32.s32 %v2555
        %v2557 = vcvt.f32.s32 %v2551
        %v2558 = vshll.u32 %v2557, 16
        %v2559 = vadd.s32 %v2558, %v2556
        %v2560 = vand.u32 %v2375, 65535
        %v2561 = vshra.s32 %v2375, 16
        %v2562 = vcvt.s32.f32 %v2560
        %v2563 = vcvt.s32.f32 %v2561
        %2564 = vmin.xlane.f32.xlu0 %v2563
        %v2565 = vpop.xlane.xlu0 %2564
        %vm2566 = vcmp.eq.f32.partialorder %v2563, %v2565
        %v2567 = vsel %vm2566, %v2562, inf
        %2568 = vmin.xlane.f32.xlu0 %v2567
        %v2569 = vpop.xlane.xlu0 %2568
        %v2570 = vcvt.f32.s32 %v2569
        %v2571 = vcvt.f32.s32 %v2565
        %v2572 = vshll.u32 %v2571, 16
        %v2573 = vadd.s32 %v2572, %v2570
        %v2574 = vand.u32 %v2376, 65535
        %v2575 = vshra.s32 %v2376, 16
        %v2576 = vcvt.s32.f32 %v2574
        %v2577 = vcvt.s32.f32 %v2575
        %2578 = vmin.xlane.f32.xlu0 %v2577
        %v2579 = vpop.xlane.xlu0 %2578
        %vm2580 = vcmp.eq.f32.partialorder %v2577, %v2579
        %v2581 = vsel %vm2580, %v2576, inf
        %2582 = vmin.xlane.f32.xlu0 %v2581
        %v2583 = vpop.xlane.xlu0 %2582
        %v2584 = vcvt.f32.s32 %v2583
        %v2585 = vcvt.f32.s32 %v2579
        %v2586 = vshll.u32 %v2585, 16
        %v2587 = vadd.s32 %v2586, %v2584
        %v2588 = vand.u32 %v2377, 65535
        %v2589 = vshra.s32 %v2377, 16
        %v2590 = vcvt.s32.f32 %v2588
        %v2591 = vcvt.s32.f32 %v2589
        %2592 = vmin.xlane.f32.xlu0 %v2591
        %v2593 = vpop.xlane.xlu0 %2592
        %vm2594 = vcmp.eq.f32.partialorder %v2591, %v2593
        %v2595 = vsel %vm2594, %v2590, inf
        %2596 = vmin.xlane.f32.xlu0 %v2595
        %v2597 = vpop.xlane.xlu0 %2596
        %v2598 = vcvt.f32.s32 %v2597
        %v2599 = vcvt.f32.s32 %v2593
        %v2600 = vshll.u32 %v2599, 16
        %v2601 = vadd.s32 %v2600, %v2598
        %vm2602 = vcmp.eq.s32.totalorder %v491, %v2391
        %vm2603 = vcmp.eq.s32.totalorder %v491, %v2405
        %vm2604 = vcmp.eq.s32.totalorder %v491, %v2419
        %vm2605 = vcmp.eq.s32.totalorder %v491, %v2433
        %vm2606 = vcmp.eq.s32.totalorder %v491, %v2447
        %vm2607 = vcmp.eq.s32.totalorder %v491, %v2461
        %vm2608 = vcmp.eq.s32.totalorder %v491, %v2475
        %vm2609 = vcmp.eq.s32.totalorder %v491, %v2489
        %vm2610 = vcmp.eq.s32.totalorder %v491, %v2503
        %vm2611 = vcmp.eq.s32.totalorder %v491, %v2517
        %vm2612 = vcmp.eq.s32.totalorder %v491, %v2531
        %vm2613 = vcmp.eq.s32.totalorder %v491, %v2545
        %vm2614 = vcmp.eq.s32.totalorder %v491, %v2559
        %vm2615 = vcmp.eq.s32.totalorder %v491, %v2573
        %vm2616 = vcmp.eq.s32.totalorder %v491, %v2587
        %vm2617 = vcmp.eq.s32.totalorder %v491, %v2601
        %v2618 = vsel %vm2602, -inf, %v2298
        %v2619 = vsel %vm2603, -inf, %v2299
        %v2620 = vsel %vm2604, -inf, %v2300
        %v2621 = vsel %vm2605, -inf, %v2301
        %v2622 = vsel %vm2606, -inf, %v2302
        %v2623 = vsel %vm2607, -inf, %v2303
        %v2624 = vsel %vm2608, -inf, %v2304
        %v2625 = vsel %vm2609, -inf, %v2305
        %v2626 = vsel %vm2610, -inf, %v2306
        %v2627 = vsel %vm2611, -inf, %v2307
        %v2628 = vsel %vm2612, -inf, %v2308
        %v2629 = vsel %vm2613, -inf, %v2309
        %v2630 = vsel %vm2614, -inf, %v2310
        %v2631 = vsel %vm2615, -inf, %v2311
        %v2632 = vsel %vm2616, -inf, %v2312
        %v2633 = vsel %vm2617, -inf, %v2313
        %2634 = vmax.xlane.f32.xlu0 %v2618
        %v2635 = vpop.xlane.xlu0 %2634
        %2636 = vmax.xlane.f32.xlu0 %v2619
        %v2637 = vpop.xlane.xlu0 %2636
        %2638 = vmax.xlane.f32.xlu0 %v2620
        %v2639 = vpop.xlane.xlu0 %2638
        %2640 = vmax.xlane.f32.xlu0 %v2621
        %v2641 = vpop.xlane.xlu0 %2640
        %2642 = vmax.xlane.f32.xlu0 %v2622
        %v2643 = vpop.xlane.xlu0 %2642
        %2644 = vmax.xlane.f32.xlu0 %v2623
        %v2645 = vpop.xlane.xlu0 %2644
        %2646 = vmax.xlane.f32.xlu0 %v2624
        %v2647 = vpop.xlane.xlu0 %2646
        %2648 = vmax.xlane.f32.xlu0 %v2625
        %v2649 = vpop.xlane.xlu0 %2648
        %2650 = vmax.xlane.f32.xlu0 %v2626
        %v2651 = vpop.xlane.xlu0 %2650
        %2652 = vmax.xlane.f32.xlu0 %v2627
        %v2653 = vpop.xlane.xlu0 %2652
        %2654 = vmax.xlane.f32.xlu0 %v2628
        %v2655 = vpop.xlane.xlu0 %2654
        %2656 = vmax.xlane.f32.xlu0 %v2629
        %v2657 = vpop.xlane.xlu0 %2656
        %2658 = vmax.xlane.f32.xlu0 %v2630
        %v2659 = vpop.xlane.xlu0 %2658
        %2660 = vmax.xlane.f32.xlu0 %v2631
        %v2661 = vpop.xlane.xlu0 %2660
        %2662 = vmax.xlane.f32.xlu0 %v2632
        %v2663 = vpop.xlane.xlu0 %2662
        %2664 = vmax.xlane.f32.xlu0 %v2633
        %v2665 = vpop.xlane.xlu0 %2664
        %vm2666 = vcmp.lt.s32.totalorder %v2282, 0
        %vm2667 = vcmp.lt.s32.totalorder %v2283, 0
        %vm2668 = vcmp.lt.s32.totalorder %v2284, 0
        %vm2669 = vcmp.lt.s32.totalorder %v2285, 0
        %vm2670 = vcmp.lt.s32.totalorder %v2286, 0
        %vm2671 = vcmp.lt.s32.totalorder %v2287, 0
        %vm2672 = vcmp.lt.s32.totalorder %v2288, 0
        %vm2673 = vcmp.lt.s32.totalorder %v2289, 0
        %vm2674 = vcmp.lt.s32.totalorder %v2290, 0
        %vm2675 = vcmp.lt.s32.totalorder %v2291, 0
        %vm2676 = vcmp.lt.s32.totalorder %v2292, 0
        %vm2677 = vcmp.lt.s32.totalorder %v2293, 0
        %vm2678 = vcmp.lt.s32.totalorder %v2294, 0
        %vm2679 = vcmp.lt.s32.totalorder %v2295, 0
        %vm2680 = vcmp.lt.s32.totalorder %v2296, 0
        %vm2681 = vcmp.lt.s32.totalorder %v2297, 0
        %v2682 = vsub.f32 %v2315, %v2635
        %v2683 = vsub.f32 %v2317, %v2637
        %v2684 = vsub.f32 %v2319, %v2639
        %v2685 = vsub.f32 %v2321, %v2641
        %v2686 = vsub.f32 %v2323, %v2643
        %v2687 = vsub.f32 %v2325, %v2645
        %v2688 = vsub.f32 %v2327, %v2647
        %v2689 = vsub.f32 %v2329, %v2649
        %v2690 = vsub.f32 %v2331, %v2651
        %v2691 = vsub.f32 %v2333, %v2653
        %v2692 = vsub.f32 %v2335, %v2655
        %v2693 = vsub.f32 %v2337, %v2657
        %v2694 = vsub.f32 %v2339, %v2659
        %v2695 = vsub.f32 %v2341, %v2661
        %v2696 = vsub.f32 %v2343, %v2663
        %v2697 = vsub.f32 %v2345, %v2665
        %v2698 = vadd.f32 %v2682, %v2273
        %v2699 = vadd.f32 %v2683, %v2273
        %v2700 = vadd.f32 %v2684, %v2273
        %v2701 = vadd.f32 %v2685, %v2273
        %v2702 = vadd.f32 %v2686, %v2273
        %v2703 = vadd.f32 %v2687, %v2273
        %v2704 = vadd.f32 %v2688, %v2273
        %v2705 = vadd.f32 %v2689, %v2273
        %v2706 = vadd.f32 %v2690, %v2273
        %v2707 = vadd.f32 %v2691, %v2273
        %v2708 = vadd.f32 %v2692, %v2273
        %v2709 = vadd.f32 %v2693, %v2273
        %v2710 = vadd.f32 %v2694, %v2273
        %v2711 = vadd.f32 %v2695, %v2273
        %v2712 = vadd.f32 %v2696, %v2273
        %v2713 = vadd.f32 %v2697, %v2273
        %v2714 = vsel %vm2666, 1, 0
        %v2715 = vsel %vm2667, 1, 0
        %v2716 = vsel %vm2668, 1, 0
        %v2717 = vsel %vm2669, 1, 0
        %v2718 = vsel %vm2670, 1, 0
        %v2719 = vsel %vm2671, 1, 0
        %v2720 = vsel %vm2672, 1, 0
        %v2721 = vsel %vm2673, 1, 0
        %v2722 = vsel %vm2674, 1, 0
        %v2723 = vsel %vm2675, 1, 0
        %v2724 = vsel %vm2676, 1, 0
        %v2725 = vsel %vm2677, 1, 0
        %v2726 = vsel %vm2678, 1, 0
        %v2727 = vsel %vm2679, 1, 0
        %v2728 = vsel %vm2680, 1, 0
        %v2729 = vsel %vm2681, 1, 0
        %vm2730 = vcmp.eq.s32.totalorder %v2714, 1
        %vm2731 = vcmp.eq.s32.totalorder %v2715, 1
        %vm2732 = vcmp.eq.s32.totalorder %v2716, 1
        %vm2733 = vcmp.eq.s32.totalorder %v2717, 1
        %vm2734 = vcmp.eq.s32.totalorder %v2718, 1
        %vm2735 = vcmp.eq.s32.totalorder %v2719, 1
        %vm2736 = vcmp.eq.s32.totalorder %v2720, 1
        %vm2737 = vcmp.eq.s32.totalorder %v2721, 1
        %vm2738 = vcmp.eq.s32.totalorder %v2722, 1
        %vm2739 = vcmp.eq.s32.totalorder %v2723, 1
        %vm2740 = vcmp.eq.s32.totalorder %v2724, 1
        %vm2741 = vcmp.eq.s32.totalorder %v2725, 1
        %vm2742 = vcmp.eq.s32.totalorder %v2726, 1
        %vm2743 = vcmp.eq.s32.totalorder %v2727, 1
        %vm2744 = vcmp.eq.s32.totalorder %v2728, 1
        %vm2745 = vcmp.eq.s32.totalorder %v2729, 1
        %vm2746 = vmand %vm2602, %vm2730
        %vm2747 = vmand %vm2603, %vm2731
        %vm2748 = vmand %vm2604, %vm2732
        %vm2749 = vmand %vm2605, %vm2733
        %vm2750 = vmand %vm2606, %vm2734
        %vm2751 = vmand %vm2607, %vm2735
        %vm2752 = vmand %vm2608, %vm2736
        %vm2753 = vmand %vm2609, %vm2737
        %vm2754 = vmand %vm2610, %vm2738
        %vm2755 = vmand %vm2611, %vm2739
        %vm2756 = vmand %vm2612, %vm2740
        %vm2757 = vmand %vm2613, %vm2741
        %vm2758 = vmand %vm2614, %vm2742
        %vm2759 = vmand %vm2615, %vm2743
        %vm2760 = vmand %vm2616, %vm2744
        %vm2761 = vmand %vm2617, %vm2745
        %v2762 = vsel %vm2746, %v2698, -inf
        %v2763 = vsel %vm2747, %v2699, -inf
        %v2764 = vsel %vm2748, %v2700, -inf
        %v2765 = vsel %vm2749, %v2701, -inf
        %v2766 = vsel %vm2750, %v2702, -inf
        %v2767 = vsel %vm2751, %v2703, -inf
        %v2768 = vsel %vm2752, %v2704, -inf
        %v2769 = vsel %vm2753, %v2705, -inf
        %v2770 = vsel %vm2754, %v2706, -inf
        %v2771 = vsel %vm2755, %v2707, -inf
        %v2772 = vsel %vm2756, %v2708, -inf
        %v2773 = vsel %vm2757, %v2709, -inf
        %v2774 = vsel %vm2758, %v2710, -inf
        %v2775 = vsel %vm2759, %v2711, -inf
        %v2776 = vsel %vm2760, %v2712, -inf
        %v2777 = vsel %vm2761, %v2713, -inf
        %v2778 = vmax.f32 %v2762, %v2766
        %v2779 = vmax.f32 %v2763, %v2767
        %v2780 = vmax.f32 %v2764, %v2768
        %v2781 = vmax.f32 %v2765, %v2769
        %v2782 = vmax.f32 %v2778, %v2770
        %v2783 = vmax.f32 %v2779, %v2771
        %v2784 = vmax.f32 %v2780, %v2772
        %v2785 = vmax.f32 %v2781, %v2773
        %v2786 = vmax.f32 %v2782, %v2774
        %v2787 = vmax.f32 %v2783, %v2775
        %v2788 = vmax.f32 %v2784, %v2776
        %v2789 = vmax.f32 %v2785, %v2777
        %v2790 = vmax.f32 %v2786, %v2787
        %v2791 = vmax.f32 %v2788, %v2789
        %v2792 = vmax.f32 %v2790, %v2791
        %v2793 = vrot.slane %v2792, 4
        %v2794 = vmax.f32 %v2792, %v2793
        %v2795 = vrot.slane %v2794, 2
        %v2796 = vmax.f32 %v2794, %v2795
        %v2797 = vrot.slane %v2796, 1
        %v2798 = vmax.f32 %v2796, %v2797
        %vm2799 = vcmp.gt.f32.partialorder %v2798, -inf
        %vm2800 = vcmp.ge.f32.partialorder %v2762, %v2798
        %vm2801 = vcmp.ge.f32.partialorder %v2763, %v2798
        %vm2802 = vcmp.ge.f32.partialorder %v2764, %v2798
        %vm2803 = vcmp.ge.f32.partialorder %v2765, %v2798
        %vm2804 = vcmp.ge.f32.partialorder %v2766, %v2798
        %vm2805 = vcmp.ge.f32.partialorder %v2767, %v2798
        %vm2806 = vcmp.ge.f32.partialorder %v2768, %v2798
        %vm2807 = vcmp.ge.f32.partialorder %v2769, %v2798
        %vm2808 = vcmp.ge.f32.partialorder %v2770, %v2798
        %vm2809 = vcmp.ge.f32.partialorder %v2771, %v2798
        %vm2810 = vcmp.ge.f32.partialorder %v2772, %v2798
        %vm2811 = vcmp.ge.f32.partialorder %v2773, %v2798
        %vm2812 = vcmp.ge.f32.partialorder %v2774, %v2798
        %vm2813 = vcmp.ge.f32.partialorder %v2775, %v2798
        %vm2814 = vcmp.ge.f32.partialorder %v2776, %v2798
        %vm2815 = vcmp.ge.f32.partialorder %v2777, %v2798
        %v2816 = vsel %vm2800, %v474, 128
        %v2817 = vsel %vm2801, %v475, 128
        %v2818 = vsel %vm2802, %v476, 128
        %v2819 = vsel %vm2803, %v477, 128
        %v2820 = vsel %vm2804, %v478, 128
        %v2821 = vsel %vm2805, %v479, 128
        %v2822 = vsel %vm2806, %v480, 128
        %v2823 = vsel %vm2807, %v481, 128
        %v2824 = vsel %vm2808, %v482, 128
        %v2825 = vsel %vm2809, %v483, 128
        %v2826 = vsel %vm2810, %v484, 128
        %v2827 = vsel %vm2811, %v485, 128
        %v2828 = vsel %vm2812, %v486, 128
        %v2829 = vsel %vm2813, %v487, 128
        %v2830 = vsel %vm2814, %v488, 128
        %v2831 = vsel %vm2815, %v489, 128
        %vm2832 = vcmp.lt.s32.totalorder %v2816, %v2820
        %v2833 = vsel %vm2832, %v2816, %v2820
        %vm2834 = vcmp.lt.s32.totalorder %v2817, %v2821
        %v2835 = vsel %vm2834, %v2817, %v2821
        %vm2836 = vcmp.lt.s32.totalorder %v2818, %v2822
        %v2837 = vsel %vm2836, %v2818, %v2822
        %vm2838 = vcmp.lt.s32.totalorder %v2819, %v2823
        %v2839 = vsel %vm2838, %v2819, %v2823
        %vm2840 = vcmp.lt.s32.totalorder %v2833, %v2824
        %v2841 = vsel %vm2840, %v2833, %v2824
        %vm2842 = vcmp.lt.s32.totalorder %v2835, %v2825
        %v2843 = vsel %vm2842, %v2835, %v2825
        %vm2844 = vcmp.lt.s32.totalorder %v2837, %v2826
        %v2845 = vsel %vm2844, %v2837, %v2826
        %vm2846 = vcmp.lt.s32.totalorder %v2839, %v2827
        %v2847 = vsel %vm2846, %v2839, %v2827
        %vm2848 = vcmp.lt.s32.totalorder %v2841, %v2828
        %v2849 = vsel %vm2848, %v2841, %v2828
        %vm2850 = vcmp.lt.s32.totalorder %v2843, %v2829
        %v2851 = vsel %vm2850, %v2843, %v2829
        %vm2852 = vcmp.lt.s32.totalorder %v2845, %v2830
        %v2853 = vsel %vm2852, %v2845, %v2830
        %vm2854 = vcmp.lt.s32.totalorder %v2847, %v2831
        %v2855 = vsel %vm2854, %v2847, %v2831
        %vm2856 = vcmp.lt.s32.totalorder %v2849, %v2851
        %v2857 = vsel %vm2856, %v2849, %v2851
        %vm2858 = vcmp.lt.s32.totalorder %v2853, %v2855
        %v2859 = vsel %vm2858, %v2853, %v2855
        %vm2860 = vcmp.lt.s32.totalorder %v2857, %v2859
        %v2861 = vsel %vm2860, %v2857, %v2859
        %v2862 = vrot.slane %v2861, 4
        %vm2863 = vcmp.lt.s32.totalorder %v2861, %v2862
        %v2864 = vsel %vm2863, %v2861, %v2862
        %v2865 = vrot.slane %v2864, 2
        %vm2866 = vcmp.lt.s32.totalorder %v2864, %v2865
        %v2867 = vsel %vm2866, %v2864, %v2865
        %v2868 = vrot.slane %v2867, 1
        %vm2869 = vcmp.lt.s32.totalorder %v2867, %v2868
        %v2870 = vsel %vm2869, %v2867, %v2868
        %v2871 = vsel %vm2799, %v2870, %v2281
        %v2872 = vadd.f32 %v2280, %v2798
        %v2873 = vsel %vm2799, %v2872, %v2280
        %vm2874 = vcmp.eq.s32.totalorder %v2871, %v474
        %vm2875 = vcmp.eq.s32.totalorder %v2871, %v475
        %vm2876 = vcmp.eq.s32.totalorder %v2871, %v476
        %vm2877 = vcmp.eq.s32.totalorder %v2871, %v477
        %vm2878 = vcmp.eq.s32.totalorder %v2871, %v478
        %vm2879 = vcmp.eq.s32.totalorder %v2871, %v479
        %vm2880 = vcmp.eq.s32.totalorder %v2871, %v480
        %vm2881 = vcmp.eq.s32.totalorder %v2871, %v481
        %vm2882 = vcmp.eq.s32.totalorder %v2871, %v482
        %vm2883 = vcmp.eq.s32.totalorder %v2871, %v483
        %vm2884 = vcmp.eq.s32.totalorder %v2871, %v484
        %vm2885 = vcmp.eq.s32.totalorder %v2871, %v485
        %vm2886 = vcmp.eq.s32.totalorder %v2871, %v486
        %vm2887 = vcmp.eq.s32.totalorder %v2871, %v487
        %vm2888 = vcmp.eq.s32.totalorder %v2871, %v488
        %vm2889 = vcmp.eq.s32.totalorder %v2871, %v489
        %v2890 = vsel %vm2874, %v491, 4294967295
        %v2891 = vsel %vm2875, %v491, 4294967295
        %v2892 = vsel %vm2876, %v491, 4294967295
        %v2893 = vsel %vm2877, %v491, 4294967295
        %v2894 = vsel %vm2878, %v491, 4294967295
        %v2895 = vsel %vm2879, %v491, 4294967295
        %v2896 = vsel %vm2880, %v491, 4294967295
        %v2897 = vsel %vm2881, %v491, 4294967295
        %v2898 = vsel %vm2882, %v491, 4294967295
        %v2899 = vsel %vm2883, %v491, 4294967295
        %v2900 = vsel %vm2884, %v491, 4294967295
        %v2901 = vsel %vm2885, %v491, 4294967295
        %v2902 = vsel %vm2886, %v491, 4294967295
        %v2903 = vsel %vm2887, %v491, 4294967295
        %v2904 = vsel %vm2888, %v491, 4294967295
        %v2905 = vsel %vm2889, %v491, 4294967295
        %v2906 = vand.u32 %v2890, 65535
        %v2907 = vshra.s32 %v2890, 16
        %v2908 = vcvt.s32.f32 %v2906
        %v2909 = vcvt.s32.f32 %v2907
        %2910 = vmax.xlane.f32.xlu0 %v2909
        %v2911 = vpop.xlane.xlu0 %2910
        %vm2912 = vcmp.eq.f32.partialorder %v2909, %v2911
        %v2913 = vsel %vm2912, %v2908, -inf
        %2914 = vmax.xlane.f32.xlu0 %v2913
        %v2915 = vpop.xlane.xlu0 %2914
        %v2916 = vcvt.f32.s32 %v2915
        %v2917 = vcvt.f32.s32 %v2911
        %v2918 = vshll.u32 %v2917, 16
        %v2919 = vadd.s32 %v2918, %v2916
        %v2920 = vand.u32 %v2891, 65535
        %v2921 = vshra.s32 %v2891, 16
        %v2922 = vcvt.s32.f32 %v2920
        %v2923 = vcvt.s32.f32 %v2921
        %2924 = vmax.xlane.f32.xlu0 %v2923
        %v2925 = vpop.xlane.xlu0 %2924
        %vm2926 = vcmp.eq.f32.partialorder %v2923, %v2925
        %v2927 = vsel %vm2926, %v2922, -inf
        %2928 = vmax.xlane.f32.xlu0 %v2927
        %v2929 = vpop.xlane.xlu0 %2928
        %v2930 = vcvt.f32.s32 %v2929
        %v2931 = vcvt.f32.s32 %v2925
        %v2932 = vshll.u32 %v2931, 16
        %v2933 = vadd.s32 %v2932, %v2930
        %v2934 = vand.u32 %v2892, 65535
        %v2935 = vshra.s32 %v2892, 16
        %v2936 = vcvt.s32.f32 %v2934
        %v2937 = vcvt.s32.f32 %v2935
        %2938 = vmax.xlane.f32.xlu0 %v2937
        %v2939 = vpop.xlane.xlu0 %2938
        %vm2940 = vcmp.eq.f32.partialorder %v2937, %v2939
        %v2941 = vsel %vm2940, %v2936, -inf
        %2942 = vmax.xlane.f32.xlu0 %v2941
        %v2943 = vpop.xlane.xlu0 %2942
        %v2944 = vcvt.f32.s32 %v2943
        %v2945 = vcvt.f32.s32 %v2939
        %v2946 = vshll.u32 %v2945, 16
        %v2947 = vadd.s32 %v2946, %v2944
        %v2948 = vand.u32 %v2893, 65535
        %v2949 = vshra.s32 %v2893, 16
        %v2950 = vcvt.s32.f32 %v2948
        %v2951 = vcvt.s32.f32 %v2949
        %2952 = vmax.xlane.f32.xlu0 %v2951
        %v2953 = vpop.xlane.xlu0 %2952
        %vm2954 = vcmp.eq.f32.partialorder %v2951, %v2953
        %v2955 = vsel %vm2954, %v2950, -inf
        %2956 = vmax.xlane.f32.xlu0 %v2955
        %v2957 = vpop.xlane.xlu0 %2956
        %v2958 = vcvt.f32.s32 %v2957
        %v2959 = vcvt.f32.s32 %v2953
        %v2960 = vshll.u32 %v2959, 16
        %v2961 = vadd.s32 %v2960, %v2958
        %v2962 = vand.u32 %v2894, 65535
        %v2963 = vshra.s32 %v2894, 16
        %v2964 = vcvt.s32.f32 %v2962
        %v2965 = vcvt.s32.f32 %v2963
        %2966 = vmax.xlane.f32.xlu0 %v2965
        %v2967 = vpop.xlane.xlu0 %2966
        %vm2968 = vcmp.eq.f32.partialorder %v2965, %v2967
        %v2969 = vsel %vm2968, %v2964, -inf
        %2970 = vmax.xlane.f32.xlu0 %v2969
        %v2971 = vpop.xlane.xlu0 %2970
        %v2972 = vcvt.f32.s32 %v2971
        %v2973 = vcvt.f32.s32 %v2967
        %v2974 = vshll.u32 %v2973, 16
        %v2975 = vadd.s32 %v2974, %v2972
        %v2976 = vand.u32 %v2895, 65535
        %v2977 = vshra.s32 %v2895, 16
        %v2978 = vcvt.s32.f32 %v2976
        %v2979 = vcvt.s32.f32 %v2977
        %2980 = vmax.xlane.f32.xlu0 %v2979
        %v2981 = vpop.xlane.xlu0 %2980
        %vm2982 = vcmp.eq.f32.partialorder %v2979, %v2981
        %v2983 = vsel %vm2982, %v2978, -inf
        %2984 = vmax.xlane.f32.xlu0 %v2983
        %v2985 = vpop.xlane.xlu0 %2984
        %v2986 = vcvt.f32.s32 %v2985
        %v2987 = vcvt.f32.s32 %v2981
        %v2988 = vshll.u32 %v2987, 16
        %v2989 = vadd.s32 %v2988, %v2986
        %v2990 = vand.u32 %v2896, 65535
        %v2991 = vshra.s32 %v2896, 16
        %v2992 = vcvt.s32.f32 %v2990
        %v2993 = vcvt.s32.f32 %v2991
        %2994 = vmax.xlane.f32.xlu0 %v2993
        %v2995 = vpop.xlane.xlu0 %2994
        %vm2996 = vcmp.eq.f32.partialorder %v2993, %v2995
        %v2997 = vsel %vm2996, %v2992, -inf
        %2998 = vmax.xlane.f32.xlu0 %v2997
        %v2999 = vpop.xlane.xlu0 %2998
        %v3000 = vcvt.f32.s32 %v2999
        %v3001 = vcvt.f32.s32 %v2995
        %v3002 = vshll.u32 %v3001, 16
        %v3003 = vadd.s32 %v3002, %v3000
        %v3004 = vand.u32 %v2897, 65535
        %v3005 = vshra.s32 %v2897, 16
        %v3006 = vcvt.s32.f32 %v3004
        %v3007 = vcvt.s32.f32 %v3005
        %3008 = vmax.xlane.f32.xlu0 %v3007
        %v3009 = vpop.xlane.xlu0 %3008
        %vm3010 = vcmp.eq.f32.partialorder %v3007, %v3009
        %v3011 = vsel %vm3010, %v3006, -inf
        %3012 = vmax.xlane.f32.xlu0 %v3011
        %v3013 = vpop.xlane.xlu0 %3012
        %v3014 = vcvt.f32.s32 %v3013
        %v3015 = vcvt.f32.s32 %v3009
        %v3016 = vshll.u32 %v3015, 16
        %v3017 = vadd.s32 %v3016, %v3014
        %v3018 = vand.u32 %v2898, 65535
        %v3019 = vshra.s32 %v2898, 16
        %v3020 = vcvt.s32.f32 %v3018
        %v3021 = vcvt.s32.f32 %v3019
        %3022 = vmax.xlane.f32.xlu0 %v3021
        %v3023 = vpop.xlane.xlu0 %3022
        %vm3024 = vcmp.eq.f32.partialorder %v3021, %v3023
        %v3025 = vsel %vm3024, %v3020, -inf
        %3026 = vmax.xlane.f32.xlu0 %v3025
        %v3027 = vpop.xlane.xlu0 %3026
        %v3028 = vcvt.f32.s32 %v3027
        %v3029 = vcvt.f32.s32 %v3023
        %v3030 = vshll.u32 %v3029, 16
        %v3031 = vadd.s32 %v3030, %v3028
        %v3032 = vand.u32 %v2899, 65535
        %v3033 = vshra.s32 %v2899, 16
        %v3034 = vcvt.s32.f32 %v3032
        %v3035 = vcvt.s32.f32 %v3033
        %3036 = vmax.xlane.f32.xlu0 %v3035
        %v3037 = vpop.xlane.xlu0 %3036
        %vm3038 = vcmp.eq.f32.partialorder %v3035, %v3037
        %v3039 = vsel %vm3038, %v3034, -inf
        %3040 = vmax.xlane.f32.xlu0 %v3039
        %v3041 = vpop.xlane.xlu0 %3040
        %v3042 = vcvt.f32.s32 %v3041
        %v3043 = vcvt.f32.s32 %v3037
        %v3044 = vshll.u32 %v3043, 16
        %v3045 = vadd.s32 %v3044, %v3042
        %v3046 = vand.u32 %v2900, 65535
        %v3047 = vshra.s32 %v2900, 16
        %v3048 = vcvt.s32.f32 %v3046
        %v3049 = vcvt.s32.f32 %v3047
        %3050 = vmax.xlane.f32.xlu0 %v3049
        %v3051 = vpop.xlane.xlu0 %3050
        %vm3052 = vcmp.eq.f32.partialorder %v3049, %v3051
        %v3053 = vsel %vm3052, %v3048, -inf
        %3054 = vmax.xlane.f32.xlu0 %v3053
        %v3055 = vpop.xlane.xlu0 %3054
        %v3056 = vcvt.f32.s32 %v3055
        %v3057 = vcvt.f32.s32 %v3051
        %v3058 = vshll.u32 %v3057, 16
        %v3059 = vadd.s32 %v3058, %v3056
        %v3060 = vand.u32 %v2901, 65535
        %v3061 = vshra.s32 %v2901, 16
        %v3062 = vcvt.s32.f32 %v3060
        %v3063 = vcvt.s32.f32 %v3061
        %3064 = vmax.xlane.f32.xlu0 %v3063
        %v3065 = vpop.xlane.xlu0 %3064
        %vm3066 = vcmp.eq.f32.partialorder %v3063, %v3065
        %v3067 = vsel %vm3066, %v3062, -inf
        %3068 = vmax.xlane.f32.xlu0 %v3067
        %v3069 = vpop.xlane.xlu0 %3068
        %v3070 = vcvt.f32.s32 %v3069
        %v3071 = vcvt.f32.s32 %v3065
        %v3072 = vshll.u32 %v3071, 16
        %v3073 = vadd.s32 %v3072, %v3070
        %v3074 = vand.u32 %v2902, 65535
        %v3075 = vshra.s32 %v2902, 16
        %v3076 = vcvt.s32.f32 %v3074
        %v3077 = vcvt.s32.f32 %v3075
        %3078 = vmax.xlane.f32.xlu0 %v3077
        %v3079 = vpop.xlane.xlu0 %3078
        %vm3080 = vcmp.eq.f32.partialorder %v3077, %v3079
        %v3081 = vsel %vm3080, %v3076, -inf
        %3082 = vmax.xlane.f32.xlu0 %v3081
        %v3083 = vpop.xlane.xlu0 %3082
        %v3084 = vcvt.f32.s32 %v3083
        %v3085 = vcvt.f32.s32 %v3079
        %v3086 = vshll.u32 %v3085, 16
        %v3087 = vadd.s32 %v3086, %v3084
        %v3088 = vand.u32 %v2903, 65535
        %v3089 = vshra.s32 %v2903, 16
        %v3090 = vcvt.s32.f32 %v3088
        %v3091 = vcvt.s32.f32 %v3089
        %3092 = vmax.xlane.f32.xlu0 %v3091
        %v3093 = vpop.xlane.xlu0 %3092
        %vm3094 = vcmp.eq.f32.partialorder %v3091, %v3093
        %v3095 = vsel %vm3094, %v3090, -inf
        %3096 = vmax.xlane.f32.xlu0 %v3095
        %v3097 = vpop.xlane.xlu0 %3096
        %v3098 = vcvt.f32.s32 %v3097
        %v3099 = vcvt.f32.s32 %v3093
        %v3100 = vshll.u32 %v3099, 16
        %v3101 = vadd.s32 %v3100, %v3098
        %v3102 = vand.u32 %v2904, 65535
        %v3103 = vshra.s32 %v2904, 16
        %v3104 = vcvt.s32.f32 %v3102
        %v3105 = vcvt.s32.f32 %v3103
        %3106 = vmax.xlane.f32.xlu0 %v3105
        %v3107 = vpop.xlane.xlu0 %3106
        %vm3108 = vcmp.eq.f32.partialorder %v3105, %v3107
        %v3109 = vsel %vm3108, %v3104, -inf
        %3110 = vmax.xlane.f32.xlu0 %v3109
        %v3111 = vpop.xlane.xlu0 %3110
        %v3112 = vcvt.f32.s32 %v3111
        %v3113 = vcvt.f32.s32 %v3107
        %v3114 = vshll.u32 %v3113, 16
        %v3115 = vadd.s32 %v3114, %v3112
        %v3116 = vand.u32 %v2905, 65535
        %v3117 = vshra.s32 %v2905, 16
        %v3118 = vcvt.s32.f32 %v3116
        %v3119 = vcvt.s32.f32 %v3117
        %3120 = vmax.xlane.f32.xlu0 %v3119
        %v3121 = vpop.xlane.xlu0 %3120
        %vm3122 = vcmp.eq.f32.partialorder %v3119, %v3121
        %v3123 = vsel %vm3122, %v3118, -inf
        %3124 = vmax.xlane.f32.xlu0 %v3123
        %v3125 = vpop.xlane.xlu0 %3124
        %v3126 = vcvt.f32.s32 %v3125
        %v3127 = vcvt.f32.s32 %v3121
        %v3128 = vshll.u32 %v3127, 16
        %v3129 = vadd.s32 %v3128, %v3126
      $region37: #{upsample_loss_forward.1} parent=31 // loop_footer
        %s2279 = sadd.s32 1, %s2275
      $region38: #{upsample_loss_forward.1} parent=31 // loop_footer_branch
        %2274 = sbr.rel target = $region34
      $region39: #{upsample_loss_forward.1} parent=31 // loop_exit
        _
      %vm3130 = vcmp.eq.s32.totalorder %v491, %v2282
      %vm3131 = vcmp.eq.s32.totalorder %v491, %v2283
      %vm3132 = vcmp.eq.s32.totalorder %v491, %v2284
      %vm3133 = vcmp.eq.s32.totalorder %v491, %v2285
      %vm3134 = vcmp.eq.s32.totalorder %v491, %v2286
      %vm3135 = vcmp.eq.s32.totalorder %v491, %v2287
      %vm3136 = vcmp.eq.s32.totalorder %v491, %v2288
      %vm3137 = vcmp.eq.s32.totalorder %v491, %v2289
      %vm3138 = vcmp.eq.s32.totalorder %v491, %v2290
      %vm3139 = vcmp.eq.s32.totalorder %v491, %v2291
      %vm3140 = vcmp.eq.s32.totalorder %v491, %v2292
      %vm3141 = vcmp.eq.s32.totalorder %v491, %v2293
      %vm3142 = vcmp.eq.s32.totalorder %v491, %v2294
      %vm3143 = vcmp.eq.s32.totalorder %v491, %v2295
      %vm3144 = vcmp.eq.s32.totalorder %v491, %v2296
      %vm3145 = vcmp.eq.s32.totalorder %v491, %v2297
      %v3146 = vsel %vm3130, %v373, 0.0
      %v3147 = vsel %vm3131, %v374, 0.0
      %v3148 = vsel %vm3132, %v375, 0.0
      %v3149 = vsel %vm3133, %v376, 0.0
      %v3150 = vsel %vm3134, %v377, 0.0
      %v3151 = vsel %vm3135, %v378, 0.0
      %v3152 = vsel %vm3136, %v379, 0.0
      %v3153 = vsel %vm3137, %v380, 0.0
      %v3154 = vsel %vm3138, %v381, 0.0
      %v3155 = vsel %vm3139, %v382, 0.0
      %v3156 = vsel %vm3140, %v383, 0.0
      %v3157 = vsel %vm3141, %v384, 0.0
      %v3158 = vsel %vm3142, %v385, 0.0
      %v3159 = vsel %vm3143, %v386, 0.0
      %v3160 = vsel %vm3144, %v387, 0.0
      %v3161 = vsel %vm3145, %v388, 0.0
      %3162 = vadd.xlane.f32.xlu0 %v3146
      %v3163 = vpop.xlane.xlu0 %3162
      %3164 = vadd.xlane.f32.xlu0 %v3147
      %v3165 = vpop.xlane.xlu0 %3164
      %3166 = vadd.xlane.f32.xlu0 %v3148
      %v3167 = vpop.xlane.xlu0 %3166
      %3168 = vadd.xlane.f32.xlu0 %v3149
      %v3169 = vpop.xlane.xlu0 %3168
      %3170 = vadd.xlane.f32.xlu0 %v3150
      %v3171 = vpop.xlane.xlu0 %3170
      %3172 = vadd.xlane.f32.xlu0 %v3151
      %v3173 = vpop.xlane.xlu0 %3172
      %3174 = vadd.xlane.f32.xlu0 %v3152
      %v3175 = vpop.xlane.xlu0 %3174
      %3176 = vadd.xlane.f32.xlu0 %v3153
      %v3177 = vpop.xlane.xlu0 %3176
      %3178 = vadd.xlane.f32.xlu0 %v3154
      %v3179 = vpop.xlane.xlu0 %3178
      %3180 = vadd.xlane.f32.xlu0 %v3155
      %v3181 = vpop.xlane.xlu0 %3180
      %3182 = vadd.xlane.f32.xlu0 %v3156
      %v3183 = vpop.xlane.xlu0 %3182
      %3184 = vadd.xlane.f32.xlu0 %v3157
      %v3185 = vpop.xlane.xlu0 %3184
      %3186 = vadd.xlane.f32.xlu0 %v3158
      %v3187 = vpop.xlane.xlu0 %3186
      %3188 = vadd.xlane.f32.xlu0 %v3159
      %v3189 = vpop.xlane.xlu0 %3188
      %3190 = vadd.xlane.f32.xlu0 %v3160
      %v3191 = vpop.xlane.xlu0 %3190
      %3192 = vadd.xlane.f32.xlu0 %v3161
      %v3193 = vpop.xlane.xlu0 %3192
      %vm3194 = vcmp.ge.s32.totalorder %v2282, 0
      %vm3195 = vcmp.ge.s32.totalorder %v2283, 0
      %vm3196 = vcmp.ge.s32.totalorder %v2284, 0
      %vm3197 = vcmp.ge.s32.totalorder %v2285, 0
      %vm3198 = vcmp.ge.s32.totalorder %v2286, 0
      %vm3199 = vcmp.ge.s32.totalorder %v2287, 0
      %vm3200 = vcmp.ge.s32.totalorder %v2288, 0
      %vm3201 = vcmp.ge.s32.totalorder %v2289, 0
      %vm3202 = vcmp.ge.s32.totalorder %v2290, 0
      %vm3203 = vcmp.ge.s32.totalorder %v2291, 0
      %vm3204 = vcmp.ge.s32.totalorder %v2292, 0
      %vm3205 = vcmp.ge.s32.totalorder %v2293, 0
      %vm3206 = vcmp.ge.s32.totalorder %v2294, 0
      %vm3207 = vcmp.ge.s32.totalorder %v2295, 0
      %vm3208 = vcmp.ge.s32.totalorder %v2296, 0
      %vm3209 = vcmp.ge.s32.totalorder %v2297, 0
      %v3210 = vsel %vm3194, %v3163, %v2212
      %v3211 = vsel %vm3195, %v3165, %v2214
      %v3212 = vsel %vm3196, %v3167, %v2216
      %v3213 = vsel %vm3197, %v3169, %v2218
      %v3214 = vsel %vm3198, %v3171, %v2220
      %v3215 = vsel %vm3199, %v3173, %v2222
      %v3216 = vsel %vm3200, %v3175, %v2224
      %v3217 = vsel %vm3201, %v3177, %v2226
      %v3218 = vsel %vm3202, %v3179, %v2228
      %v3219 = vsel %vm3203, %v3181, %v2230
      %v3220 = vsel %vm3204, %v3183, %v2232
      %v3221 = vsel %vm3205, %v3185, %v2234
      %v3222 = vsel %vm3206, %v3187, %v2236
      %v3223 = vsel %vm3207, %v3189, %v2238
      %v3224 = vsel %vm3208, %v3191, %v2240
      %v3225 = vsel %vm3209, %v3193, %v2242
      %v3226 = vsel %vm867, %v3210, 0.0
      %v3227 = vsel %vm867, %v3211, 0.0
      %v3228 = vadd.f32 %v3226, %v3227
      %v3229 = vsel %vm867, %v3212, 0.0
      %v3230 = vadd.f32 %v3228, %v3229
      %v3231 = vsel %vm867, %v3213, 0.0
      %v3232 = vadd.f32 %v3230, %v3231
      %v3233 = vsel %vm867, %v3214, 0.0
      %v3234 = vadd.f32 %v3232, %v3233
      %v3235 = vsel %vm867, %v3215, 0.0
      %v3236 = vadd.f32 %v3234, %v3235
      %v3237 = vsel %vm867, %v3216, 0.0
      %v3238 = vadd.f32 %v3236, %v3237
      %v3239 = vsel %vm867, %v3217, 0.0
      %v3240 = vadd.f32 %v3238, %v3239
      %v3241 = vsel %vm867, %v3218, 0.0
      %v3242 = vadd.f32 %v3240, %v3241
      %v3243 = vsel %vm867, %v3219, 0.0
      %v3244 = vadd.f32 %v3242, %v3243
      %v3245 = vsel %vm867, %v3220, 0.0
      %v3246 = vadd.f32 %v3244, %v3245
      %v3247 = vsel %vm867, %v3221, 0.0
      %v3248 = vadd.f32 %v3246, %v3247
      %v3249 = vsel %vm867, %v3222, 0.0
      %v3250 = vadd.f32 %v3248, %v3249
      %v3251 = vsel %vm867, %v3223, 0.0
      %v3252 = vadd.f32 %v3250, %v3251
      %v3253 = vsel %vm867, %v3224, 0.0
      %v3254 = vadd.f32 %v3252, %v3253
      %v3255 = vsel %vm867, %v3225, 0.0
      %v3256 = vadd.f32 %v3254, %v3255
      %3257 = vadd.xlane.f32.xlu0 %v3256
      %v3258 = vpop.xlane.xlu0 %3257
      %v3259 = vrot.slane %v3258, 4
      %v3260 = vadd.f32 %v3258, %v3259
      %v3261 = vrot.slane %v3260, 2
      %v3262 = vadd.f32 %v3260, %v3261
      %v3263 = vrot.slane %v3262, 1
      %v3264 = vadd.f32 %v3262, %v3263
      %s3265 = vtos %v3264
      %v3266 = vstv %s3265
      %3267 = vst.msk [vmem:[%s233] sm:$0x1] %vm2140, %v3266
      %p3268 = scmp.lt.s32.totalorder %s16, 1
      %s3269 = scalar_select %p3268, %s16, 1
      %s3270 = scalar_lea.vmem %s3, %s3269
      %p3271 = scmp.lt.s32.totalorder %s16, 1
      %s3272 = scalar_select %p3271, %s16, 1
      %s3273 = scalar_lea.vmem %s4, %s3272
      // Predicated region
      $region40: #{upsample_loss_forward.1} parent=31 // pred_check
        %p3274 = pneg %p112
      $region41: #{upsample_loss_forward.1} parent=31 // pred_check_branch
        %3276 = sbr.rel (%p3274) target = $region43
      $region42: #{upsample_loss_forward.1} parent=31 // pred_region
        _
      $region43: #{upsample_loss_forward.1} parent=31 // pred_fallthru
        _
      // Predicated region
      $region44: #{upsample_loss_forward.1} parent=31 // pred_check
        %p3277 = pneg %p138
      $region45: #{upsample_loss_forward.1} parent=31 // pred_check_branch
        %3279 = sbr.rel (%p3277) target = $region47
      $region46: #{upsample_loss_forward.1} parent=31 // pred_region
        _
      $region47: #{upsample_loss_forward.1} parent=31 // pred_fallthru
        _
    $region32: #{upsample_loss_forward.1} parent=5 // pred_fallthru
      _
    %p3280 = scmp.le.s32.totalorder 2, %s11
    // Predicated region
    $region48: #{upsample_loss_forward.1} parent=5 // pred_check
      %p3281 = pneg %p3280
    $region49: #{upsample_loss_forward.1} parent=5 // pred_check_branch
      %3283 = sbr.rel (%p3281) target = $region51
    $region50: #{upsample_loss_forward.1} parent=5 // pred_region
      %s3284 = ssub.s32 %s11, 2
      // Predicated region
      $region52: #{upsample_loss_forward.1} parent=50 // pred_check
        %p3285 = pneg %p118
      $region53: #{upsample_loss_forward.1} parent=50 // pred_check_branch
        %3287 = sbr.rel (%p3285) target = $region55
      $region54: #{upsample_loss_forward.1} parent=50 // pred_region
        %p3288 = scmp.lt.s32.totalorder %s17, 1
        %s3289 = scalar_select %p3288, %s17, 1
        %s3290 = scalar_lea.vmem %s3, %s3289
      $region55: #{upsample_loss_forward.1} parent=50 // pred_fallthru
        _
      // Predicated region
      $region56: #{upsample_loss_forward.1} parent=50 // pred_check
        %p3291 = pneg %p144
      $region57: #{upsample_loss_forward.1} parent=50 // pred_check_branch
        %3293 = sbr.rel (%p3291) target = $region59
      $region58: #{upsample_loss_forward.1} parent=50 // pred_region
        %p3294 = scmp.lt.s32.totalorder %s17, 1
        %s3295 = scalar_select %p3294, %s17, 1
        %s3296 = scalar_lea.vmem %s4, %s3295
      $region59: #{upsample_loss_forward.1} parent=50 // pred_fallthru
        _
    $region51: #{upsample_loss_forward.1} parent=5 // pred_fallthru
      _
  $region6: #{upsample_loss_forward.1} parent=0 // loop_footer
    %s15 = sadd.s32 1, %s11
  $region7: #{upsample_loss_forward.1} parent=0 // loop_footer_branch
    %10 = sbr.rel target = $region3
  $region8: #{upsample_loss_forward.1} parent=0 // loop_exit
    _

</llo_original>
